<compile_context>
chip_gen: v6e
topology: v6e:2x2x1
jax: 0.10.0
libtpu: 0.0.40
codegen_flags: <defaults>
</compile_context>

<pallas_src>
import functools

import numpy as np

import jax
import jax.numpy as jnp
from jax.experimental import pallas as pl
from jax.experimental.pallas import tpu as pltpu


# Dilations of the six 3x3 layers (enc1..3, dec1..3). Effective "same" padding
# equals the dilation for every one of them (encoder by construction; for the
# stride-1 ConvTranspose2d the equivalent conv padding is d*(k-1) - d = d).
_CONV_DILATIONS = (1, 2, 4, 4, 2, 1)


# ----------------------------------------------------------------------------
# Fused Pallas kernel: 6 dilated 3x3 convs (+ReLU) and the 1x1 gate, one image
# per grid step, everything VMEM resident.
# ----------------------------------------------------------------------------
def _fused_diendec_kernel(masks_ref, x_ref, *rest, H, W, dils):
    # masks_ref : (6*9, H*W) f32   per-layer/per-tap zero-fill masks
    # x_ref     : (1, C0, H*W) f32 channel-padded input image (flattened HW)
    # rest      : (w1, b1, ..., w7, b7, o_ref)
    #   w_i : (Cout_i, 9*Cin_i) f32 (gate: (1, C)),  b_i : (Cout_i, 1) f32
    # o_ref     : (1, 1, H*W) f32
    o_ref = rest[-1]
    wb = rest[:-1]
    n_conv = len(dils)
    HW = H * W

    act = x_ref[0]                                   # (C0, HW)

    for li in range(n_conv):
        w_ref = wb[2 * li]
        b_ref = wb[2 * li + 1]
        d = dils[li]
        taps = []
        for ki in range(3):
            for kj in range(3):
                di = (ki - 1) * d
                dj = (kj - 1) * d
                if di == 0 and dj == 0:              # center tap: no shift/mask
                    taps.append(act)
                    continue
                s = di * W + dj                      # flat shift amount
                # shifted[c, q] = act[c, q + s] (mod HW); invalid positions are
                # zeroed by the precomputed mask below.
                shifted = jnp.roll(act, -s, axis=1)
                r = li * 9 + ki * 3 + kj
                m = masks_ref[r:r + 1, :]            # (1, HW) float mask
                taps.append(shifted * m)
        patches = jnp.concatenate(taps, axis=0)      # (9*Cin, HW) im2col matrix
        z = jnp.dot(w_ref[...], patches,
                    preferred_element_type=jnp.float32)   # (Cout, HW)
        act = jnp.maximum(z + b_ref[...], 0.0)

    # gate: 1x1 conv, Cout = 1 -> lane-dense (1, HW) store.
    w_gate = wb[2 * n_conv][...]
    b_gate = wb[2 * n_conv + 1][...]
    o_ref[0] = jnp.dot(w_gate, act, preferred_element_type=jnp.float32) + b_gate


def diendec_forward_pallas(x_nchw, kparams):
    """Fused forward pass. x_nchw: (N, C, H, W) float32 -> (N, 1, H, W)."""
    N, C, H, W = x_nchw.shape
    HW = H * W
    C0 = int(kparams["cin0"])
    assert C <= C0

    # Free reshape to the flat-spatial, lane-dense layout; pad channels to C0.
    x2 = x_nchw.reshape(N, C, HW)
    if C0 != C:
        x2 = jnp.pad(x2, ((0, 0), (0, C0 - C), (0, 0)))

    masks = kparams["masks"]                          # (54, HW) f32

    layer_names = ("enc1", "enc2", "enc3", "dec1", "dec2", "dec3", "gate")
    args = [masks, x2]
    in_specs = [
        pl.BlockSpec(masks.shape, lambda n: (0, 0)),
        pl.BlockSpec((1, C0, HW), lambda n: (n, 0, 0)),
    ]
    flops = 0
    bytes_accessed = 4 * (masks.size + x2.size + N * HW)
    for name in layer_names:
        wm = kparams[name + "_wm"]
        bm = kparams[name + "_bm"]
        args += [wm, bm]
        in_specs += [pl.BlockSpec(wm.shape, lambda n: (0, 0)),
                     pl.BlockSpec(bm.shape, lambda n: (0, 0))]
        flops += 2 * N * HW * wm.shape[0] * wm.shape[1]
        bytes_accessed += 4 * (wm.size + bm.size)

    kern = functools.partial(_fused_diendec_kernel, H=H, W=W,
                             dils=_CONV_DILATIONS)

    out = pl.pallas_call(
        kern,
        out_shape=jax.ShapeDtypeStruct((N, 1, HW), jnp.float32),
        grid_spec=pltpu.PrefetchScalarGridSpec(
            num_scalar_prefetch=0,
            grid=(N,),
            in_specs=in_specs,
            out_specs=pl.BlockSpec((1, 1, HW), lambda n: (n, 0, 0)),
        ),
        compiler_params=pltpu.CompilerParams(
            dimension_semantics=("parallel",)),
        cost_estimate=pl.CostEstimate(flops=int(flops), transcendentals=0,
                                      bytes_accessed=int(bytes_accessed)),
    )(*args)
    return out.reshape(N, 1, H, W)


# ----------------------------------------------------------------------------
# Parameter init (deterministic, PyTorch-shaped) and layout conversion.
# ----------------------------------------------------------------------------
def _uniform(key, shape, fan_in):
    bound = 1.0 / jnp.sqrt(jnp.float32(fan_in))
    return jax.random.uniform(key, shape, jnp.float32, -bound, bound)


def init_diendec_params(key, n_channels):
    C = n_channels
    ks = jax.random.split(key, 14)
    p = {}
    # encoder: Conv2d weights in OIHW
    p["enc1_w"] = _uniform(ks[0], (2 * C, C, 3, 3), C * 9)
    p["enc1_b"] = _uniform(ks[1], (2 * C,), C * 9)
    p["enc2_w"] = _uniform(ks[2], (4 * C, 2 * C, 3, 3), 2 * C * 9)
    p["enc2_b"] = _uniform(ks[3], (4 * C,), 2 * C * 9)
    p["enc3_w"] = _uniform(ks[4], (8 * C, 4 * C, 3, 3), 4 * C * 9)
    p["enc3_b"] = _uniform(ks[5], (8 * C,), 4 * C * 9)
    # decoder: ConvTranspose2d weights in IOHW (in_ch, out_ch, kH, kW)
    p["dec1_w"] = _uniform(ks[6], (8 * C, 4 * C, 3, 3), 8 * C * 9)
    p["dec1_b"] = _uniform(ks[7], (4 * C,), 8 * C * 9)
    p["dec2_w"] = _uniform(ks[8], (4 * C, 2 * C, 3, 3), 4 * C * 9)
    p["dec2_b"] = _uniform(ks[9], (2 * C,), 4 * C * 9)
    p["dec3_w"] = _uniform(ks[10], (2 * C, C, 3, 3), 2 * C * 9)
    p["dec3_b"] = _uniform(ks[11], (C,), 2 * C * 9)
    # gate: Conv2d(C, 1, kernel_size=1), OIHW
    p["gate_w"] = _uniform(ks[12], (1, C, 1, 1), C)
    p["gate_b"] = _uniform(ks[13], (1,), C)
    return p


def _conv_w_to_mat(w_oihw, cin_pad=None):
    """OIHW conv weight -> (O, kH*kW*I) matrix with K ordered (ki, kj, c)."""
    O, I, kh, kw = w_oihw.shape
    if cin_pad is not None and cin_pad > I:
        w_oihw = jnp.pad(w_oihw, ((0, 0), (0, cin_pad - I), (0, 0), (0, 0)))
        I = cin_pad
    return jnp.transpose(w_oihw, (0, 2, 3, 1)).reshape(O, kh * kw * I)


def _convT_w_to_mat(w_iohw):
    """ConvTranspose2d(stride=1) IOHW weight -> equivalent forward-conv matrix."""
    w = jnp.flip(w_iohw, axis=(2, 3))          # flip spatially
    w = jnp.transpose(w, (1, 0, 2, 3))          # swap channels -> OIHW
    return _conv_w_to_mat(w)


def _make_tap_masks(H, W, dils):
    """Float zero-fill masks, one (9, H*W) block per dilated 3x3 layer."""
    ii, jj = np.meshgrid(np.arange(H), np.arange(W), indexing="ij")
    masks = np.zeros((len(dils) * 9, H * W), np.float32)
    for li, d in enumerate(dils):
        for ki in range(3):
            for kj in range(3):
                di = (ki - 1) * d
                dj = (kj - 1) * d
                valid = ((ii + di >= 0) & (ii + di < H) &
                         (jj + dj >= 0) & (jj + dj < W))
                masks[li * 9 + ki * 3 + kj] = valid.reshape(-1).astype(np.float32)
    return jnp.asarray(masks)


def convert_params_kernel(p, C, H, W):
    """Torch-shaped params -> matrices/biases/masks for the fused kernel."""
    C0 = max(8, ((C + 7) // 8) * 8)   # sublane-aligned input-channel padding
    k = {"cin0": C0, "masks": _make_tap_masks(H, W, _CONV_DILATIONS)}
    k["enc1_wm"] = _conv_w_to_mat(p["enc1_w"], cin_pad=C0)
    k["enc2_wm"] = _conv_w_to_mat(p["enc2_w"])
    k["enc3_wm"] = _conv_w_to_mat(p["enc3_w"])
    k["dec1_wm"] = _convT_w_to_mat(p["dec1_w"])
    k["dec2_wm"] = _convT_w_to_mat(p["dec2_w"])
    k["dec3_wm"] = _convT_w_to_mat(p["dec3_w"])
    k["gate_wm"] = _conv_w_to_mat(p["gate_w"])
    for name in ("enc1", "enc2", "enc3", "dec1", "dec2", "dec3", "gate"):
        k[name + "_bm"] = p[name + "_b"].reshape(-1, 1)
    return k


# ----------------------------------------------------------------------------
# Pure-JAX reference (lax.conv_general_dilated), from the same torch params.
# ----------------------------------------------------------------------------
_LAYERS = (
    ("enc1", 1, 1, True),
    ("enc2", 2, 2, True),
    ("enc3", 4, 4, True),
    ("dec1", 4, 4, True),   # ConvTranspose2d(k=3,p=d,dil=d,stride=1) == conv pad=d
    ("dec2", 2, 2, True),
    ("dec3", 1, 1, True),
    ("gate", 1, 0, False),
)


def _conv_oihw_to_hwio(w):
    return jnp.transpose(w, (2, 3, 1, 0))


def _convT_iohw_to_conv_hwio(w):
    return jnp.transpose(jnp.flip(w, axis=(2, 3)), (2, 3, 0, 1))


def convert_params_ref(p):
    c = {}
    c["enc1_w"] = _conv_oihw_to_hwio(p["enc1_w"])
    c["enc2_w"] = _conv_oihw_to_hwio(p["enc2_w"])
    c["enc3_w"] = _conv_oihw_to_hwio(p["enc3_w"])
    c["dec1_w"] = _convT_iohw_to_conv_hwio(p["dec1_w"])
    c["dec2_w"] = _convT_iohw_to_conv_hwio(p["dec2_w"])
    c["dec3_w"] = _convT_iohw_to_conv_hwio(p["dec3_w"])
    c["gate_w"] = _conv_oihw_to_hwio(p["gate_w"])
    for k in ("enc1_b", "enc2_b", "enc3_b", "dec1_b", "dec2_b", "dec3_b", "gate_b"):
        c[k] = p[k]
    return c


def diendec_forward_ref(x_nchw, cparams):
    y = jnp.transpose(x_nchw, (0, 2, 3, 1))           # NCHW -> NHWC
    for name, dil, pad, relu in _LAYERS:
        w = cparams[name + "_w"]
        dnums = jax.lax.conv_dimension_numbers(
            y.shape, w.shape, ("NHWC", "HWIO", "NHWC"))
        y = jax.lax.conv_general_dilated(
            y, w, window_strides=(1, 1),
            padding=[(pad, pad), (pad, pad)],
            rhs_dilation=(dil, dil), dimension_numbers=dnums,
        ) + cparams[name + "_b"]
        if relu:
            y = jnp.maximum(y, 0.0)
    return jnp.transpose(y, (0, 3, 1, 2))             # NHWC -> NCHW


if __name__ == "__main__":
    N, C, H, W = 2, 4, 16, 16
    key = jax.random.PRNGKey(0)
    kx, kp = jax.random.split(key)
    x = jax.random.normal(kx, (N, C, H, W), jnp.float32)   # PyTorch NCHW input

    params = init_diendec_params(kp, C)
    kparams = convert_params_kernel(params, C, H, W)
    cparams = convert_params_ref(params)

    out = jax.block_until_ready(diendec_forward_pallas(x, kparams))
    assert out.shape == (N, 1, H, W), out.shape

    ref = jax.block_until_ready(diendec_forward_ref(x, cparams))
    err = float(jnp.max(jnp.abs(out - ref)))
    assert jnp.allclose(out, ref, rtol=1e-3, atol=1e-3), err

    print("KERNEL_OK")
</pallas_src>

<mosaic_0001>
module attributes {stable_mosaic.version = 11 : i64} {
  func.func @_fused_diendec_kernel(%arg0: i32, %arg1: memref<54x256xf32, #tpu.memory_space<vmem>>, %arg2: memref<1x8x256xf32, #tpu.memory_space<vmem>>, %arg3: memref<8x72xf32, #tpu.memory_space<vmem>>, %arg4: memref<8x1xf32, #tpu.memory_space<vmem>>, %arg5: memref<16x72xf32, #tpu.memory_space<vmem>>, %arg6: memref<16x1xf32, #tpu.memory_space<vmem>>, %arg7: memref<32x144xf32, #tpu.memory_space<vmem>>, %arg8: memref<32x1xf32, #tpu.memory_space<vmem>>, %arg9: memref<16x288xf32, #tpu.memory_space<vmem>>, %arg10: memref<16x1xf32, #tpu.memory_space<vmem>>, %arg11: memref<8x144xf32, #tpu.memory_space<vmem>>, %arg12: memref<8x1xf32, #tpu.memory_space<vmem>>, %arg13: memref<4x72xf32, #tpu.memory_space<vmem>>, %arg14: memref<4x1xf32, #tpu.memory_space<vmem>>, %arg15: memref<1x4xf32, #tpu.memory_space<vmem>>, %arg16: memref<1x1xf32, #tpu.memory_space<vmem>>, %arg17: memref<1x1x256xf32, #tpu.memory_space<vmem>>) attributes {dimension_semantics = [#tpu.dimension_semantics<parallel>], iteration_bounds = array<i64: 2>, scalar_prefetch = 0 : i64, scratch_operands = 0 : i64, tpu.core_type = #tpu.core_type<tc>, window_params = [{pipeline_mode = #tpu.pipeline_mode<synchronous>, transform_indices = @transform_0, window_bounds = array<i64: 54, 256>}, {transform_indices = @transform_1, window_bounds = array<i64: 1, 8, 256>}, {pipeline_mode = #tpu.pipeline_mode<synchronous>, transform_indices = @transform_2, window_bounds = array<i64: 8, 72>}, {pipeline_mode = #tpu.pipeline_mode<synchronous>, transform_indices = @transform_3, window_bounds = array<i64: 8, 1>}, {pipeline_mode = #tpu.pipeline_mode<synchronous>, transform_indices = @transform_4, window_bounds = array<i64: 16, 72>}, {pipeline_mode = #tpu.pipeline_mode<synchronous>, transform_indices = @transform_5, window_bounds = array<i64: 16, 1>}, {pipeline_mode = #tpu.pipeline_mode<synchronous>, transform_indices = @transform_6, window_bounds = array<i64: 32, 144>}, {pipeline_mode = #tpu.pipeline_mode<synchronous>, transform_indices = @transform_7, window_bounds = array<i64: 32, 1>}, {pipeline_mode = #tpu.pipeline_mode<synchronous>, transform_indices = @transform_8, window_bounds = array<i64: 16, 288>}, {pipeline_mode = #tpu.pipeline_mode<synchronous>, transform_indices = @transform_9, window_bounds = array<i64: 16, 1>}, {pipeline_mode = #tpu.pipeline_mode<synchronous>, transform_indices = @transform_10, window_bounds = array<i64: 8, 144>}, {pipeline_mode = #tpu.pipeline_mode<synchronous>, transform_indices = @transform_11, window_bounds = array<i64: 8, 1>}, {pipeline_mode = #tpu.pipeline_mode<synchronous>, transform_indices = @transform_12, window_bounds = array<i64: 4, 72>}, {pipeline_mode = #tpu.pipeline_mode<synchronous>, transform_indices = @transform_13, window_bounds = array<i64: 4, 1>}, {pipeline_mode = #tpu.pipeline_mode<synchronous>, transform_indices = @transform_14, window_bounds = array<i64: 1, 4>}, {pipeline_mode = #tpu.pipeline_mode<synchronous>, transform_indices = @transform_15, window_bounds = array<i64: 1, 1>}, {transform_indices = @transform_16, window_bounds = array<i64: 1, 1, 256>}]} {
    %c0 = arith.constant 0 : index
    %c0_0 = arith.constant 0 : index
    %c0_1 = arith.constant 0 : index
    %0 = vector.load %arg2[%c0, %c0_0, %c0_1] : memref<1x8x256xf32, #tpu.memory_space<vmem>>, vector<1x8x256xf32>
    %1 = vector.shape_cast %0 : vector<1x8x256xf32> to vector<8x256xf32>
    %2 = vector.extract_strided_slice %1 {offsets = [0, 239], sizes = [8, 17], strides = [1, 1]} : vector<8x256xf32> to vector<8x17xf32>
    %3 = vector.extract_strided_slice %1 {offsets = [0, 0], sizes = [8, 239], strides = [1, 1]} : vector<8x256xf32> to vector<8x239xf32>
    %4 = tpu.concatenate %2, %3 in 1 : vector<8x17xf32>, vector<8x239xf32> -> vector<8x256xf32>
    %c0_2 = arith.constant 0 : index
    %c0_3 = arith.constant 0 : index
    %5 = vector.load %arg1[%c0_2, %c0_3] : memref<54x256xf32, #tpu.memory_space<vmem>>, vector<1x256xf32>
    %6 = vector.broadcast %5 : vector<1x256xf32> to vector<8x256xf32>
    %7 = arith.mulf %4, %6 : vector<8x256xf32>
    %8 = vector.extract_strided_slice %1 {offsets = [0, 240], sizes = [8, 16], strides = [1, 1]} : vector<8x256xf32> to vector<8x16xf32>
    %9 = vector.extract_strided_slice %1 {offsets = [0, 0], sizes = [8, 240], strides = [1, 1]} : vector<8x256xf32> to vector<8x240xf32>
    %10 = tpu.concatenate %8, %9 in 1 : vector<8x16xf32>, vector<8x240xf32> -> vector<8x256xf32>
    %c1 = arith.constant 1 : index
    %c0_4 = arith.constant 0 : index
    %11 = vector.load %arg1[%c1, %c0_4] : memref<54x256xf32, #tpu.memory_space<vmem>>, vector<1x256xf32>
    %12 = vector.broadcast %11 : vector<1x256xf32> to vector<8x256xf32>
    %13 = arith.mulf %10, %12 : vector<8x256xf32>
    %14 = vector.extract_strided_slice %1 {offsets = [0, 241], sizes = [8, 15], strides = [1, 1]} : vector<8x256xf32> to vector<8x15xf32>
    %15 = vector.extract_strided_slice %1 {offsets = [0, 0], sizes = [8, 241], strides = [1, 1]} : vector<8x256xf32> to vector<8x241xf32>
    %16 = tpu.concatenate %14, %15 in 1 : vector<8x15xf32>, vector<8x241xf32> -> vector<8x256xf32>
    %c2 = arith.constant 2 : index
    %c0_5 = arith.constant 0 : index
    %17 = vector.load %arg1[%c2, %c0_5] : memref<54x256xf32, #tpu.memory_space<vmem>>, vector<1x256xf32>
    %18 = vector.broadcast %17 : vector<1x256xf32> to vector<8x256xf32>
    %19 = arith.mulf %16, %18 : vector<8x256xf32>
    %20 = vector.extract_strided_slice %1 {offsets = [0, 255], sizes = [8, 1], strides = [1, 1]} : vector<8x256xf32> to vector<8x1xf32>
    %21 = vector.extract_strided_slice %1 {offsets = [0, 0], sizes = [8, 255], strides = [1, 1]} : vector<8x256xf32> to vector<8x255xf32>
    %22 = tpu.concatenate %20, %21 in 1 : vector<8x1xf32>, vector<8x255xf32> -> vector<8x256xf32>
    %c3 = arith.constant 3 : index
    %c0_6 = arith.constant 0 : index
    %23 = vector.load %arg1[%c3, %c0_6] : memref<54x256xf32, #tpu.memory_space<vmem>>, vector<1x256xf32>
    %24 = vector.broadcast %23 : vector<1x256xf32> to vector<8x256xf32>
    %25 = arith.mulf %22, %24 : vector<8x256xf32>
    %26 = vector.extract_strided_slice %1 {offsets = [0, 1], sizes = [8, 255], strides = [1, 1]} : vector<8x256xf32> to vector<8x255xf32>
    %27 = vector.extract_strided_slice %1 {offsets = [0, 0], sizes = [8, 1], strides = [1, 1]} : vector<8x256xf32> to vector<8x1xf32>
    %28 = tpu.concatenate %26, %27 in 1 : vector<8x255xf32>, vector<8x1xf32> -> vector<8x256xf32>
    %c5 = arith.constant 5 : index
    %c0_7 = arith.constant 0 : index
    %29 = vector.load %arg1[%c5, %c0_7] : memref<54x256xf32, #tpu.memory_space<vmem>>, vector<1x256xf32>
    %30 = vector.broadcast %29 : vector<1x256xf32> to vector<8x256xf32>
    %31 = arith.mulf %28, %30 : vector<8x256xf32>
    %32 = vector.extract_strided_slice %1 {offsets = [0, 15], sizes = [8, 241], strides = [1, 1]} : vector<8x256xf32> to vector<8x241xf32>
    %33 = vector.extract_strided_slice %1 {offsets = [0, 0], sizes = [8, 15], strides = [1, 1]} : vector<8x256xf32> to vector<8x15xf32>
    %34 = tpu.concatenate %32, %33 in 1 : vector<8x241xf32>, vector<8x15xf32> -> vector<8x256xf32>
    %c6 = arith.constant 6 : index
    %c0_8 = arith.constant 0 : index
    %35 = vector.load %arg1[%c6, %c0_8] : memref<54x256xf32, #tpu.memory_space<vmem>>, vector<1x256xf32>
    %36 = vector.broadcast %35 : vector<1x256xf32> to vector<8x256xf32>
    %37 = arith.mulf %34, %36 : vector<8x256xf32>
    %38 = vector.extract_strided_slice %1 {offsets = [0, 16], sizes = [8, 240], strides = [1, 1]} : vector<8x256xf32> to vector<8x240xf32>
    %39 = vector.extract_strided_slice %1 {offsets = [0, 0], sizes = [8, 16], strides = [1, 1]} : vector<8x256xf32> to vector<8x16xf32>
    %40 = tpu.concatenate %38, %39 in 1 : vector<8x240xf32>, vector<8x16xf32> -> vector<8x256xf32>
    %c7 = arith.constant 7 : index
    %c0_9 = arith.constant 0 : index
    %41 = vector.load %arg1[%c7, %c0_9] : memref<54x256xf32, #tpu.memory_space<vmem>>, vector<1x256xf32>
    %42 = vector.broadcast %41 : vector<1x256xf32> to vector<8x256xf32>
    %43 = arith.mulf %40, %42 : vector<8x256xf32>
    %44 = vector.extract_strided_slice %1 {offsets = [0, 17], sizes = [8, 239], strides = [1, 1]} : vector<8x256xf32> to vector<8x239xf32>
    %45 = vector.extract_strided_slice %1 {offsets = [0, 0], sizes = [8, 17], strides = [1, 1]} : vector<8x256xf32> to vector<8x17xf32>
    %46 = tpu.concatenate %44, %45 in 1 : vector<8x239xf32>, vector<8x17xf32> -> vector<8x256xf32>
    %c8 = arith.constant 8 : index
    %c0_10 = arith.constant 0 : index
    %47 = vector.load %arg1[%c8, %c0_10] : memref<54x256xf32, #tpu.memory_space<vmem>>, vector<1x256xf32>
    %48 = vector.broadcast %47 : vector<1x256xf32> to vector<8x256xf32>
    %49 = arith.mulf %46, %48 : vector<8x256xf32>
    %50 = tpu.concatenate %7, %13, %19, %25, %1, %31, %37, %43, %49 in 0 : vector<8x256xf32>, vector<8x256xf32>, vector<8x256xf32>, vector<8x256xf32>, vector<8x256xf32>, vector<8x256xf32>, vector<8x256xf32>, vector<8x256xf32>, vector<8x256xf32> -> vector<72x256xf32>
    %c0_11 = arith.constant 0 : index
    %c0_12 = arith.constant 0 : index
    %51 = vector.load %arg3[%c0_11, %c0_12] : memref<8x72xf32, #tpu.memory_space<vmem>>, vector<8x72xf32>
    %cst = arith.constant dense<0.000000e+00> : vector<8x256xf32>
    %52 = tpu.matmul %51, %50, %cst {dimension_numbers = #tpu.dot_dimension_numbers<[1], [0], [0], [1], [0, 0, 1, 1], [], []>} : vector<8x72xf32>, vector<72x256xf32>, vector<8x256xf32> -> vector<8x256xf32>
    %c0_13 = arith.constant 0 : index
    %c0_14 = arith.constant 0 : index
    %53 = vector.load %arg4[%c0_13, %c0_14] : memref<8x1xf32, #tpu.memory_space<vmem>>, vector<8x1xf32>
    %54 = vector.broadcast %53 : vector<8x1xf32> to vector<8x256xf32>
    %55 = arith.addf %52, %54 : vector<8x256xf32>
    %cst_15 = arith.constant 0.000000e+00 : f32
    %56 = vector.broadcast %cst_15 : f32 to vector<8x256xf32>
    %57 = arith.maximumf %55, %56 : vector<8x256xf32>
    %58 = vector.extract_strided_slice %57 {offsets = [0, 222], sizes = [8, 34], strides = [1, 1]} : vector<8x256xf32> to vector<8x34xf32>
    %59 = vector.extract_strided_slice %57 {offsets = [0, 0], sizes = [8, 222], strides = [1, 1]} : vector<8x256xf32> to vector<8x222xf32>
    %60 = tpu.concatenate %58, %59 in 1 : vector<8x34xf32>, vector<8x222xf32> -> vector<8x256xf32>
    %c9 = arith.constant 9 : index
    %c0_16 = arith.constant 0 : index
    %61 = vector.load %arg1[%c9, %c0_16] : memref<54x256xf32, #tpu.memory_space<vmem>>, vector<1x256xf32>
    %62 = vector.broadcast %61 : vector<1x256xf32> to vector<8x256xf32>
    %63 = arith.mulf %60, %62 : vector<8x256xf32>
    %64 = vector.extract_strided_slice %57 {offsets = [0, 224], sizes = [8, 32], strides = [1, 1]} : vector<8x256xf32> to vector<8x32xf32>
    %65 = vector.extract_strided_slice %57 {offsets = [0, 0], sizes = [8, 224], strides = [1, 1]} : vector<8x256xf32> to vector<8x224xf32>
    %66 = tpu.concatenate %64, %65 in 1 : vector<8x32xf32>, vector<8x224xf32> -> vector<8x256xf32>
    %c10 = arith.constant 10 : index
    %c0_17 = arith.constant 0 : index
    %67 = vector.load %arg1[%c10, %c0_17] : memref<54x256xf32, #tpu.memory_space<vmem>>, vector<1x256xf32>
    %68 = vector.broadcast %67 : vector<1x256xf32> to vector<8x256xf32>
    %69 = arith.mulf %66, %68 : vector<8x256xf32>
    %70 = vector.extract_strided_slice %57 {offsets = [0, 226], sizes = [8, 30], strides = [1, 1]} : vector<8x256xf32> to vector<8x30xf32>
    %71 = vector.extract_strided_slice %57 {offsets = [0, 0], sizes = [8, 226], strides = [1, 1]} : vector<8x256xf32> to vector<8x226xf32>
    %72 = tpu.concatenate %70, %71 in 1 : vector<8x30xf32>, vector<8x226xf32> -> vector<8x256xf32>
    %c11 = arith.constant 11 : index
    %c0_18 = arith.constant 0 : index
    %73 = vector.load %arg1[%c11, %c0_18] : memref<54x256xf32, #tpu.memory_space<vmem>>, vector<1x256xf32>
    %74 = vector.broadcast %73 : vector<1x256xf32> to vector<8x256xf32>
    %75 = arith.mulf %72, %74 : vector<8x256xf32>
    %76 = vector.extract_strided_slice %57 {offsets = [0, 254], sizes = [8, 2], strides = [1, 1]} : vector<8x256xf32> to vector<8x2xf32>
    %77 = vector.extract_strided_slice %57 {offsets = [0, 0], sizes = [8, 254], strides = [1, 1]} : vector<8x256xf32> to vector<8x254xf32>
    %78 = tpu.concatenate %76, %77 in 1 : vector<8x2xf32>, vector<8x254xf32> -> vector<8x256xf32>
    %c12 = arith.constant 12 : index
    %c0_19 = arith.constant 0 : index
    %79 = vector.load %arg1[%c12, %c0_19] : memref<54x256xf32, #tpu.memory_space<vmem>>, vector<1x256xf32>
    %80 = vector.broadcast %79 : vector<1x256xf32> to vector<8x256xf32>
    %81 = arith.mulf %78, %80 : vector<8x256xf32>
    %82 = vector.extract_strided_slice %57 {offsets = [0, 2], sizes = [8, 254], strides = [1, 1]} : vector<8x256xf32> to vector<8x254xf32>
    %83 = vector.extract_strided_slice %57 {offsets = [0, 0], sizes = [8, 2], strides = [1, 1]} : vector<8x256xf32> to vector<8x2xf32>
    %84 = tpu.concatenate %82, %83 in 1 : vector<8x254xf32>, vector<8x2xf32> -> vector<8x256xf32>
    %c14 = arith.constant 14 : index
    %c0_20 = arith.constant 0 : index
    %85 = vector.load %arg1[%c14, %c0_20] : memref<54x256xf32, #tpu.memory_space<vmem>>, vector<1x256xf32>
    %86 = vector.broadcast %85 : vector<1x256xf32> to vector<8x256xf32>
    %87 = arith.mulf %84, %86 : vector<8x256xf32>
    %88 = vector.extract_strided_slice %57 {offsets = [0, 30], sizes = [8, 226], strides = [1, 1]} : vector<8x256xf32> to vector<8x226xf32>
    %89 = vector.extract_strided_slice %57 {offsets = [0, 0], sizes = [8, 30], strides = [1, 1]} : vector<8x256xf32> to vector<8x30xf32>
    %90 = tpu.concatenate %88, %89 in 1 : vector<8x226xf32>, vector<8x30xf32> -> vector<8x256xf32>
    %c15 = arith.constant 15 : index
    %c0_21 = arith.constant 0 : index
    %91 = vector.load %arg1[%c15, %c0_21] : memref<54x256xf32, #tpu.memory_space<vmem>>, vector<1x256xf32>
    %92 = vector.broadcast %91 : vector<1x256xf32> to vector<8x256xf32>
    %93 = arith.mulf %90, %92 : vector<8x256xf32>
    %94 = vector.extract_strided_slice %57 {offsets = [0, 32], sizes = [8, 224], strides = [1, 1]} : vector<8x256xf32> to vector<8x224xf32>
    %95 = vector.extract_strided_slice %57 {offsets = [0, 0], sizes = [8, 32], strides = [1, 1]} : vector<8x256xf32> to vector<8x32xf32>
    %96 = tpu.concatenate %94, %95 in 1 : vector<8x224xf32>, vector<8x32xf32> -> vector<8x256xf32>
    %c16 = arith.constant 16 : index
    %c0_22 = arith.constant 0 : index
    %97 = vector.load %arg1[%c16, %c0_22] : memref<54x256xf32, #tpu.memory_space<vmem>>, vector<1x256xf32>
    %98 = vector.broadcast %97 : vector<1x256xf32> to vector<8x256xf32>
    %99 = arith.mulf %96, %98 : vector<8x256xf32>
    %100 = vector.extract_strided_slice %57 {offsets = [0, 34], sizes = [8, 222], strides = [1, 1]} : vector<8x256xf32> to vector<8x222xf32>
    %101 = vector.extract_strided_slice %57 {offsets = [0, 0], sizes = [8, 34], strides = [1, 1]} : vector<8x256xf32> to vector<8x34xf32>
    %102 = tpu.concatenate %100, %101 in 1 : vector<8x222xf32>, vector<8x34xf32> -> vector<8x256xf32>
    %c17 = arith.constant 17 : index
    %c0_23 = arith.constant 0 : index
    %103 = vector.load %arg1[%c17, %c0_23] : memref<54x256xf32, #tpu.memory_space<vmem>>, vector<1x256xf32>
    %104 = vector.broadcast %103 : vector<1x256xf32> to vector<8x256xf32>
    %105 = arith.mulf %102, %104 : vector<8x256xf32>
    %106 = tpu.concatenate %63, %69, %75, %81, %57, %87, %93, %99, %105 in 0 : vector<8x256xf32>, vector<8x256xf32>, vector<8x256xf32>, vector<8x256xf32>, vector<8x256xf32>, vector<8x256xf32>, vector<8x256xf32>, vector<8x256xf32>, vector<8x256xf32> -> vector<72x256xf32>
    %c0_24 = arith.constant 0 : index
    %c0_25 = arith.constant 0 : index
    %107 = vector.load %arg5[%c0_24, %c0_25] : memref<16x72xf32, #tpu.memory_space<vmem>>, vector<16x72xf32>
    %cst_26 = arith.constant dense<0.000000e+00> : vector<16x256xf32>
    %108 = tpu.matmul %107, %106, %cst_26 {dimension_numbers = #tpu.dot_dimension_numbers<[1], [0], [0], [1], [0, 0, 1, 1], [], []>} : vector<16x72xf32>, vector<72x256xf32>, vector<16x256xf32> -> vector<16x256xf32>
    %c0_27 = arith.constant 0 : index
    %c0_28 = arith.constant 0 : index
    %109 = vector.load %arg6[%c0_27, %c0_28] : memref<16x1xf32, #tpu.memory_space<vmem>>, vector<16x1xf32>
    %110 = vector.broadcast %109 : vector<16x1xf32> to vector<16x256xf32>
    %111 = arith.addf %108, %110 : vector<16x256xf32>
    %cst_29 = arith.constant 0.000000e+00 : f32
    %112 = vector.broadcast %cst_29 : f32 to vector<16x256xf32>
    %113 = arith.maximumf %111, %112 : vector<16x256xf32>
    %114 = vector.extract_strided_slice %113 {offsets = [0, 188], sizes = [16, 68], strides = [1, 1]} : vector<16x256xf32> to vector<16x68xf32>
    %115 = vector.extract_strided_slice %113 {offsets = [0, 0], sizes = [16, 188], strides = [1, 1]} : vector<16x256xf32> to vector<16x188xf32>
    %116 = tpu.concatenate %114, %115 in 1 : vector<16x68xf32>, vector<16x188xf32> -> vector<16x256xf32>
    %c18 = arith.constant 18 : index
    %c0_30 = arith.constant 0 : index
    %117 = vector.load %arg1[%c18, %c0_30] : memref<54x256xf32, #tpu.memory_space<vmem>>, vector<1x256xf32>
    %118 = vector.broadcast %117 : vector<1x256xf32> to vector<16x256xf32>
    %119 = arith.mulf %116, %118 : vector<16x256xf32>
    %120 = vector.extract_strided_slice %113 {offsets = [0, 192], sizes = [16, 64], strides = [1, 1]} : vector<16x256xf32> to vector<16x64xf32>
    %121 = vector.extract_strided_slice %113 {offsets = [0, 0], sizes = [16, 192], strides = [1, 1]} : vector<16x256xf32> to vector<16x192xf32>
    %122 = tpu.concatenate %120, %121 in 1 : vector<16x64xf32>, vector<16x192xf32> -> vector<16x256xf32>
    %c19 = arith.constant 19 : index
    %c0_31 = arith.constant 0 : index
    %123 = vector.load %arg1[%c19, %c0_31] : memref<54x256xf32, #tpu.memory_space<vmem>>, vector<1x256xf32>
    %124 = vector.broadcast %123 : vector<1x256xf32> to vector<16x256xf32>
    %125 = arith.mulf %122, %124 : vector<16x256xf32>
    %126 = vector.extract_strided_slice %113 {offsets = [0, 196], sizes = [16, 60], strides = [1, 1]} : vector<16x256xf32> to vector<16x60xf32>
    %127 = vector.extract_strided_slice %113 {offsets = [0, 0], sizes = [16, 196], strides = [1, 1]} : vector<16x256xf32> to vector<16x196xf32>
    %128 = tpu.concatenate %126, %127 in 1 : vector<16x60xf32>, vector<16x196xf32> -> vector<16x256xf32>
    %c20 = arith.constant 20 : index
    %c0_32 = arith.constant 0 : index
    %129 = vector.load %arg1[%c20, %c0_32] : memref<54x256xf32, #tpu.memory_space<vmem>>, vector<1x256xf32>
    %130 = vector.broadcast %129 : vector<1x256xf32> to vector<16x256xf32>
    %131 = arith.mulf %128, %130 : vector<16x256xf32>
    %132 = vector.extract_strided_slice %113 {offsets = [0, 252], sizes = [16, 4], strides = [1, 1]} : vector<16x256xf32> to vector<16x4xf32>
    %133 = vector.extract_strided_slice %113 {offsets = [0, 0], sizes = [16, 252], strides = [1, 1]} : vector<16x256xf32> to vector<16x252xf32>
    %134 = tpu.concatenate %132, %133 in 1 : vector<16x4xf32>, vector<16x252xf32> -> vector<16x256xf32>
    %c21 = arith.constant 21 : index
    %c0_33 = arith.constant 0 : index
    %135 = vector.load %arg1[%c21, %c0_33] : memref<54x256xf32, #tpu.memory_space<vmem>>, vector<1x256xf32>
    %136 = vector.broadcast %135 : vector<1x256xf32> to vector<16x256xf32>
    %137 = arith.mulf %134, %136 : vector<16x256xf32>
    %138 = vector.extract_strided_slice %113 {offsets = [0, 4], sizes = [16, 252], strides = [1, 1]} : vector<16x256xf32> to vector<16x252xf32>
    %139 = vector.extract_strided_slice %113 {offsets = [0, 0], sizes = [16, 4], strides = [1, 1]} : vector<16x256xf32> to vector<16x4xf32>
    %140 = tpu.concatenate %138, %139 in 1 : vector<16x252xf32>, vector<16x4xf32> -> vector<16x256xf32>
    %c23 = arith.constant 23 : index
    %c0_34 = arith.constant 0 : index
    %141 = vector.load %arg1[%c23, %c0_34] : memref<54x256xf32, #tpu.memory_space<vmem>>, vector<1x256xf32>
    %142 = vector.broadcast %141 : vector<1x256xf32> to vector<16x256xf32>
    %143 = arith.mulf %140, %142 : vector<16x256xf32>
    %144 = vector.extract_strided_slice %113 {offsets = [0, 60], sizes = [16, 196], strides = [1, 1]} : vector<16x256xf32> to vector<16x196xf32>
    %145 = vector.extract_strided_slice %113 {offsets = [0, 0], sizes = [16, 60], strides = [1, 1]} : vector<16x256xf32> to vector<16x60xf32>
    %146 = tpu.concatenate %144, %145 in 1 : vector<16x196xf32>, vector<16x60xf32> -> vector<16x256xf32>
    %c24 = arith.constant 24 : index
    %c0_35 = arith.constant 0 : index
    %147 = vector.load %arg1[%c24, %c0_35] : memref<54x256xf32, #tpu.memory_space<vmem>>, vector<1x256xf32>
    %148 = vector.broadcast %147 : vector<1x256xf32> to vector<16x256xf32>
    %149 = arith.mulf %146, %148 : vector<16x256xf32>
    %150 = vector.extract_strided_slice %113 {offsets = [0, 64], sizes = [16, 192], strides = [1, 1]} : vector<16x256xf32> to vector<16x192xf32>
    %151 = vector.extract_strided_slice %113 {offsets = [0, 0], sizes = [16, 64], strides = [1, 1]} : vector<16x256xf32> to vector<16x64xf32>
    %152 = tpu.concatenate %150, %151 in 1 : vector<16x192xf32>, vector<16x64xf32> -> vector<16x256xf32>
    %c25 = arith.constant 25 : index
    %c0_36 = arith.constant 0 : index
    %153 = vector.load %arg1[%c25, %c0_36] : memref<54x256xf32, #tpu.memory_space<vmem>>, vector<1x256xf32>
    %154 = vector.broadcast %153 : vector<1x256xf32> to vector<16x256xf32>
    %155 = arith.mulf %152, %154 : vector<16x256xf32>
    %156 = vector.extract_strided_slice %113 {offsets = [0, 68], sizes = [16, 188], strides = [1, 1]} : vector<16x256xf32> to vector<16x188xf32>
    %157 = vector.extract_strided_slice %113 {offsets = [0, 0], sizes = [16, 68], strides = [1, 1]} : vector<16x256xf32> to vector<16x68xf32>
    %158 = tpu.concatenate %156, %157 in 1 : vector<16x188xf32>, vector<16x68xf32> -> vector<16x256xf32>
    %c26 = arith.constant 26 : index
    %c0_37 = arith.constant 0 : index
    %159 = vector.load %arg1[%c26, %c0_37] : memref<54x256xf32, #tpu.memory_space<vmem>>, vector<1x256xf32>
    %160 = vector.broadcast %159 : vector<1x256xf32> to vector<16x256xf32>
    %161 = arith.mulf %158, %160 : vector<16x256xf32>
    %162 = tpu.concatenate %119, %125, %131, %137, %113, %143, %149, %155, %161 in 0 : vector<16x256xf32>, vector<16x256xf32>, vector<16x256xf32>, vector<16x256xf32>, vector<16x256xf32>, vector<16x256xf32>, vector<16x256xf32>, vector<16x256xf32>, vector<16x256xf32> -> vector<144x256xf32>
    %c0_38 = arith.constant 0 : index
    %c0_39 = arith.constant 0 : index
    %163 = vector.load %arg7[%c0_38, %c0_39] : memref<32x144xf32, #tpu.memory_space<vmem>>, vector<32x144xf32>
    %cst_40 = arith.constant dense<0.000000e+00> : vector<32x256xf32>
    %164 = tpu.matmul %163, %162, %cst_40 {dimension_numbers = #tpu.dot_dimension_numbers<[1], [0], [0], [1], [0, 0, 1, 1], [], []>} : vector<32x144xf32>, vector<144x256xf32>, vector<32x256xf32> -> vector<32x256xf32>
    %c0_41 = arith.constant 0 : index
    %c0_42 = arith.constant 0 : index
    %165 = vector.load %arg8[%c0_41, %c0_42] : memref<32x1xf32, #tpu.memory_space<vmem>>, vector<32x1xf32>
    %166 = vector.broadcast %165 : vector<32x1xf32> to vector<32x256xf32>
    %167 = arith.addf %164, %166 : vector<32x256xf32>
    %cst_43 = arith.constant 0.000000e+00 : f32
    %168 = vector.broadcast %cst_43 : f32 to vector<32x256xf32>
    %169 = arith.maximumf %167, %168 : vector<32x256xf32>
    %170 = vector.extract_strided_slice %169 {offsets = [0, 188], sizes = [32, 68], strides = [1, 1]} : vector<32x256xf32> to vector<32x68xf32>
    %171 = vector.extract_strided_slice %169 {offsets = [0, 0], sizes = [32, 188], strides = [1, 1]} : vector<32x256xf32> to vector<32x188xf32>
    %172 = tpu.concatenate %170, %171 in 1 : vector<32x68xf32>, vector<32x188xf32> -> vector<32x256xf32>
    %c27 = arith.constant 27 : index
    %c0_44 = arith.constant 0 : index
    %173 = vector.load %arg1[%c27, %c0_44] : memref<54x256xf32, #tpu.memory_space<vmem>>, vector<1x256xf32>
    %174 = vector.broadcast %173 : vector<1x256xf32> to vector<32x256xf32>
    %175 = arith.mulf %172, %174 : vector<32x256xf32>
    %176 = vector.extract_strided_slice %169 {offsets = [0, 192], sizes = [32, 64], strides = [1, 1]} : vector<32x256xf32> to vector<32x64xf32>
    %177 = vector.extract_strided_slice %169 {offsets = [0, 0], sizes = [32, 192], strides = [1, 1]} : vector<32x256xf32> to vector<32x192xf32>
    %178 = tpu.concatenate %176, %177 in 1 : vector<32x64xf32>, vector<32x192xf32> -> vector<32x256xf32>
    %c28 = arith.constant 28 : index
    %c0_45 = arith.constant 0 : index
    %179 = vector.load %arg1[%c28, %c0_45] : memref<54x256xf32, #tpu.memory_space<vmem>>, vector<1x256xf32>
    %180 = vector.broadcast %179 : vector<1x256xf32> to vector<32x256xf32>
    %181 = arith.mulf %178, %180 : vector<32x256xf32>
    %182 = vector.extract_strided_slice %169 {offsets = [0, 196], sizes = [32, 60], strides = [1, 1]} : vector<32x256xf32> to vector<32x60xf32>
    %183 = vector.extract_strided_slice %169 {offsets = [0, 0], sizes = [32, 196], strides = [1, 1]} : vector<32x256xf32> to vector<32x196xf32>
    %184 = tpu.concatenate %182, %183 in 1 : vector<32x60xf32>, vector<32x196xf32> -> vector<32x256xf32>
    %c29 = arith.constant 29 : index
    %c0_46 = arith.constant 0 : index
    %185 = vector.load %arg1[%c29, %c0_46] : memref<54x256xf32, #tpu.memory_space<vmem>>, vector<1x256xf32>
    %186 = vector.broadcast %185 : vector<1x256xf32> to vector<32x256xf32>
    %187 = arith.mulf %184, %186 : vector<32x256xf32>
    %188 = vector.extract_strided_slice %169 {offsets = [0, 252], sizes = [32, 4], strides = [1, 1]} : vector<32x256xf32> to vector<32x4xf32>
    %189 = vector.extract_strided_slice %169 {offsets = [0, 0], sizes = [32, 252], strides = [1, 1]} : vector<32x256xf32> to vector<32x252xf32>
    %190 = tpu.concatenate %188, %189 in 1 : vector<32x4xf32>, vector<32x252xf32> -> vector<32x256xf32>
    %c30 = arith.constant 30 : index
    %c0_47 = arith.constant 0 : index
    %191 = vector.load %arg1[%c30, %c0_47] : memref<54x256xf32, #tpu.memory_space<vmem>>, vector<1x256xf32>
    %192 = vector.broadcast %191 : vector<1x256xf32> to vector<32x256xf32>
    %193 = arith.mulf %190, %192 : vector<32x256xf32>
    %194 = vector.extract_strided_slice %169 {offsets = [0, 4], sizes = [32, 252], strides = [1, 1]} : vector<32x256xf32> to vector<32x252xf32>
    %195 = vector.extract_strided_slice %169 {offsets = [0, 0], sizes = [32, 4], strides = [1, 1]} : vector<32x256xf32> to vector<32x4xf32>
    %196 = tpu.concatenate %194, %195 in 1 : vector<32x252xf32>, vector<32x4xf32> -> vector<32x256xf32>
    %c32 = arith.constant 32 : index
    %c0_48 = arith.constant 0 : index
    %197 = vector.load %arg1[%c32, %c0_48] : memref<54x256xf32, #tpu.memory_space<vmem>>, vector<1x256xf32>
    %198 = vector.broadcast %197 : vector<1x256xf32> to vector<32x256xf32>
    %199 = arith.mulf %196, %198 : vector<32x256xf32>
    %200 = vector.extract_strided_slice %169 {offsets = [0, 60], sizes = [32, 196], strides = [1, 1]} : vector<32x256xf32> to vector<32x196xf32>
    %201 = vector.extract_strided_slice %169 {offsets = [0, 0], sizes = [32, 60], strides = [1, 1]} : vector<32x256xf32> to vector<32x60xf32>
    %202 = tpu.concatenate %200, %201 in 1 : vector<32x196xf32>, vector<32x60xf32> -> vector<32x256xf32>
    %c33 = arith.constant 33 : index
    %c0_49 = arith.constant 0 : index
    %203 = vector.load %arg1[%c33, %c0_49] : memref<54x256xf32, #tpu.memory_space<vmem>>, vector<1x256xf32>
    %204 = vector.broadcast %203 : vector<1x256xf32> to vector<32x256xf32>
    %205 = arith.mulf %202, %204 : vector<32x256xf32>
    %206 = vector.extract_strided_slice %169 {offsets = [0, 64], sizes = [32, 192], strides = [1, 1]} : vector<32x256xf32> to vector<32x192xf32>
    %207 = vector.extract_strided_slice %169 {offsets = [0, 0], sizes = [32, 64], strides = [1, 1]} : vector<32x256xf32> to vector<32x64xf32>
    %208 = tpu.concatenate %206, %207 in 1 : vector<32x192xf32>, vector<32x64xf32> -> vector<32x256xf32>
    %c34 = arith.constant 34 : index
    %c0_50 = arith.constant 0 : index
    %209 = vector.load %arg1[%c34, %c0_50] : memref<54x256xf32, #tpu.memory_space<vmem>>, vector<1x256xf32>
    %210 = vector.broadcast %209 : vector<1x256xf32> to vector<32x256xf32>
    %211 = arith.mulf %208, %210 : vector<32x256xf32>
    %212 = vector.extract_strided_slice %169 {offsets = [0, 68], sizes = [32, 188], strides = [1, 1]} : vector<32x256xf32> to vector<32x188xf32>
    %213 = vector.extract_strided_slice %169 {offsets = [0, 0], sizes = [32, 68], strides = [1, 1]} : vector<32x256xf32> to vector<32x68xf32>
    %214 = tpu.concatenate %212, %213 in 1 : vector<32x188xf32>, vector<32x68xf32> -> vector<32x256xf32>
    %c35 = arith.constant 35 : index
    %c0_51 = arith.constant 0 : index
    %215 = vector.load %arg1[%c35, %c0_51] : memref<54x256xf32, #tpu.memory_space<vmem>>, vector<1x256xf32>
    %216 = vector.broadcast %215 : vector<1x256xf32> to vector<32x256xf32>
    %217 = arith.mulf %214, %216 : vector<32x256xf32>
    %218 = tpu.concatenate %175, %181, %187, %193, %169, %199, %205, %211, %217 in 0 : vector<32x256xf32>, vector<32x256xf32>, vector<32x256xf32>, vector<32x256xf32>, vector<32x256xf32>, vector<32x256xf32>, vector<32x256xf32>, vector<32x256xf32>, vector<32x256xf32> -> vector<288x256xf32>
    %c0_52 = arith.constant 0 : index
    %c0_53 = arith.constant 0 : index
    %219 = vector.load %arg9[%c0_52, %c0_53] : memref<16x288xf32, #tpu.memory_space<vmem>>, vector<16x288xf32>
    %cst_54 = arith.constant dense<0.000000e+00> : vector<16x256xf32>
    %220 = tpu.matmul %219, %218, %cst_54 {dimension_numbers = #tpu.dot_dimension_numbers<[1], [0], [0], [1], [0, 0, 1, 1], [], []>} : vector<16x288xf32>, vector<288x256xf32>, vector<16x256xf32> -> vector<16x256xf32>
    %c0_55 = arith.constant 0 : index
    %c0_56 = arith.constant 0 : index
    %221 = vector.load %arg10[%c0_55, %c0_56] : memref<16x1xf32, #tpu.memory_space<vmem>>, vector<16x1xf32>
    %222 = vector.broadcast %221 : vector<16x1xf32> to vector<16x256xf32>
    %223 = arith.addf %220, %222 : vector<16x256xf32>
    %cst_57 = arith.constant 0.000000e+00 : f32
    %224 = vector.broadcast %cst_57 : f32 to vector<16x256xf32>
    %225 = arith.maximumf %223, %224 : vector<16x256xf32>
    %226 = vector.extract_strided_slice %225 {offsets = [0, 222], sizes = [16, 34], strides = [1, 1]} : vector<16x256xf32> to vector<16x34xf32>
    %227 = vector.extract_strided_slice %225 {offsets = [0, 0], sizes = [16, 222], strides = [1, 1]} : vector<16x256xf32> to vector<16x222xf32>
    %228 = tpu.concatenate %226, %227 in 1 : vector<16x34xf32>, vector<16x222xf32> -> vector<16x256xf32>
    %c36 = arith.constant 36 : index
    %c0_58 = arith.constant 0 : index
    %229 = vector.load %arg1[%c36, %c0_58] : memref<54x256xf32, #tpu.memory_space<vmem>>, vector<1x256xf32>
    %230 = vector.broadcast %229 : vector<1x256xf32> to vector<16x256xf32>
    %231 = arith.mulf %228, %230 : vector<16x256xf32>
    %232 = vector.extract_strided_slice %225 {offsets = [0, 224], sizes = [16, 32], strides = [1, 1]} : vector<16x256xf32> to vector<16x32xf32>
    %233 = vector.extract_strided_slice %225 {offsets = [0, 0], sizes = [16, 224], strides = [1, 1]} : vector<16x256xf32> to vector<16x224xf32>
    %234 = tpu.concatenate %232, %233 in 1 : vector<16x32xf32>, vector<16x224xf32> -> vector<16x256xf32>
    %c37 = arith.constant 37 : index
    %c0_59 = arith.constant 0 : index
    %235 = vector.load %arg1[%c37, %c0_59] : memref<54x256xf32, #tpu.memory_space<vmem>>, vector<1x256xf32>
    %236 = vector.broadcast %235 : vector<1x256xf32> to vector<16x256xf32>
    %237 = arith.mulf %234, %236 : vector<16x256xf32>
    %238 = vector.extract_strided_slice %225 {offsets = [0, 226], sizes = [16, 30], strides = [1, 1]} : vector<16x256xf32> to vector<16x30xf32>
    %239 = vector.extract_strided_slice %225 {offsets = [0, 0], sizes = [16, 226], strides = [1, 1]} : vector<16x256xf32> to vector<16x226xf32>
    %240 = tpu.concatenate %238, %239 in 1 : vector<16x30xf32>, vector<16x226xf32> -> vector<16x256xf32>
    %c38 = arith.constant 38 : index
    %c0_60 = arith.constant 0 : index
    %241 = vector.load %arg1[%c38, %c0_60] : memref<54x256xf32, #tpu.memory_space<vmem>>, vector<1x256xf32>
    %242 = vector.broadcast %241 : vector<1x256xf32> to vector<16x256xf32>
    %243 = arith.mulf %240, %242 : vector<16x256xf32>
    %244 = vector.extract_strided_slice %225 {offsets = [0, 254], sizes = [16, 2], strides = [1, 1]} : vector<16x256xf32> to vector<16x2xf32>
    %245 = vector.extract_strided_slice %225 {offsets = [0, 0], sizes = [16, 254], strides = [1, 1]} : vector<16x256xf32> to vector<16x254xf32>
    %246 = tpu.concatenate %244, %245 in 1 : vector<16x2xf32>, vector<16x254xf32> -> vector<16x256xf32>
    %c39 = arith.constant 39 : index
    %c0_61 = arith.constant 0 : index
    %247 = vector.load %arg1[%c39, %c0_61] : memref<54x256xf32, #tpu.memory_space<vmem>>, vector<1x256xf32>
    %248 = vector.broadcast %247 : vector<1x256xf32> to vector<16x256xf32>
    %249 = arith.mulf %246, %248 : vector<16x256xf32>
    %250 = vector.extract_strided_slice %225 {offsets = [0, 2], sizes = [16, 254], strides = [1, 1]} : vector<16x256xf32> to vector<16x254xf32>
    %251 = vector.extract_strided_slice %225 {offsets = [0, 0], sizes = [16, 2], strides = [1, 1]} : vector<16x256xf32> to vector<16x2xf32>
    %252 = tpu.concatenate %250, %251 in 1 : vector<16x254xf32>, vector<16x2xf32> -> vector<16x256xf32>
    %c41 = arith.constant 41 : index
    %c0_62 = arith.constant 0 : index
    %253 = vector.load %arg1[%c41, %c0_62] : memref<54x256xf32, #tpu.memory_space<vmem>>, vector<1x256xf32>
    %254 = vector.broadcast %253 : vector<1x256xf32> to vector<16x256xf32>
    %255 = arith.mulf %252, %254 : vector<16x256xf32>
    %256 = vector.extract_strided_slice %225 {offsets = [0, 30], sizes = [16, 226], strides = [1, 1]} : vector<16x256xf32> to vector<16x226xf32>
    %257 = vector.extract_strided_slice %225 {offsets = [0, 0], sizes = [16, 30], strides = [1, 1]} : vector<16x256xf32> to vector<16x30xf32>
    %258 = tpu.concatenate %256, %257 in 1 : vector<16x226xf32>, vector<16x30xf32> -> vector<16x256xf32>
    %c42 = arith.constant 42 : index
    %c0_63 = arith.constant 0 : index
    %259 = vector.load %arg1[%c42, %c0_63] : memref<54x256xf32, #tpu.memory_space<vmem>>, vector<1x256xf32>
    %260 = vector.broadcast %259 : vector<1x256xf32> to vector<16x256xf32>
    %261 = arith.mulf %258, %260 : vector<16x256xf32>
    %262 = vector.extract_strided_slice %225 {offsets = [0, 32], sizes = [16, 224], strides = [1, 1]} : vector<16x256xf32> to vector<16x224xf32>
    %263 = vector.extract_strided_slice %225 {offsets = [0, 0], sizes = [16, 32], strides = [1, 1]} : vector<16x256xf32> to vector<16x32xf32>
    %264 = tpu.concatenate %262, %263 in 1 : vector<16x224xf32>, vector<16x32xf32> -> vector<16x256xf32>
    %c43 = arith.constant 43 : index
    %c0_64 = arith.constant 0 : index
    %265 = vector.load %arg1[%c43, %c0_64] : memref<54x256xf32, #tpu.memory_space<vmem>>, vector<1x256xf32>
    %266 = vector.broadcast %265 : vector<1x256xf32> to vector<16x256xf32>
    %267 = arith.mulf %264, %266 : vector<16x256xf32>
    %268 = vector.extract_strided_slice %225 {offsets = [0, 34], sizes = [16, 222], strides = [1, 1]} : vector<16x256xf32> to vector<16x222xf32>
    %269 = vector.extract_strided_slice %225 {offsets = [0, 0], sizes = [16, 34], strides = [1, 1]} : vector<16x256xf32> to vector<16x34xf32>
    %270 = tpu.concatenate %268, %269 in 1 : vector<16x222xf32>, vector<16x34xf32> -> vector<16x256xf32>
    %c44 = arith.constant 44 : index
    %c0_65 = arith.constant 0 : index
    %271 = vector.load %arg1[%c44, %c0_65] : memref<54x256xf32, #tpu.memory_space<vmem>>, vector<1x256xf32>
    %272 = vector.broadcast %271 : vector<1x256xf32> to vector<16x256xf32>
    %273 = arith.mulf %270, %272 : vector<16x256xf32>
    %274 = tpu.concatenate %231, %237, %243, %249, %225, %255, %261, %267, %273 in 0 : vector<16x256xf32>, vector<16x256xf32>, vector<16x256xf32>, vector<16x256xf32>, vector<16x256xf32>, vector<16x256xf32>, vector<16x256xf32>, vector<16x256xf32>, vector<16x256xf32> -> vector<144x256xf32>
    %c0_66 = arith.constant 0 : index
    %c0_67 = arith.constant 0 : index
    %275 = vector.load %arg11[%c0_66, %c0_67] : memref<8x144xf32, #tpu.memory_space<vmem>>, vector<8x144xf32>
    %cst_68 = arith.constant dense<0.000000e+00> : vector<8x256xf32>
    %276 = tpu.matmul %275, %274, %cst_68 {dimension_numbers = #tpu.dot_dimension_numbers<[1], [0], [0], [1], [0, 0, 1, 1], [], []>} : vector<8x144xf32>, vector<144x256xf32>, vector<8x256xf32> -> vector<8x256xf32>
    %c0_69 = arith.constant 0 : index
    %c0_70 = arith.constant 0 : index
    %277 = vector.load %arg12[%c0_69, %c0_70] : memref<8x1xf32, #tpu.memory_space<vmem>>, vector<8x1xf32>
    %278 = vector.broadcast %277 : vector<8x1xf32> to vector<8x256xf32>
    %279 = arith.addf %276, %278 : vector<8x256xf32>
    %cst_71 = arith.constant 0.000000e+00 : f32
    %280 = vector.broadcast %cst_71 : f32 to vector<8x256xf32>
    %281 = arith.maximumf %279, %280 : vector<8x256xf32>
    %282 = vector.extract_strided_slice %281 {offsets = [0, 239], sizes = [8, 17], strides = [1, 1]} : vector<8x256xf32> to vector<8x17xf32>
    %283 = vector.extract_strided_slice %281 {offsets = [0, 0], sizes = [8, 239], strides = [1, 1]} : vector<8x256xf32> to vector<8x239xf32>
    %284 = tpu.concatenate %282, %283 in 1 : vector<8x17xf32>, vector<8x239xf32> -> vector<8x256xf32>
    %c45 = arith.constant 45 : index
    %c0_72 = arith.constant 0 : index
    %285 = vector.load %arg1[%c45, %c0_72] : memref<54x256xf32, #tpu.memory_space<vmem>>, vector<1x256xf32>
    %286 = vector.broadcast %285 : vector<1x256xf32> to vector<8x256xf32>
    %287 = arith.mulf %284, %286 : vector<8x256xf32>
    %288 = vector.extract_strided_slice %281 {offsets = [0, 240], sizes = [8, 16], strides = [1, 1]} : vector<8x256xf32> to vector<8x16xf32>
    %289 = vector.extract_strided_slice %281 {offsets = [0, 0], sizes = [8, 240], strides = [1, 1]} : vector<8x256xf32> to vector<8x240xf32>
    %290 = tpu.concatenate %288, %289 in 1 : vector<8x16xf32>, vector<8x240xf32> -> vector<8x256xf32>
    %c46 = arith.constant 46 : index
    %c0_73 = arith.constant 0 : index
    %291 = vector.load %arg1[%c46, %c0_73] : memref<54x256xf32, #tpu.memory_space<vmem>>, vector<1x256xf32>
    %292 = vector.broadcast %291 : vector<1x256xf32> to vector<8x256xf32>
    %293 = arith.mulf %290, %292 : vector<8x256xf32>
    %294 = vector.extract_strided_slice %281 {offsets = [0, 241], sizes = [8, 15], strides = [1, 1]} : vector<8x256xf32> to vector<8x15xf32>
    %295 = vector.extract_strided_slice %281 {offsets = [0, 0], sizes = [8, 241], strides = [1, 1]} : vector<8x256xf32> to vector<8x241xf32>
    %296 = tpu.concatenate %294, %295 in 1 : vector<8x15xf32>, vector<8x241xf32> -> vector<8x256xf32>
    %c47 = arith.constant 47 : index
    %c0_74 = arith.constant 0 : index
    %297 = vector.load %arg1[%c47, %c0_74] : memref<54x256xf32, #tpu.memory_space<vmem>>, vector<1x256xf32>
    %298 = vector.broadcast %297 : vector<1x256xf32> to vector<8x256xf32>
    %299 = arith.mulf %296, %298 : vector<8x256xf32>
    %300 = vector.extract_strided_slice %281 {offsets = [0, 255], sizes = [8, 1], strides = [1, 1]} : vector<8x256xf32> to vector<8x1xf32>
    %301 = vector.extract_strided_slice %281 {offsets = [0, 0], sizes = [8, 255], strides = [1, 1]} : vector<8x256xf32> to vector<8x255xf32>
    %302 = tpu.concatenate %300, %301 in 1 : vector<8x1xf32>, vector<8x255xf32> -> vector<8x256xf32>
    %c48 = arith.constant 48 : index
    %c0_75 = arith.constant 0 : index
    %303 = vector.load %arg1[%c48, %c0_75] : memref<54x256xf32, #tpu.memory_space<vmem>>, vector<1x256xf32>
    %304 = vector.broadcast %303 : vector<1x256xf32> to vector<8x256xf32>
    %305 = arith.mulf %302, %304 : vector<8x256xf32>
    %306 = vector.extract_strided_slice %281 {offsets = [0, 1], sizes = [8, 255], strides = [1, 1]} : vector<8x256xf32> to vector<8x255xf32>
    %307 = vector.extract_strided_slice %281 {offsets = [0, 0], sizes = [8, 1], strides = [1, 1]} : vector<8x256xf32> to vector<8x1xf32>
    %308 = tpu.concatenate %306, %307 in 1 : vector<8x255xf32>, vector<8x1xf32> -> vector<8x256xf32>
    %c50 = arith.constant 50 : index
    %c0_76 = arith.constant 0 : index
    %309 = vector.load %arg1[%c50, %c0_76] : memref<54x256xf32, #tpu.memory_space<vmem>>, vector<1x256xf32>
    %310 = vector.broadcast %309 : vector<1x256xf32> to vector<8x256xf32>
    %311 = arith.mulf %308, %310 : vector<8x256xf32>
    %312 = vector.extract_strided_slice %281 {offsets = [0, 15], sizes = [8, 241], strides = [1, 1]} : vector<8x256xf32> to vector<8x241xf32>
    %313 = vector.extract_strided_slice %281 {offsets = [0, 0], sizes = [8, 15], strides = [1, 1]} : vector<8x256xf32> to vector<8x15xf32>
    %314 = tpu.concatenate %312, %313 in 1 : vector<8x241xf32>, vector<8x15xf32> -> vector<8x256xf32>
    %c51 = arith.constant 51 : index
    %c0_77 = arith.constant 0 : index
    %315 = vector.load %arg1[%c51, %c0_77] : memref<54x256xf32, #tpu.memory_space<vmem>>, vector<1x256xf32>
    %316 = vector.broadcast %315 : vector<1x256xf32> to vector<8x256xf32>
    %317 = arith.mulf %314, %316 : vector<8x256xf32>
    %318 = vector.extract_strided_slice %281 {offsets = [0, 16], sizes = [8, 240], strides = [1, 1]} : vector<8x256xf32> to vector<8x240xf32>
    %319 = vector.extract_strided_slice %281 {offsets = [0, 0], sizes = [8, 16], strides = [1, 1]} : vector<8x256xf32> to vector<8x16xf32>
    %320 = tpu.concatenate %318, %319 in 1 : vector<8x240xf32>, vector<8x16xf32> -> vector<8x256xf32>
    %c52 = arith.constant 52 : index
    %c0_78 = arith.constant 0 : index
    %321 = vector.load %arg1[%c52, %c0_78] : memref<54x256xf32, #tpu.memory_space<vmem>>, vector<1x256xf32>
    %322 = vector.broadcast %321 : vector<1x256xf32> to vector<8x256xf32>
    %323 = arith.mulf %320, %322 : vector<8x256xf32>
    %324 = vector.extract_strided_slice %281 {offsets = [0, 17], sizes = [8, 239], strides = [1, 1]} : vector<8x256xf32> to vector<8x239xf32>
    %325 = vector.extract_strided_slice %281 {offsets = [0, 0], sizes = [8, 17], strides = [1, 1]} : vector<8x256xf32> to vector<8x17xf32>
    %326 = tpu.concatenate %324, %325 in 1 : vector<8x239xf32>, vector<8x17xf32> -> vector<8x256xf32>
    %c53 = arith.constant 53 : index
    %c0_79 = arith.constant 0 : index
    %327 = vector.load %arg1[%c53, %c0_79] : memref<54x256xf32, #tpu.memory_space<vmem>>, vector<1x256xf32>
    %328 = vector.broadcast %327 : vector<1x256xf32> to vector<8x256xf32>
    %329 = arith.mulf %326, %328 : vector<8x256xf32>
    %330 = tpu.concatenate %287, %293, %299, %305, %281, %311, %317, %323, %329 in 0 : vector<8x256xf32>, vector<8x256xf32>, vector<8x256xf32>, vector<8x256xf32>, vector<8x256xf32>, vector<8x256xf32>, vector<8x256xf32>, vector<8x256xf32>, vector<8x256xf32> -> vector<72x256xf32>
    %c0_80 = arith.constant 0 : index
    %c0_81 = arith.constant 0 : index
    %331 = vector.load %arg13[%c0_80, %c0_81] : memref<4x72xf32, #tpu.memory_space<vmem>>, vector<4x72xf32>
    %cst_82 = arith.constant dense<0.000000e+00> : vector<4x256xf32>
    %332 = tpu.matmul %331, %330, %cst_82 {dimension_numbers = #tpu.dot_dimension_numbers<[1], [0], [0], [1], [0, 0, 1, 1], [], []>} : vector<4x72xf32>, vector<72x256xf32>, vector<4x256xf32> -> vector<4x256xf32>
    %c0_83 = arith.constant 0 : index
    %c0_84 = arith.constant 0 : index
    %333 = vector.load %arg14[%c0_83, %c0_84] : memref<4x1xf32, #tpu.memory_space<vmem>>, vector<4x1xf32>
    %334 = vector.broadcast %333 : vector<4x1xf32> to vector<4x256xf32>
    %335 = arith.addf %332, %334 : vector<4x256xf32>
    %cst_85 = arith.constant 0.000000e+00 : f32
    %336 = vector.broadcast %cst_85 : f32 to vector<4x256xf32>
    %337 = arith.maximumf %335, %336 : vector<4x256xf32>
    %c0_86 = arith.constant 0 : index
    %c0_87 = arith.constant 0 : index
    %338 = vector.load %arg15[%c0_86, %c0_87] : memref<1x4xf32, #tpu.memory_space<vmem>>, vector<1x4xf32>
    %c0_88 = arith.constant 0 : index
    %c0_89 = arith.constant 0 : index
    %339 = vector.load %arg16[%c0_88, %c0_89] : memref<1x1xf32, #tpu.memory_space<vmem>>, vector<1x1xf32>
    %cst_90 = arith.constant dense<0.000000e+00> : vector<1x256xf32>
    %340 = tpu.matmul %338, %337, %cst_90 {dimension_numbers = #tpu.dot_dimension_numbers<[1], [0], [0], [1], [0, 0, 1, 1], [], []>} : vector<1x4xf32>, vector<4x256xf32>, vector<1x256xf32> -> vector<1x256xf32>
    %341 = vector.broadcast %339 : vector<1x1xf32> to vector<1x256xf32>
    %342 = arith.addf %340, %341 : vector<1x256xf32>
    %c0_91 = arith.constant 0 : index
    %c0_92 = arith.constant 0 : index
    %c0_93 = arith.constant 0 : index
    %343 = vector.load %arg17[%c0_91, %c0_92, %c0_93] : memref<1x1x256xf32, #tpu.memory_space<vmem>>, vector<1x1x256xf32>
    %344 = vector.shape_cast %343 : vector<1x1x256xf32> to vector<1x256xf32>
    %345 = vector.shape_cast %342 : vector<1x256xf32> to vector<1x1x256xf32>
    tpu.vector_store %arg17[%c0_91, %c0_92, %c0_93], %345 {strides = array<i32>} : memref<1x1x256xf32, #tpu.memory_space<vmem>>, vector<1x1x256xf32>,
    return
  }
  func.func @transform_0(%arg0: i32) -> (i32, i32) {
    %c0_i32 = arith.constant 0 : i32
    %c0_i32_0 = arith.constant 0 : i32
    %c0_i32_1 = arith.constant 0 : i32
    return %c0_i32, %c0_i32_0 : i32, i32
  }
  func.func @transform_1(%arg0: i32) -> (i32, i32, i32) {
    %c0_i32 = arith.constant 0 : i32
    %c0_i32_0 = arith.constant 0 : i32
    %c0_i32_1 = arith.constant 0 : i32
    return %arg0, %c0_i32, %c0_i32_0 : i32, i32, i32
  }
  func.func @transform_2(%arg0: i32) -> (i32, i32) {
    %c0_i32 = arith.constant 0 : i32
    %c0_i32_0 = arith.constant 0 : i32
    %c0_i32_1 = arith.constant 0 : i32
    return %c0_i32, %c0_i32_0 : i32, i32
  }
  func.func @transform_3(%arg0: i32) -> (i32, i32) {
    %c0_i32 = arith.constant 0 : i32
    %c0_i32_0 = arith.constant 0 : i32
    %c0_i32_1 = arith.constant 0 : i32
    return %c0_i32, %c0_i32_0 : i32, i32
  }
  func.func @transform_4(%arg0: i32) -> (i32, i32) {
    %c0_i32 = arith.constant 0 : i32
    %c0_i32_0 = arith.constant 0 : i32
    %c0_i32_1 = arith.constant 0 : i32
    return %c0_i32, %c0_i32_0 : i32, i32
  }
  func.func @transform_5(%arg0: i32) -> (i32, i32) {
    %c0_i32 = arith.constant 0 : i32
    %c0_i32_0 = arith.constant 0 : i32
    %c0_i32_1 = arith.constant 0 : i32
    return %c0_i32, %c0_i32_0 : i32, i32
  }
  func.func @transform_6(%arg0: i32) -> (i32, i32) {
    %c0_i32 = arith.constant 0 : i32
    %c0_i32_0 = arith.constant 0 : i32
    %c0_i32_1 = arith.constant 0 : i32
    return %c0_i32, %c0_i32_0 : i32, i32
  }
  func.func @transform_7(%arg0: i32) -> (i32, i32) {
    %c0_i32 = arith.constant 0 : i32
    %c0_i32_0 = arith.constant 0 : i32
    %c0_i32_1 = arith.constant 0 : i32
    return %c0_i32, %c0_i32_0 : i32, i32
  }
  func.func @transform_8(%arg0: i32) -> (i32, i32) {
    %c0_i32 = arith.constant 0 : i32
    %c0_i32_0 = arith.constant 0 : i32
    %c0_i32_1 = arith.constant 0 : i32
    return %c0_i32, %c0_i32_0 : i32, i32
  }
  func.func @transform_9(%arg0: i32) -> (i32, i32) {
    %c0_i32 = arith.constant 0 : i32
    %c0_i32_0 = arith.constant 0 : i32
    %c0_i32_1 = arith.constant 0 : i32
    return %c0_i32, %c0_i32_0 : i32, i32
  }
  func.func @transform_10(%arg0: i32) -> (i32, i32) {
    %c0_i32 = arith.constant 0 : i32
    %c0_i32_0 = arith.constant 0 : i32
    %c0_i32_1 = arith.constant 0 : i32
    return %c0_i32, %c0_i32_0 : i32, i32
  }
  func.func @transform_11(%arg0: i32) -> (i32, i32) {
    %c0_i32 = arith.constant 0 : i32
    %c0_i32_0 = arith.constant 0 : i32
    %c0_i32_1 = arith.constant 0 : i32
    return %c0_i32, %c0_i32_0 : i32, i32
  }
  func.func @transform_12(%arg0: i32) -> (i32, i32) {
    %c0_i32 = arith.constant 0 : i32
    %c0_i32_0 = arith.constant 0 : i32
    %c0_i32_1 = arith.constant 0 : i32
    return %c0_i32, %c0_i32_0 : i32, i32
  }
  func.func @transform_13(%arg0: i32) -> (i32, i32) {
    %c0_i32 = arith.constant 0 : i32
    %c0_i32_0 = arith.constant 0 : i32
    %c0_i32_1 = arith.constant 0 : i32
    return %c0_i32, %c0_i32_0 : i32, i32
  }
  func.func @transform_14(%arg0: i32) -> (i32, i32) {
    %c0_i32 = arith.constant 0 : i32
    %c0_i32_0 = arith.constant 0 : i32
    %c0_i32_1 = arith.constant 0 : i32
    return %c0_i32, %c0_i32_0 : i32, i32
  }
  func.func @transform_15(%arg0: i32) -> (i32, i32) {
    %c0_i32 = arith.constant 0 : i32
    %c0_i32_0 = arith.constant 0 : i32
    %c0_i32_1 = arith.constant 0 : i32
    return %c0_i32, %c0_i32_0 : i32, i32
  }
  func.func @transform_16(%arg0: i32) -> (i32, i32, i32) {
    %c0_i32 = arith.constant 0 : i32
    %c0_i32_0 = arith.constant 0 : i32
    %c0_i32_1 = arith.constant 0 : i32
    return %arg0, %c0_i32, %c0_i32_0 : i32, i32, i32
  }
}

</mosaic_0001>

<llo_original>
// kernel: tpu_custom_call.1
$region0: #{tpu_custom_call.1}
  #allocation0 [shape = 'u32[]', space=smem, size = 0x4, offset = 0x4, fixed_abs, tag = 'smem constant byte address 0x4 - core index']
  #allocation1 [shape = 'u32[144,128]{1,0:T(1,128)}', space=vmem, size = 0x12000, scoped, tag = 'internal scratch']
  #allocation2 [shape = 'f32[1,1]{1,0:T(1,128)S(1)}', space=vmem, size = 0x200, scoped, tag = 'scoped memory for tpu_custom_call.1']
  %s0 = inlined_call_operand.hbm [shape: f32[54,256], index: 0, kind: input, shape index: {}]
  %s1 = inlined_call_operand.vmem [shape: f32[2,8,256], index: 1, kind: input, shape index: {}]
  %s2 = inlined_call_operand.hbm [shape: f32[8,72], index: 2, kind: input, shape index: {}]
  %s3 = inlined_call_operand.vmem [shape: f32[8,1], index: 3, kind: input, shape index: {}]
  %s4 = inlined_call_operand.hbm [shape: f32[16,72], index: 4, kind: input, shape index: {}]
  %s5 = inlined_call_operand.vmem [shape: f32[16,1], index: 5, kind: input, shape index: {}]
  %s6 = inlined_call_operand.vmem [shape: f32[32,144], index: 6, kind: input, shape index: {}]
  %s7 = inlined_call_operand.vmem [shape: f32[32,1], index: 7, kind: input, shape index: {}]
  %s8 = inlined_call_operand.hbm [shape: f32[16,288], index: 8, kind: input, shape index: {}]
  %s9 = inlined_call_operand.vmem [shape: f32[16,1], index: 9, kind: input, shape index: {}]
  %s10 = inlined_call_operand.hbm [shape: f32[8,144], index: 10, kind: input, shape index: {}]
  %s11 = inlined_call_operand.vmem [shape: f32[8,1], index: 11, kind: input, shape index: {}]
  %s12 = inlined_call_operand.vmem [shape: f32[4,72], index: 12, kind: input, shape index: {}]
  %s13 = inlined_call_operand.vmem [shape: f32[4,1], index: 13, kind: input, shape index: {}]
  %s14 = inlined_call_operand.vmem [shape: f32[1,4], index: 14, kind: input, shape index: {}]
  %s15 = inlined_call_operand.<no memory space> [shape: f32[1,1], index: 15, kind: input, shape index: {}]
  %s16 = inlined_call_operand.hbm [shape: f32[2,1,256], index: 16, kind: output, shape index: {}]
  %s17 = sld [smem:[#allocation0]]
  $region117: #{tpu_custom_call.1} parent=0
    _
  %s19 = ssub.s32 1, %s17
  %s20 = scalar_select 0, %s19, %s17
  %v21 = vstv %s15
  %22 = vst [vmem:[#allocation2] sm:$0x1] %v21
  $region1: #{tpu_custom_call.1} parent=0
    #allocation3 [shape = 'u8[57344]{0}', space=vmem, size = 0xe000, scoped, tag = 'input window, operand 0, single buffered']
    #allocation4 [shape = 's32[2]{0}', space=sflag, size = 0x8, scoped, tag = 'scoped memory for tpu_custom_call.1']
    #allocation5 [shape = 's32[2]{0}', space=sflag, size = 0x8, scoped, tag = 'scoped memory for tpu_custom_call.1']
    #allocation6 [shape = 'u8[4096]{0}', space=vmem, size = 0x1000, scoped, tag = 'input window, operand 2, single buffered']
    #allocation7 [shape = 's32[1]{0}', space=sflag, size = 0x4, scoped, tag = 'scoped memory for tpu_custom_call.1']
    #allocation8 [shape = 'u8[8192]{0}', space=vmem, size = 0x2000, scoped, tag = 'input window, operand 4, single buffered']
    #allocation9 [shape = 'u8[24576]{0}', space=vmem, size = 0x6000, scoped, tag = 'input window, operand 8, single buffered']
    #allocation10 [shape = 's32[1]{0}', space=sflag, size = 0x4, scoped, tag = 'scoped memory for tpu_custom_call.1']
    #allocation11 [shape = 'u8[8192]{0}', space=vmem, size = 0x2000, scoped, tag = 'input window, operand 10, single buffered']
    #allocation12 [shape = 'u8[2048]{0}', space=vmem, size = 0x800, scoped, tag = 'output window, operand 0']
    %23 = vsyncpa [#allocation4], 0
    %24 = vsyncpa [#allocation7], 0
    %25 = vsyncpa [#allocation10], 0
    %26 = vsyncpa [#allocation5], 0
    %s27 = scalar_lea.sflag [#allocation5], 1
    %28 = vsyncpa %s27, 0
    loop: start=0, step=1, limit=4
    $region2: #{tpu_custom_call.1} parent=1 // loop_pre_header
      _
    $region3: #{tpu_custom_call.1} parent=1 // loop_header
      %s30 = sphi 0, %s34
      %p31 = scmp.ge.s32.totalorder %s30, 4
      %s38 = sphi 0, %s38
      %s40 = sphi 0, %s38
      %s41 = sphi 0, %s40
      %s55 = sphi 0, %s41
      %s61 = sphi 0, %s63
      %s64 = sphi 0, %s61
      %s65 = sphi 0, %s64
      %s81 = sphi 0, %s65
      %s85 = sphi 0, %s85
      %s87 = sphi 0, %s85
      %s88 = sphi 0, %s87
      %s102 = sphi 0, %s88
      %s106 = sphi 0, %s106
      %s108 = sphi 0, %s106
      %s109 = sphi 0, %s108
      %s123 = sphi 0, %s109
      %s127 = sphi 0, %s127
      %s129 = sphi 0, %s127
      %s130 = sphi 0, %s129
      %s144 = sphi 0, %s130
      %s148 = sphi 0, %s148
      %s150 = sphi 0, %s148
      %s151 = sphi 0, %s150
      %s165 = sphi 0, %s151
      %s169 = sphi 0, %s169
      %s171 = sphi 0, %s169
      %s172 = sphi 0, %s171
      %s186 = sphi 0, %s172
      %s190 = sphi 0, %s190
      %s192 = sphi 0, %s190
      %s193 = sphi 0, %s192
      %s207 = sphi 0, %s193
      %s211 = sphi 0, %s211
      %s213 = sphi 0, %s211
      %s214 = sphi 0, %s213
      %s228 = sphi 0, %s214
      %s232 = sphi 0, %s232
      %s234 = sphi 0, %s232
      %s235 = sphi 0, %s234
      %s249 = sphi 0, %s235
      %s253 = sphi 0, %s253
      %s255 = sphi 0, %s253
      %s256 = sphi 0, %s255
      %s270 = sphi 0, %s256
      %s274 = sphi 0, %s274
      %s276 = sphi 0, %s274
      %s277 = sphi 0, %s276
      %s291 = sphi 0, %s277
      %s295 = sphi 0, %s295
      %s297 = sphi 0, %s295
      %s298 = sphi 0, %s297
      %s312 = sphi 0, %s298
      %s316 = sphi 0, %s316
      %s318 = sphi 0, %s316
      %s319 = sphi 0, %s318
      %s333 = sphi 0, %s319
      %s337 = sphi 0, %s337
      %s339 = sphi 0, %s337
      %s340 = sphi 0, %s339
      %s354 = sphi 0, %s340
      %s358 = sphi 0, %s358
      %s360 = sphi 0, %s358
      %s361 = sphi 0, %s360
      %s375 = sphi 0, %s361
      %s381 = sphi 0, %s383
      %s384 = sphi 0, %s381
      %s385 = sphi 0, %s384
      %s401 = sphi 0, %s385
    $region4: #{tpu_custom_call.1} parent=1 // loop_header_branch
      %33 = sbr.rel (%p31) target = $region8
    $region5: #{tpu_custom_call.1} parent=1 // loop_body
      %s35 = ssub.s32 %s30, 1
      %s36 = ssub.s32 %s30, 2
      %s37 = sadd.s32 %s30, 1
      %s39 = sadd.s32 %s38, 1
      %p42 = scmp.eq.s32.totalorder %s30, 1
      %p43 = scmp.ne.s32.totalorder %s38, %s40
      %p44 = scmp.eq.s32.totalorder %s30, 0
      %p45 = por %p43, %p44
      %p46 = scmp.ne.s32.totalorder %s38, %s40
      %p47 = scmp.eq.s32.totalorder %s35, 1
      %p48 = por %p46, %p47
      %p49 = scmp.ne.s32.totalorder %s40, %s41
      %p50 = scmp.eq.s32.totalorder %s35, 0
      %p51 = por %p49, %p50
      %p52 = scmp.ne.s32.totalorder %s40, %s41
      %p53 = scmp.eq.s32.totalorder %s36, 1
      %p54 = por %p52, %p53
      %p56 = scmp.ne.s32.totalorder %s41, %s55
      %p57 = scmp.eq.s32.totalorder %s36, 0
      %p58 = por %p56, %p57
      %s59 = ssub.s32 %s30, %s37
      %p60 = scmp.eq.s32.totalorder %s59, 0
      %s62 = sadd.s32 %s61, 1
      %s63 = scalar_select %p60, %s61, %s62
      %p66 = pneg %p60
      %p67 = scmp.eq.s32.totalorder %s30, 1
      %p68 = por %p66, %p67
      %p69 = scmp.ne.s32.totalorder %s61, %s64
      %p70 = scmp.eq.s32.totalorder %s30, 0
      %p71 = por %p69, %p70
      %p72 = scmp.ne.s32.totalorder %s61, %s64
      %p73 = scmp.eq.s32.totalorder %s35, 1
      %p74 = por %p72, %p73
      %p75 = scmp.ne.s32.totalorder %s64, %s65
      %p76 = scmp.eq.s32.totalorder %s35, 0
      %p77 = por %p75, %p76
      %p78 = scmp.ne.s32.totalorder %s64, %s65
      %p79 = scmp.eq.s32.totalorder %s36, 1
      %p80 = por %p78, %p79
      %p82 = scmp.ne.s32.totalorder %s65, %s81
      %p83 = scmp.eq.s32.totalorder %s36, 0
      %p84 = por %p82, %p83
      %s86 = sadd.s32 %s85, 1
      %p89 = scmp.eq.s32.totalorder %s30, 1
      %p90 = scmp.ne.s32.totalorder %s85, %s87
      %p91 = scmp.eq.s32.totalorder %s30, 0
      %p92 = por %p90, %p91
      %p93 = scmp.ne.s32.totalorder %s85, %s87
      %p94 = scmp.eq.s32.totalorder %s35, 1
      %p95 = por %p93, %p94
      %p96 = scmp.ne.s32.totalorder %s87, %s88
      %p97 = scmp.eq.s32.totalorder %s35, 0
      %p98 = por %p96, %p97
      %p99 = scmp.ne.s32.totalorder %s87, %s88
      %p100 = scmp.eq.s32.totalorder %s36, 1
      %p101 = por %p99, %p100
      %p103 = scmp.ne.s32.totalorder %s88, %s102
      %p104 = scmp.eq.s32.totalorder %s36, 0
      %p105 = por %p103, %p104
      %s107 = sadd.s32 %s106, 1
      %p110 = scmp.eq.s32.totalorder %s30, 1
      %p111 = scmp.ne.s32.totalorder %s106, %s108
      %p112 = scmp.eq.s32.totalorder %s30, 0
      %p113 = por %p111, %p112
      %p114 = scmp.ne.s32.totalorder %s106, %s108
      %p115 = scmp.eq.s32.totalorder %s35, 1
      %p116 = por %p114, %p115
      %p117 = scmp.ne.s32.totalorder %s108, %s109
      %p118 = scmp.eq.s32.totalorder %s35, 0
      %p119 = por %p117, %p118
      %p120 = scmp.ne.s32.totalorder %s108, %s109
      %p121 = scmp.eq.s32.totalorder %s36, 1
      %p122 = por %p120, %p121
      %p124 = scmp.ne.s32.totalorder %s109, %s123
      %p125 = scmp.eq.s32.totalorder %s36, 0
      %p126 = por %p124, %p125
      %s128 = sadd.s32 %s127, 1
      %p131 = scmp.eq.s32.totalorder %s30, 1
      %p132 = scmp.ne.s32.totalorder %s127, %s129
      %p133 = scmp.eq.s32.totalorder %s30, 0
      %p134 = por %p132, %p133
      %p135 = scmp.ne.s32.totalorder %s127, %s129
      %p136 = scmp.eq.s32.totalorder %s35, 1
      %p137 = por %p135, %p136
      %p138 = scmp.ne.s32.totalorder %s129, %s130
      %p139 = scmp.eq.s32.totalorder %s35, 0
      %p140 = por %p138, %p139
      %p141 = scmp.ne.s32.totalorder %s129, %s130
      %p142 = scmp.eq.s32.totalorder %s36, 1
      %p143 = por %p141, %p142
      %p145 = scmp.ne.s32.totalorder %s130, %s144
      %p146 = scmp.eq.s32.totalorder %s36, 0
      %p147 = por %p145, %p146
      %s149 = sadd.s32 %s148, 1
      %p152 = scmp.eq.s32.totalorder %s30, 1
      %p153 = scmp.ne.s32.totalorder %s148, %s150
      %p154 = scmp.eq.s32.totalorder %s30, 0
      %p155 = por %p153, %p154
      %p156 = scmp.ne.s32.totalorder %s148, %s150
      %p157 = scmp.eq.s32.totalorder %s35, 1
      %p158 = por %p156, %p157
      %p159 = scmp.ne.s32.totalorder %s150, %s151
      %p160 = scmp.eq.s32.totalorder %s35, 0
      %p161 = por %p159, %p160
      %p162 = scmp.ne.s32.totalorder %s150, %s151
      %p163 = scmp.eq.s32.totalorder %s36, 1
      %p164 = por %p162, %p163
      %p166 = scmp.ne.s32.totalorder %s151, %s165
      %p167 = scmp.eq.s32.totalorder %s36, 0
      %p168 = por %p166, %p167
      %s170 = sadd.s32 %s169, 1
      %p173 = scmp.eq.s32.totalorder %s30, 1
      %p174 = scmp.ne.s32.totalorder %s169, %s171
      %p175 = scmp.eq.s32.totalorder %s30, 0
      %p176 = por %p174, %p175
      %p177 = scmp.ne.s32.totalorder %s169, %s171
      %p178 = scmp.eq.s32.totalorder %s35, 1
      %p179 = por %p177, %p178
      %p180 = scmp.ne.s32.totalorder %s171, %s172
      %p181 = scmp.eq.s32.totalorder %s35, 0
      %p182 = por %p180, %p181
      %p183 = scmp.ne.s32.totalorder %s171, %s172
      %p184 = scmp.eq.s32.totalorder %s36, 1
      %p185 = por %p183, %p184
      %p187 = scmp.ne.s32.totalorder %s172, %s186
      %p188 = scmp.eq.s32.totalorder %s36, 0
      %p189 = por %p187, %p188
      %s191 = sadd.s32 %s190, 1
      %p194 = scmp.eq.s32.totalorder %s30, 1
      %p195 = scmp.ne.s32.totalorder %s190, %s192
      %p196 = scmp.eq.s32.totalorder %s30, 0
      %p197 = por %p195, %p196
      %p198 = scmp.ne.s32.totalorder %s190, %s192
      %p199 = scmp.eq.s32.totalorder %s35, 1
      %p200 = por %p198, %p199
      %p201 = scmp.ne.s32.totalorder %s192, %s193
      %p202 = scmp.eq.s32.totalorder %s35, 0
      %p203 = por %p201, %p202
      %p204 = scmp.ne.s32.totalorder %s192, %s193
      %p205 = scmp.eq.s32.totalorder %s36, 1
      %p206 = por %p204, %p205
      %p208 = scmp.ne.s32.totalorder %s193, %s207
      %p209 = scmp.eq.s32.totalorder %s36, 0
      %p210 = por %p208, %p209
      %s212 = sadd.s32 %s211, 1
      %p215 = scmp.eq.s32.totalorder %s30, 1
      %p216 = scmp.ne.s32.totalorder %s211, %s213
      %p217 = scmp.eq.s32.totalorder %s30, 0
      %p218 = por %p216, %p217
      %p219 = scmp.ne.s32.totalorder %s211, %s213
      %p220 = scmp.eq.s32.totalorder %s35, 1
      %p221 = por %p219, %p220
      %p222 = scmp.ne.s32.totalorder %s213, %s214
      %p223 = scmp.eq.s32.totalorder %s35, 0
      %p224 = por %p222, %p223
      %p225 = scmp.ne.s32.totalorder %s213, %s214
      %p226 = scmp.eq.s32.totalorder %s36, 1
      %p227 = por %p225, %p226
      %p229 = scmp.ne.s32.totalorder %s214, %s228
      %p230 = scmp.eq.s32.totalorder %s36, 0
      %p231 = por %p229, %p230
      %s233 = sadd.s32 %s232, 1
      %p236 = scmp.eq.s32.totalorder %s30, 1
      %p237 = scmp.ne.s32.totalorder %s232, %s234
      %p238 = scmp.eq.s32.totalorder %s30, 0
      %p239 = por %p237, %p238
      %p240 = scmp.ne.s32.totalorder %s232, %s234
      %p241 = scmp.eq.s32.totalorder %s35, 1
      %p242 = por %p240, %p241
      %p243 = scmp.ne.s32.totalorder %s234, %s235
      %p244 = scmp.eq.s32.totalorder %s35, 0
      %p245 = por %p243, %p244
      %p246 = scmp.ne.s32.totalorder %s234, %s235
      %p247 = scmp.eq.s32.totalorder %s36, 1
      %p248 = por %p246, %p247
      %p250 = scmp.ne.s32.totalorder %s235, %s249
      %p251 = scmp.eq.s32.totalorder %s36, 0
      %p252 = por %p250, %p251
      %s254 = sadd.s32 %s253, 1
      %p257 = scmp.eq.s32.totalorder %s30, 1
      %p258 = scmp.ne.s32.totalorder %s253, %s255
      %p259 = scmp.eq.s32.totalorder %s30, 0
      %p260 = por %p258, %p259
      %p261 = scmp.ne.s32.totalorder %s253, %s255
      %p262 = scmp.eq.s32.totalorder %s35, 1
      %p263 = por %p261, %p262
      %p264 = scmp.ne.s32.totalorder %s255, %s256
      %p265 = scmp.eq.s32.totalorder %s35, 0
      %p266 = por %p264, %p265
      %p267 = scmp.ne.s32.totalorder %s255, %s256
      %p268 = scmp.eq.s32.totalorder %s36, 1
      %p269 = por %p267, %p268
      %p271 = scmp.ne.s32.totalorder %s256, %s270
      %p272 = scmp.eq.s32.totalorder %s36, 0
      %p273 = por %p271, %p272
      %s275 = sadd.s32 %s274, 1
      %p278 = scmp.eq.s32.totalorder %s30, 1
      %p279 = scmp.ne.s32.totalorder %s274, %s276
      %p280 = scmp.eq.s32.totalorder %s30, 0
      %p281 = por %p279, %p280
      %p282 = scmp.ne.s32.totalorder %s274, %s276
      %p283 = scmp.eq.s32.totalorder %s35, 1
      %p284 = por %p282, %p283
      %p285 = scmp.ne.s32.totalorder %s276, %s277
      %p286 = scmp.eq.s32.totalorder %s35, 0
      %p287 = por %p285, %p286
      %p288 = scmp.ne.s32.totalorder %s276, %s277
      %p289 = scmp.eq.s32.totalorder %s36, 1
      %p290 = por %p288, %p289
      %p292 = scmp.ne.s32.totalorder %s277, %s291
      %p293 = scmp.eq.s32.totalorder %s36, 0
      %p294 = por %p292, %p293
      %s296 = sadd.s32 %s295, 1
      %p299 = scmp.eq.s32.totalorder %s30, 1
      %p300 = scmp.ne.s32.totalorder %s295, %s297
      %p301 = scmp.eq.s32.totalorder %s30, 0
      %p302 = por %p300, %p301
      %p303 = scmp.ne.s32.totalorder %s295, %s297
      %p304 = scmp.eq.s32.totalorder %s35, 1
      %p305 = por %p303, %p304
      %p306 = scmp.ne.s32.totalorder %s297, %s298
      %p307 = scmp.eq.s32.totalorder %s35, 0
      %p308 = por %p306, %p307
      %p309 = scmp.ne.s32.totalorder %s297, %s298
      %p310 = scmp.eq.s32.totalorder %s36, 1
      %p311 = por %p309, %p310
      %p313 = scmp.ne.s32.totalorder %s298, %s312
      %p314 = scmp.eq.s32.totalorder %s36, 0
      %p315 = por %p313, %p314
      %s317 = sadd.s32 %s316, 1
      %p320 = scmp.eq.s32.totalorder %s30, 1
      %p321 = scmp.ne.s32.totalorder %s316, %s318
      %p322 = scmp.eq.s32.totalorder %s30, 0
      %p323 = por %p321, %p322
      %p324 = scmp.ne.s32.totalorder %s316, %s318
      %p325 = scmp.eq.s32.totalorder %s35, 1
      %p326 = por %p324, %p325
      %p327 = scmp.ne.s32.totalorder %s318, %s319
      %p328 = scmp.eq.s32.totalorder %s35, 0
      %p329 = por %p327, %p328
      %p330 = scmp.ne.s32.totalorder %s318, %s319
      %p331 = scmp.eq.s32.totalorder %s36, 1
      %p332 = por %p330, %p331
      %p334 = scmp.ne.s32.totalorder %s319, %s333
      %p335 = scmp.eq.s32.totalorder %s36, 0
      %p336 = por %p334, %p335
      %s338 = sadd.s32 %s337, 1
      %p341 = scmp.eq.s32.totalorder %s30, 1
      %p342 = scmp.ne.s32.totalorder %s337, %s339
      %p343 = scmp.eq.s32.totalorder %s30, 0
      %p344 = por %p342, %p343
      %p345 = scmp.ne.s32.totalorder %s337, %s339
      %p346 = scmp.eq.s32.totalorder %s35, 1
      %p347 = por %p345, %p346
      %p348 = scmp.ne.s32.totalorder %s339, %s340
      %p349 = scmp.eq.s32.totalorder %s35, 0
      %p350 = por %p348, %p349
      %p351 = scmp.ne.s32.totalorder %s339, %s340
      %p352 = scmp.eq.s32.totalorder %s36, 1
      %p353 = por %p351, %p352
      %p355 = scmp.ne.s32.totalorder %s340, %s354
      %p356 = scmp.eq.s32.totalorder %s36, 0
      %p357 = por %p355, %p356
      %s359 = sadd.s32 %s358, 1
      %p362 = scmp.eq.s32.totalorder %s30, 1
      %p363 = scmp.ne.s32.totalorder %s358, %s360
      %p364 = scmp.eq.s32.totalorder %s30, 0
      %p365 = por %p363, %p364
      %p366 = scmp.ne.s32.totalorder %s358, %s360
      %p367 = scmp.eq.s32.totalorder %s35, 1
      %p368 = por %p366, %p367
      %p369 = scmp.ne.s32.totalorder %s360, %s361
      %p370 = scmp.eq.s32.totalorder %s35, 0
      %p371 = por %p369, %p370
      %p372 = scmp.ne.s32.totalorder %s360, %s361
      %p373 = scmp.eq.s32.totalorder %s36, 1
      %p374 = por %p372, %p373
      %p376 = scmp.ne.s32.totalorder %s361, %s375
      %p377 = scmp.eq.s32.totalorder %s36, 0
      %p378 = por %p376, %p377
      %s379 = ssub.s32 %s30, %s37
      %p380 = scmp.eq.s32.totalorder %s379, 0
      %s382 = sadd.s32 %s381, 1
      %s383 = scalar_select %p380, %s381, %s382
      %p386 = pneg %p380
      %p387 = scmp.eq.s32.totalorder %s30, 1
      %p388 = por %p386, %p387
      %p389 = scmp.ne.s32.totalorder %s381, %s384
      %p390 = scmp.eq.s32.totalorder %s30, 0
      %p391 = por %p389, %p390
      %p392 = scmp.ne.s32.totalorder %s381, %s384
      %p393 = scmp.eq.s32.totalorder %s35, 1
      %p394 = por %p392, %p393
      %p395 = scmp.ne.s32.totalorder %s384, %s385
      %p396 = scmp.eq.s32.totalorder %s35, 0
      %p397 = por %p395, %p396
      %p398 = scmp.ne.s32.totalorder %s384, %s385
      %p399 = scmp.eq.s32.totalorder %s36, 1
      %p400 = por %p398, %p399
      %p402 = scmp.ne.s32.totalorder %s385, %s401
      %p403 = scmp.eq.s32.totalorder %s36, 0
      %p404 = por %p402, %p403
      %p405 = scmp.le.s32.totalorder 1, %s30
      %p406 = scmp.lt.s32.totalorder %s30, 3
      %p407 = pnand %p405, %p406
      %p408 = pneg %p407
      // Predicated region
      $region9: #{tpu_custom_call.1} parent=5 // pred_check
        _
      $region10: #{tpu_custom_call.1} parent=5 // pred_check_branch
        %410 = sbr.rel (%p407) target = $region12
      $region11: #{tpu_custom_call.1} parent=5 // pred_region
        %s411 = ssub.s32 %s30, 1
        // Predicated region
        $region13: #{tpu_custom_call.1} parent=11 // pred_check
          %p412 = pneg %p51
        $region14: #{tpu_custom_call.1} parent=11 // pred_check_branch
          %414 = sbr.rel (%p412) target = $region16
        $region15: #{tpu_custom_call.1} parent=11 // pred_region
          %s416 = ssub.s32 1792, 1792
          %417 = vsyncadd [#allocation4], %s416
          %s418 = sshll.u32 [#allocation3], 4
          %s419 = int_to_ptr.vmem [resolvable:$true] %s418
          %424 = dma.hbm_to_vmem [thread:$0]  %s0, 1792, %s419, [#allocation4], 256, 256, 16
        $region16: #{tpu_custom_call.1} parent=11 // pred_fallthru
          _
        // Predicated region
        $region17: #{tpu_custom_call.1} parent=11 // pred_check
          %p425 = pneg %p98
        $region18: #{tpu_custom_call.1} parent=11 // pred_check_branch
          %427 = sbr.rel (%p425) target = $region20
        $region19: #{tpu_custom_call.1} parent=11 // pred_region
          %s429 = ssub.s32 128, 128
          %430 = vsyncadd [#allocation7], %s429
          %s432 = sshll.u32 [#allocation6], 4
          %s433 = int_to_ptr.vmem [resolvable:$true] %s432
          %435 = dma.hbm_to_vmem [thread:$0]  %s2, 128, %s433, [#allocation7]
        $region20: #{tpu_custom_call.1} parent=11 // pred_fallthru
          _
        // Predicated region
        $region21: #{tpu_custom_call.1} parent=11 // pred_check
          %p436 = pneg %p119
        $region22: #{tpu_custom_call.1} parent=11 // pred_check_branch
          %438 = sbr.rel (%p436) target = $region24
        $region23: #{tpu_custom_call.1} parent=11 // pred_region
          _
        $region24: #{tpu_custom_call.1} parent=11 // pred_fallthru
          _
        // Predicated region
        $region25: #{tpu_custom_call.1} parent=11 // pred_check
          %p439 = pneg %p140
        $region26: #{tpu_custom_call.1} parent=11 // pred_check_branch
          %441 = sbr.rel (%p439) target = $region28
        $region27: #{tpu_custom_call.1} parent=11 // pred_region
          %s443 = ssub.s32 256, 256
          %444 = vsyncadd [#allocation7], %s443
          %s445 = sshll.u32 [#allocation8], 4
          %s446 = int_to_ptr.vmem [resolvable:$true] %s445
          %451 = dma.hbm_to_vmem [thread:$0]  %s4, 256, %s446, [#allocation7], 128, 128, 8
        $region28: #{tpu_custom_call.1} parent=11 // pred_fallthru
          _
        // Predicated region
        $region29: #{tpu_custom_call.1} parent=11 // pred_check
          %p452 = pneg %p161
        $region30: #{tpu_custom_call.1} parent=11 // pred_check_branch
          %454 = sbr.rel (%p452) target = $region32
        $region31: #{tpu_custom_call.1} parent=11 // pred_region
          _
        $region32: #{tpu_custom_call.1} parent=11 // pred_fallthru
          _
        // Predicated region
        $region33: #{tpu_custom_call.1} parent=11 // pred_check
          %p455 = pneg %p182
        $region34: #{tpu_custom_call.1} parent=11 // pred_check_branch
          %457 = sbr.rel (%p455) target = $region36
        $region35: #{tpu_custom_call.1} parent=11 // pred_region
          _
        $region36: #{tpu_custom_call.1} parent=11 // pred_fallthru
          _
        // Predicated region
        $region37: #{tpu_custom_call.1} parent=11 // pred_check
          %p458 = pneg %p203
        $region38: #{tpu_custom_call.1} parent=11 // pred_check_branch
          %460 = sbr.rel (%p458) target = $region40
        $region39: #{tpu_custom_call.1} parent=11 // pred_region
          _
        $region40: #{tpu_custom_call.1} parent=11 // pred_fallthru
          _
        // Predicated region
        $region41: #{tpu_custom_call.1} parent=11 // pred_check
          %p461 = pneg %p224
        $region42: #{tpu_custom_call.1} parent=11 // pred_check_branch
          %463 = sbr.rel (%p461) target = $region44
        $region43: #{tpu_custom_call.1} parent=11 // pred_region
          %s465 = ssub.s32 768, 768
          %466 = vsyncadd [#allocation10], %s465
          %s467 = sshll.u32 [#allocation9], 4
          %s468 = int_to_ptr.vmem [resolvable:$true] %s467
          %473 = dma.hbm_to_vmem [thread:$0]  %s8, 768, %s468, [#allocation10], 384, 384, 24
        $region44: #{tpu_custom_call.1} parent=11 // pred_fallthru
          _
        // Predicated region
        $region45: #{tpu_custom_call.1} parent=11 // pred_check
          %p474 = pneg %p245
        $region46: #{tpu_custom_call.1} parent=11 // pred_check_branch
          %476 = sbr.rel (%p474) target = $region48
        $region47: #{tpu_custom_call.1} parent=11 // pred_region
          _
        $region48: #{tpu_custom_call.1} parent=11 // pred_fallthru
          _
        // Predicated region
        $region49: #{tpu_custom_call.1} parent=11 // pred_check
          %p477 = pneg %p266
        $region50: #{tpu_custom_call.1} parent=11 // pred_check_branch
          %479 = sbr.rel (%p477) target = $region52
        $region51: #{tpu_custom_call.1} parent=11 // pred_region
          %s481 = ssub.s32 256, 256
          %482 = vsyncadd [#allocation10], %s481
          %s484 = sshll.u32 [#allocation11], 4
          %s485 = int_to_ptr.vmem [resolvable:$true] %s484
          %487 = dma.hbm_to_vmem [thread:$0]  %s10, 256, %s485, [#allocation10]
        $region52: #{tpu_custom_call.1} parent=11 // pred_fallthru
          _
        // Predicated region
        $region53: #{tpu_custom_call.1} parent=11 // pred_check
          %p488 = pneg %p287
        $region54: #{tpu_custom_call.1} parent=11 // pred_check_branch
          %490 = sbr.rel (%p488) target = $region56
        $region55: #{tpu_custom_call.1} parent=11 // pred_region
          _
        $region56: #{tpu_custom_call.1} parent=11 // pred_fallthru
          _
        // Predicated region
        $region57: #{tpu_custom_call.1} parent=11 // pred_check
          %p491 = pneg %p308
        $region58: #{tpu_custom_call.1} parent=11 // pred_check_branch
          %493 = sbr.rel (%p491) target = $region60
        $region59: #{tpu_custom_call.1} parent=11 // pred_region
          _
        $region60: #{tpu_custom_call.1} parent=11 // pred_fallthru
          _
        // Predicated region
        $region61: #{tpu_custom_call.1} parent=11 // pred_check
          %p494 = pneg %p329
        $region62: #{tpu_custom_call.1} parent=11 // pred_check_branch
          %496 = sbr.rel (%p494) target = $region64
        $region63: #{tpu_custom_call.1} parent=11 // pred_region
          _
        $region64: #{tpu_custom_call.1} parent=11 // pred_fallthru
          _
        // Predicated region
        $region65: #{tpu_custom_call.1} parent=11 // pred_check
          %p497 = pneg %p350
        $region66: #{tpu_custom_call.1} parent=11 // pred_check_branch
          %499 = sbr.rel (%p497) target = $region68
        $region67: #{tpu_custom_call.1} parent=11 // pred_region
          _
        $region68: #{tpu_custom_call.1} parent=11 // pred_fallthru
          _
        // Predicated region
        $region69: #{tpu_custom_call.1} parent=11 // pred_check
          %p500 = pneg %p371
        $region70: #{tpu_custom_call.1} parent=11 // pred_check_branch
          %502 = sbr.rel (%p500) target = $region72
        $region71: #{tpu_custom_call.1} parent=11 // pred_region
          _
        $region72: #{tpu_custom_call.1} parent=11 // pred_fallthru
          _
      $region12: #{tpu_custom_call.1} parent=5 // pred_fallthru
        _
      %p503 = scmp.lt.s32.totalorder %s30, 2
      // Predicated region
      $region73: #{tpu_custom_call.1} parent=5 // pred_check
        %p504 = pneg %p503
      $region74: #{tpu_custom_call.1} parent=5 // pred_check_branch
        %506 = sbr.rel (%p504) target = $region76
      $region75: #{tpu_custom_call.1} parent=5 // pred_region
        // Predicated region
        $region77: #{tpu_custom_call.1} parent=75 // pred_check
          %p507 = pneg %p71
        $region78: #{tpu_custom_call.1} parent=75 // pred_check_branch
          %509 = sbr.rel (%p507) target = $region80
        $region79: #{tpu_custom_call.1} parent=75 // pred_region
          %p510 = scmp.lt.s32.totalorder %s30, 1
          %s511 = scalar_select %p510, %s30, 1
          %s512 = smul.addr %s511, 2
          %s513 = smul.addr %s512, 8
          %s514 = scalar_lea.vmem %s1, %s513
        $region80: #{tpu_custom_call.1} parent=75 // pred_fallthru
          _
      $region76: #{tpu_custom_call.1} parent=5 // pred_fallthru
        _
      %p515 = scmp.le.s32.totalorder 1, %s30
      %p516 = scmp.lt.s32.totalorder %s30, 3
      %p517 = pnand %p515, %p516
      %p518 = pneg %p517
      // Predicated region
      $region81: #{tpu_custom_call.1} parent=5 // pred_check
        _
      $region82: #{tpu_custom_call.1} parent=5 // pred_check_branch
        %520 = sbr.rel (%p517) target = $region84
      $region83: #{tpu_custom_call.1} parent=5 // pred_region
        %s521 = ssub.s32 %s30, 1
        // Predicated region
        $region85: #{tpu_custom_call.1} parent=83 // pred_check
          %p522 = pneg %p51
        $region86: #{tpu_custom_call.1} parent=83 // pred_check_branch
          %524 = sbr.rel (%p522) target = $region88
        $region87: #{tpu_custom_call.1} parent=83 // pred_region
          %525 = dma.done [#allocation4], 1792
        $region88: #{tpu_custom_call.1} parent=83 // pred_fallthru
          _
        // Predicated region
        $region89: #{tpu_custom_call.1} parent=83 // pred_check
          %p526 = pneg %p98
        $region90: #{tpu_custom_call.1} parent=83 // pred_check_branch
          %528 = sbr.rel (%p526) target = $region92
        $region91: #{tpu_custom_call.1} parent=83 // pred_region
          %529 = dma.done [#allocation7], 128
        $region92: #{tpu_custom_call.1} parent=83 // pred_fallthru
          _
        // Predicated region
        $region93: #{tpu_custom_call.1} parent=83 // pred_check
          %p530 = pneg %p140
        $region94: #{tpu_custom_call.1} parent=83 // pred_check_branch
          %532 = sbr.rel (%p530) target = $region96
        $region95: #{tpu_custom_call.1} parent=83 // pred_region
          %533 = dma.done [#allocation7], 256
        $region96: #{tpu_custom_call.1} parent=83 // pred_fallthru
          _
        // Predicated region
        $region97: #{tpu_custom_call.1} parent=83 // pred_check
          %p534 = pneg %p224
        $region98: #{tpu_custom_call.1} parent=83 // pred_check_branch
          %536 = sbr.rel (%p534) target = $region100
        $region99: #{tpu_custom_call.1} parent=83 // pred_region
          %537 = dma.done [#allocation10], 768
        $region100: #{tpu_custom_call.1} parent=83 // pred_fallthru
          _
        // Predicated region
        $region101: #{tpu_custom_call.1} parent=83 // pred_check
          %p538 = pneg %p266
        $region102: #{tpu_custom_call.1} parent=83 // pred_check_branch
          %540 = sbr.rel (%p538) target = $region104
        $region103: #{tpu_custom_call.1} parent=83 // pred_region
          %541 = dma.done [#allocation10], 256
        $region104: #{tpu_custom_call.1} parent=83 // pred_fallthru
          _
        %p542 = pneg %p51
        %p543 = pneg %p48
        %p544 = scmp.lt.s32.totalorder %s35, 1
        %s545 = scalar_select %p544, %s35, 1
        %s546 = smul.addr %s545, 2
        %s547 = smul.addr %s546, 8
        %s548 = scalar_lea.vmem %s1, %s547
        %p549 = pneg %p77
        %p550 = pneg %p74
        %p551 = pneg %p98
        %p552 = pneg %p95
        %p553 = pneg %p119
        %p554 = pneg %p116
        %p555 = pneg %p140
        %p556 = pneg %p137
        %p557 = pneg %p161
        %p558 = pneg %p158
        %p559 = pneg %p182
        %p560 = pneg %p179
        %p561 = pneg %p203
        %p562 = pneg %p200
        %p563 = pneg %p224
        %p564 = pneg %p221
        %p565 = pneg %p245
        %p566 = pneg %p242
        %p567 = pneg %p266
        %p568 = pneg %p263
        %p569 = pneg %p287
        %p570 = pneg %p284
        %p571 = pneg %p308
        %p572 = pneg %p305
        %p573 = pneg %p329
        %p574 = pneg %p326
        %p575 = pneg %p350
        %p576 = pneg %p347
        %p577 = pneg %p371
        %p578 = pneg %p368
        %p579 = pneg %p397
        %p580 = pneg %p394
        %s581 = sand.u32 %s384, 1
        %s582 = scalar_lea.sflag [#allocation5], %s581
        %s583 = sand.u32 %s384, 1
        %s584 = smul.addr %s583, 2
        %s585 = scalar_lea.vmem [#allocation12], %s584
        %p586 = scmp.lt.s32.totalorder %s35, 1
        %s587 = scalar_select %p586, %s35, 1
        %s588 = smul.addr %s587, 2
        %s589 = smul.addr %s588, 8
        %s590 = scalar_lea.vmem %s1, %s589
        %v591 = vld [vmem:[%s590] sm:$0xff]
        %v592 = vld [vmem:[%s590 + $0x8] sm:$0xff]
        %594 = vrot.lane.b32.xlu0 %v592, 17
        %v595 = vpop.permute.xlu0 %594
        %598 = vrot.lane.b32.xlu0 %v591, 17
        %v599 = vpop.permute.xlu0 %598
        %vm600 = vcmask 138240
        %v601 = vsel %vm600, %v599, %v595
        %v604 = vsel %vm600, %v595, %v599
        %v605 = vld [vmem:[#allocation3] ss:$8 sm:$0x3]
        %v607 = vlaneseq
        %v608 = vshrl.u32 %v607, 7
        %v609 = vsub.s32 0, %v608
        %v610 = vrot.slane %v605, %v609
        %v611 = vlaneseq
        %v612 = vshrl.u32 %v611, 7
        %v613 = vsub.s32 1, %v612
        %v614 = vrot.slane %v605, %v613
        %v617 = vmul.f32 %v604, %v610
        %v618 = vmul.f32 %v601, %v614
        %619 = vrot.lane.b32.xlu0 %v592, 16
        %v620 = vpop.permute.xlu0 %619
        %622 = vrot.lane.b32.xlu0 %v591, 16
        %v623 = vpop.permute.xlu0 %622
        %vm624 = vcmask 130048
        %v625 = vsel %vm624, %v623, %v620
        %v628 = vsel %vm624, %v620, %v623
        %s629 = scalar_lea.vmem [#allocation3], 1
        %v630 = vld [vmem:[%s629] ss:$8 sm:$0x3]
        %v632 = vlaneseq
        %v633 = vshrl.u32 %v632, 7
        %v634 = vsub.s32 0, %v633
        %v635 = vrot.slane %v630, %v634
        %v636 = vlaneseq
        %v637 = vshrl.u32 %v636, 7
        %v638 = vsub.s32 1, %v637
        %v639 = vrot.slane %v630, %v638
        %v642 = vmul.f32 %v628, %v635
        %v643 = vmul.f32 %v625, %v639
        %644 = vrot.lane.b32.xlu0 %v592, 15
        %v645 = vpop.permute.xlu0 %644
        %647 = vrot.lane.b32.xlu0 %v591, 15
        %v648 = vpop.permute.xlu0 %647
        %vm649 = vcmask 121856
        %v650 = vsel %vm649, %v648, %v645
        %v653 = vsel %vm649, %v645, %v648
        %s654 = scalar_lea.vmem [#allocation3], 2
        %v655 = vld [vmem:[%s654] ss:$8 sm:$0x3]
        %v657 = vlaneseq
        %v658 = vshrl.u32 %v657, 7
        %v659 = vsub.s32 0, %v658
        %v660 = vrot.slane %v655, %v659
        %v661 = vlaneseq
        %v662 = vshrl.u32 %v661, 7
        %v663 = vsub.s32 1, %v662
        %v664 = vrot.slane %v655, %v663
        %v667 = vmul.f32 %v653, %v660
        %v668 = vmul.f32 %v650, %v664
        %669 = vrot.lane.b32.xlu0 %v592, 1
        %v670 = vpop.permute.xlu0 %669
        %672 = vrot.lane.b32.xlu0 %v591, 1
        %v673 = vpop.permute.xlu0 %672
        %vm674 = vcmask 7168
        %v675 = vsel %vm674, %v673, %v670
        %v678 = vsel %vm674, %v670, %v673
        %s679 = scalar_lea.vmem [#allocation3], 3
        %v680 = vld [vmem:[%s679] ss:$8 sm:$0x3]
        %v682 = vlaneseq
        %v683 = vshrl.u32 %v682, 7
        %v684 = vsub.s32 0, %v683
        %v685 = vrot.slane %v680, %v684
        %v686 = vlaneseq
        %v687 = vshrl.u32 %v686, 7
        %v688 = vsub.s32 1, %v687
        %v689 = vrot.slane %v680, %v688
        %v692 = vmul.f32 %v678, %v685
        %v693 = vmul.f32 %v675, %v689
        %694 = vrot.lane.b32.xlu0 %v591, 127
        %v695 = vpop.permute.xlu0 %694
        %696 = vrot.lane.b32.xlu0 %v592, 127
        %v697 = vpop.permute.xlu0 %696
        %vm698 = vcmask 1039360
        %v699 = vsel %vm698, %v695, %v697
        %v703 = vsel %vm698, %v697, %v695
        %s704 = scalar_lea.vmem [#allocation3], 5
        %v705 = vld [vmem:[%s704] ss:$8 sm:$0x3]
        %v707 = vlaneseq
        %v708 = vshrl.u32 %v707, 7
        %v709 = vsub.s32 0, %v708
        %v710 = vrot.slane %v705, %v709
        %v711 = vlaneseq
        %v712 = vshrl.u32 %v711, 7
        %v713 = vsub.s32 1, %v712
        %v714 = vrot.slane %v705, %v713
        %v717 = vmul.f32 %v699, %v710
        %v718 = vmul.f32 %v703, %v714
        %719 = vrot.lane.b32.xlu0 %v591, 113
        %v720 = vpop.permute.xlu0 %719
        %721 = vrot.lane.b32.xlu0 %v592, 113
        %v722 = vpop.permute.xlu0 %721
        %vm723 = vcmask 924672
        %v724 = vsel %vm723, %v720, %v722
        %v728 = vsel %vm723, %v722, %v720
        %s729 = scalar_lea.vmem [#allocation3], 6
        %v730 = vld [vmem:[%s729] ss:$8 sm:$0x3]
        %v732 = vlaneseq
        %v733 = vshrl.u32 %v732, 7
        %v734 = vsub.s32 0, %v733
        %v735 = vrot.slane %v730, %v734
        %v736 = vlaneseq
        %v737 = vshrl.u32 %v736, 7
        %v738 = vsub.s32 1, %v737
        %v739 = vrot.slane %v730, %v738
        %v742 = vmul.f32 %v724, %v735
        %v743 = vmul.f32 %v728, %v739
        %744 = vrot.lane.b32.xlu0 %v591, 112
        %v745 = vpop.permute.xlu0 %744
        %746 = vrot.lane.b32.xlu0 %v592, 112
        %v747 = vpop.permute.xlu0 %746
        %vm748 = vcmask 916480
        %v749 = vsel %vm748, %v745, %v747
        %v753 = vsel %vm748, %v747, %v745
        %s754 = scalar_lea.vmem [#allocation3], 7
        %v755 = vld [vmem:[%s754] ss:$8 sm:$0x3]
        %v757 = vlaneseq
        %v758 = vshrl.u32 %v757, 7
        %v759 = vsub.s32 0, %v758
        %v760 = vrot.slane %v755, %v759
        %v761 = vlaneseq
        %v762 = vshrl.u32 %v761, 7
        %v763 = vsub.s32 1, %v762
        %v764 = vrot.slane %v755, %v763
        %v767 = vmul.f32 %v749, %v760
        %v768 = vmul.f32 %v753, %v764
        %769 = vrot.lane.b32.xlu0 %v591, 111
        %v770 = vpop.permute.xlu0 %769
        %771 = vrot.lane.b32.xlu0 %v592, 111
        %v772 = vpop.permute.xlu0 %771
        %vm773 = vcmask 908288
        %v774 = vsel %vm773, %v770, %v772
        %v778 = vsel %vm773, %v772, %v770
        %s779 = scalar_lea.vmem [#allocation3], 16
        %v780 = vld [vmem:[%s779] ss:$8 sm:$0x3]
        %v782 = vlaneseq
        %v783 = vshrl.u32 %v782, 7
        %v784 = vsub.s32 0, %v783
        %v785 = vrot.slane %v780, %v784
        %v786 = vlaneseq
        %v787 = vshrl.u32 %v786, 7
        %v788 = vsub.s32 1, %v787
        %v789 = vrot.slane %v780, %v788
        %v792 = vmul.f32 %v774, %v785
        %v793 = vmul.f32 %v778, %v789
        %v794 = vld [vmem:[#allocation6] sm:$0xff]
        %v795 = vld [vmem:[%s3] sm:$0xff]
        %797 = vset.pattern.permute.xlu0 0
        %798 = vperm.xlu0 %797, %v795
        %v799 = vpop.permute.xlu0 %798
        %vm801 = vcmask 588800
        %v803 = vsel %vm801, %v794, 0
        %805 = vmatprep.subr.mxu0 0.0
        %806 = vmatpush1.msra.mxu0 0.0
        %807 = vmatprep.subr.mxu0 0.0
        %808 = vmatpush1.msra.mxu0 0.0
        %809 = vmatprep.subr.mxu0 0.0
        %810 = vmatpush1.msra.mxu0 0.0
        %811 = vmatprep.subr.mxu0 0.0
        %812 = vmatpush1.msra.mxu0 0.0
        %813 = vmatprep.subr.mxu0 0.0
        %814 = vmatpush1.msra.mxu0 0.0
        %815 = vmatprep.subr.mxu0 0.0
        %816 = vmatpush1.msra.mxu0 0.0
        %817 = vmatprep.subr.mxu0 0.0
        %818 = vmatpush1.msra.mxu0 0.0
        %819 = vmatprep.subr.mxu0 %v793
        %820 = vmatpush1.msra.mxu0 %v792
        %821 = vmatprep.subr.mxu0 %v768
        %822 = vmatpush1.msra.mxu0 %v767
        %823 = vmatprep.subr.mxu0 %v743
        %824 = vmatpush1.msra.mxu0 %v742
        %825 = vmatprep.subr.mxu0 %v718
        %826 = vmatpush1.msra.mxu0 %v717
        %827 = vmatprep.subr.mxu0 %v592
        %828 = vmatpush1.msra.mxu0 %v591
        %829 = vmatprep.subr.mxu0 %v693
        %830 = vmatpush1.msra.mxu0 %v692
        %831 = vmatprep.subr.mxu0 %v668
        %832 = vmatpush1.msra.mxu0 %v667
        %833 = vmatprep.subr.mxu0 %v643
        %834 = vmatpush1.msra.mxu0 %v642
        %835 = vmatprep.subr.mxu0 %v618
        %836 = vmatpush1.msra.mxu0 %v617
        %837 = vmatprep.subr.mxu0 0.0
        %838 = vmatpush2.msra.mxu0 0.0
        %839 = vmatprep.subr.mxu0 0.0
        %840 = vmatpush2.msra.mxu0 0.0
        %841 = vmatprep.subr.mxu0 0.0
        %842 = vmatpush2.msra.mxu0 0.0
        %843 = vmatprep.subr.mxu0 0.0
        %844 = vmatpush2.msra.mxu0 0.0
        %845 = vmatprep.subr.mxu0 0.0
        %846 = vmatpush2.msra.mxu0 0.0
        %847 = vmatprep.subr.mxu0 0.0
        %848 = vmatpush2.msra.mxu0 0.0
        %849 = vmatprep.subr.mxu0 0.0
        %850 = vmatpush2.msra.mxu0 0.0
        %851 = vmatprep.subr.mxu0 0.0
        %852 = vmatpush2.msra.mxu0 0.0
        %853 = vmatprep.subr.mxu0 0.0
        %854 = vmatpush2.msra.mxu0 0.0
        %855 = vmatprep.subr.mxu0 0.0
        %856 = vmatpush2.msra.mxu0 0.0
        %857 = vmatprep.subr.mxu0 0.0
        %858 = vmatpush2.msra.mxu0 0.0
        %859 = vmatprep.subr.mxu0 0.0
        %860 = vmatpush2.msra.mxu0 0.0
        %861 = vmatprep.subr.mxu0 0.0
        %862 = vmatpush2.msra.mxu0 0.0
        %863 = vmatprep.subr.mxu0 0.0
        %864 = vmatpush2.msra.mxu0 0.0
        %865 = vmatprep.subr.mxu0 0.0
        %866 = vmatpush2.msra.mxu0 0.0
        %867 = vmatprep.subr.mxu0 0.0
        %868 = vmatpush2.msra.mxu0 0.0
        %869 = vmatprep.mubr.f32.mxu0 0.0
        %870 = vmatmul.mubr.f32.gmra.mxu0 %v803
        %v871 = vpop.f32.mrf.mxu0
        %v872 = vadd.f32 %v799, %v871
        %v873 = vpop.f32.mrf.mxu0
        %v874 = vadd.f32 %v799, %v873
        %875 = vdwg.mxu0
        %v876 = vmax.f32 %v872, 0.0
        %v877 = vmax.f32 %v874, 0.0
        %879 = vrot.lane.b32.xlu0 %v877, 34
        %v880 = vpop.permute.xlu0 %879
        %883 = vrot.lane.b32.xlu0 %v876, 34
        %v884 = vpop.permute.xlu0 %883
        %vm885 = vcmask 277504
        %v886 = vsel %vm885, %v884, %v880
        %v889 = vsel %vm885, %v880, %v884
        %s890 = scalar_lea.vmem [#allocation3], 17
        %v891 = vld [vmem:[%s890] ss:$8 sm:$0x3]
        %v893 = vlaneseq
        %v894 = vshrl.u32 %v893, 7
        %v895 = vsub.s32 0, %v894
        %v896 = vrot.slane %v891, %v895
        %v897 = vlaneseq
        %v898 = vshrl.u32 %v897, 7
        %v899 = vsub.s32 1, %v898
        %v900 = vrot.slane %v891, %v899
        %v903 = vmul.f32 %v889, %v896
        %v904 = vmul.f32 %v886, %v900
        %905 = vrot.lane.b32.xlu0 %v877, 32
        %v906 = vpop.permute.xlu0 %905
        %908 = vrot.lane.b32.xlu0 %v876, 32
        %v909 = vpop.permute.xlu0 %908
        %vm910 = vcmask 261120
        %v911 = vsel %vm910, %v909, %v906
        %v914 = vsel %vm910, %v906, %v909
        %s915 = scalar_lea.vmem [#allocation3], 18
        %v916 = vld [vmem:[%s915] ss:$8 sm:$0x3]
        %v918 = vlaneseq
        %v919 = vshrl.u32 %v918, 7
        %v920 = vsub.s32 0, %v919
        %v921 = vrot.slane %v916, %v920
        %v922 = vlaneseq
        %v923 = vshrl.u32 %v922, 7
        %v924 = vsub.s32 1, %v923
        %v925 = vrot.slane %v916, %v924
        %v928 = vmul.f32 %v914, %v921
        %v929 = vmul.f32 %v911, %v925
        %930 = vrot.lane.b32.xlu0 %v877, 30
        %v931 = vpop.permute.xlu0 %930
        %933 = vrot.lane.b32.xlu0 %v876, 30
        %v934 = vpop.permute.xlu0 %933
        %vm935 = vcmask 244736
        %v936 = vsel %vm935, %v934, %v931
        %v939 = vsel %vm935, %v931, %v934
        %s940 = scalar_lea.vmem [#allocation3], 19
        %v941 = vld [vmem:[%s940] ss:$8 sm:$0x3]
        %v943 = vlaneseq
        %v944 = vshrl.u32 %v943, 7
        %v945 = vsub.s32 0, %v944
        %v946 = vrot.slane %v941, %v945
        %v947 = vlaneseq
        %v948 = vshrl.u32 %v947, 7
        %v949 = vsub.s32 1, %v948
        %v950 = vrot.slane %v941, %v949
        %v953 = vmul.f32 %v939, %v946
        %v954 = vmul.f32 %v936, %v950
        %955 = vrot.lane.b32.xlu0 %v877, 2
        %v956 = vpop.permute.xlu0 %955
        %958 = vrot.lane.b32.xlu0 %v876, 2
        %v959 = vpop.permute.xlu0 %958
        %vm960 = vcmask 15360
        %v961 = vsel %vm960, %v959, %v956
        %v964 = vsel %vm960, %v956, %v959
        %s965 = scalar_lea.vmem [#allocation3], 20
        %v966 = vld [vmem:[%s965] ss:$8 sm:$0x3]
        %v968 = vlaneseq
        %v969 = vshrl.u32 %v968, 7
        %v970 = vsub.s32 0, %v969
        %v971 = vrot.slane %v966, %v970
        %v972 = vlaneseq
        %v973 = vshrl.u32 %v972, 7
        %v974 = vsub.s32 1, %v973
        %v975 = vrot.slane %v966, %v974
        %v978 = vmul.f32 %v964, %v971
        %v979 = vmul.f32 %v961, %v975
        %980 = vrot.lane.b32.xlu0 %v876, 126
        %v981 = vpop.permute.xlu0 %980
        %982 = vrot.lane.b32.xlu0 %v877, 126
        %v983 = vpop.permute.xlu0 %982
        %vm984 = vcmask 1031168
        %v985 = vsel %vm984, %v981, %v983
        %v989 = vsel %vm984, %v983, %v981
        %s990 = scalar_lea.vmem [#allocation3], 22
        %v991 = vld [vmem:[%s990] ss:$8 sm:$0x3]
        %v993 = vlaneseq
        %v994 = vshrl.u32 %v993, 7
        %v995 = vsub.s32 0, %v994
        %v996 = vrot.slane %v991, %v995
        %v997 = vlaneseq
        %v998 = vshrl.u32 %v997, 7
        %v999 = vsub.s32 1, %v998
        %v1000 = vrot.slane %v991, %v999
        %v1003 = vmul.f32 %v985, %v996
        %v1004 = vmul.f32 %v989, %v1000
        %1005 = vrot.lane.b32.xlu0 %v876, 98
        %v1006 = vpop.permute.xlu0 %1005
        %1007 = vrot.lane.b32.xlu0 %v877, 98
        %v1008 = vpop.permute.xlu0 %1007
        %vm1009 = vcmask 801792
        %v1010 = vsel %vm1009, %v1006, %v1008
        %v1014 = vsel %vm1009, %v1008, %v1006
        %s1015 = scalar_lea.vmem [#allocation3], 23
        %v1016 = vld [vmem:[%s1015] ss:$8 sm:$0x3]
        %v1018 = vlaneseq
        %v1019 = vshrl.u32 %v1018, 7
        %v1020 = vsub.s32 0, %v1019
        %v1021 = vrot.slane %v1016, %v1020
        %v1022 = vlaneseq
        %v1023 = vshrl.u32 %v1022, 7
        %v1024 = vsub.s32 1, %v1023
        %v1025 = vrot.slane %v1016, %v1024
        %v1028 = vmul.f32 %v1010, %v1021
        %v1029 = vmul.f32 %v1014, %v1025
        %1030 = vrot.lane.b32.xlu0 %v876, 96
        %v1031 = vpop.permute.xlu0 %1030
        %1032 = vrot.lane.b32.xlu0 %v877, 96
        %v1033 = vpop.permute.xlu0 %1032
        %vm1034 = vcmask 785408
        %v1035 = vsel %vm1034, %v1031, %v1033
        %v1039 = vsel %vm1034, %v1033, %v1031
        %s1040 = scalar_lea.vmem [#allocation3], 32
        %v1041 = vld [vmem:[%s1040] ss:$8 sm:$0x3]
        %v1043 = vlaneseq
        %v1044 = vshrl.u32 %v1043, 7
        %v1045 = vsub.s32 0, %v1044
        %v1046 = vrot.slane %v1041, %v1045
        %v1047 = vlaneseq
        %v1048 = vshrl.u32 %v1047, 7
        %v1049 = vsub.s32 1, %v1048
        %v1050 = vrot.slane %v1041, %v1049
        %v1053 = vmul.f32 %v1035, %v1046
        %v1054 = vmul.f32 %v1039, %v1050
        %1055 = vrot.lane.b32.xlu0 %v876, 94
        %v1056 = vpop.permute.xlu0 %1055
        %1057 = vrot.lane.b32.xlu0 %v877, 94
        %v1058 = vpop.permute.xlu0 %1057
        %vm1059 = vcmask 769024
        %v1060 = vsel %vm1059, %v1056, %v1058
        %v1064 = vsel %vm1059, %v1058, %v1056
        %s1065 = scalar_lea.vmem [#allocation3], 33
        %v1066 = vld [vmem:[%s1065] ss:$8 sm:$0x3]
        %v1068 = vlaneseq
        %v1069 = vshrl.u32 %v1068, 7
        %v1070 = vsub.s32 0, %v1069
        %v1071 = vrot.slane %v1066, %v1070
        %v1072 = vlaneseq
        %v1073 = vshrl.u32 %v1072, 7
        %v1074 = vsub.s32 1, %v1073
        %v1075 = vrot.slane %v1066, %v1074
        %v1078 = vmul.f32 %v1060, %v1071
        %v1079 = vmul.f32 %v1064, %v1075
        %v1080 = vld [vmem:[#allocation8] sm:$0xff]
        %v1081 = vld [vmem:[#allocation8 + $0x8] sm:$0xff]
        %v1082 = vld [vmem:[%s5] sm:$0xff]
        %v1083 = vld [vmem:[%s5 + $0x8] sm:$0xff]
        %1085 = vset.pattern.permute.xlu0 0
        %1086 = vperm.xlu0 %1085, %v1082
        %v1087 = vpop.permute.xlu0 %1086
        %1090 = vset.pattern.permute.xlu0 0
        %1091 = vperm.xlu0 %1090, %v1083
        %v1092 = vpop.permute.xlu0 %1091
        %v1095 = vsel %vm801, %v1080, 0
        %v1098 = vsel %vm801, %v1081, 0
        %1100 = vmatprep.subr.mxu0 0.0
        %1101 = vmatpush1.msra.mxu0 0.0
        %1102 = vmatprep.subr.mxu0 0.0
        %1103 = vmatpush1.msra.mxu0 0.0
        %1104 = vmatprep.subr.mxu0 0.0
        %1105 = vmatpush1.msra.mxu0 0.0
        %1106 = vmatprep.subr.mxu0 0.0
        %1107 = vmatpush1.msra.mxu0 0.0
        %1108 = vmatprep.subr.mxu0 0.0
        %1109 = vmatpush1.msra.mxu0 0.0
        %1110 = vmatprep.subr.mxu0 0.0
        %1111 = vmatpush1.msra.mxu0 0.0
        %1112 = vmatprep.subr.mxu0 0.0
        %1113 = vmatpush1.msra.mxu0 0.0
        %1114 = vmatprep.subr.mxu0 %v1079
        %1115 = vmatpush1.msra.mxu0 %v1078
        %1116 = vmatprep.subr.mxu0 %v1054
        %1117 = vmatpush1.msra.mxu0 %v1053
        %1118 = vmatprep.subr.mxu0 %v1029
        %1119 = vmatpush1.msra.mxu0 %v1028
        %1120 = vmatprep.subr.mxu0 %v1004
        %1121 = vmatpush1.msra.mxu0 %v1003
        %1122 = vmatprep.subr.mxu0 %v877
        %1123 = vmatpush1.msra.mxu0 %v876
        %1124 = vmatprep.subr.mxu0 %v979
        %1125 = vmatpush1.msra.mxu0 %v978
        %1126 = vmatprep.subr.mxu0 %v954
        %1127 = vmatpush1.msra.mxu0 %v953
        %1128 = vmatprep.subr.mxu0 %v929
        %1129 = vmatpush1.msra.mxu0 %v928
        %1130 = vmatprep.subr.mxu0 %v904
        %1131 = vmatpush1.msra.mxu0 %v903
        %1132 = vmatprep.subr.mxu0 0.0
        %1133 = vmatpush2.msra.mxu0 0.0
        %1134 = vmatprep.subr.mxu0 0.0
        %1135 = vmatpush2.msra.mxu0 0.0
        %1136 = vmatprep.subr.mxu0 0.0
        %1137 = vmatpush2.msra.mxu0 0.0
        %1138 = vmatprep.subr.mxu0 0.0
        %1139 = vmatpush2.msra.mxu0 0.0
        %1140 = vmatprep.subr.mxu0 0.0
        %1141 = vmatpush2.msra.mxu0 0.0
        %1142 = vmatprep.subr.mxu0 0.0
        %1143 = vmatpush2.msra.mxu0 0.0
        %1144 = vmatprep.subr.mxu0 0.0
        %1145 = vmatpush2.msra.mxu0 0.0
        %1146 = vmatprep.subr.mxu0 0.0
        %1147 = vmatpush2.msra.mxu0 0.0
        %1148 = vmatprep.subr.mxu0 0.0
        %1149 = vmatpush2.msra.mxu0 0.0
        %1150 = vmatprep.subr.mxu0 0.0
        %1151 = vmatpush2.msra.mxu0 0.0
        %1152 = vmatprep.subr.mxu0 0.0
        %1153 = vmatpush2.msra.mxu0 0.0
        %1154 = vmatprep.subr.mxu0 0.0
        %1155 = vmatpush2.msra.mxu0 0.0
        %1156 = vmatprep.subr.mxu0 0.0
        %1157 = vmatpush2.msra.mxu0 0.0
        %1158 = vmatprep.subr.mxu0 0.0
        %1159 = vmatpush2.msra.mxu0 0.0
        %1160 = vmatprep.subr.mxu0 0.0
        %1161 = vmatpush2.msra.mxu0 0.0
        %1162 = vmatprep.subr.mxu0 0.0
        %1163 = vmatpush2.msra.mxu0 0.0
        %1164 = vmatprep.mubr.f32.mxu0 0.0
        %1165 = vmatmul.mubr.f32.gmra.mxu0 %v1095
        %v1166 = vpop.f32.mrf.mxu0
        %v1167 = vadd.f32 %v1087, %v1166
        %v1168 = vpop.f32.mrf.mxu0
        %v1169 = vadd.f32 %v1087, %v1168
        %1170 = vmatprep.mubr.f32.mxu0 0.0
        %1171 = vmatmul.mubr.f32.gmra.mxu0 %v1098
        %v1172 = vpop.f32.mrf.mxu0
        %v1173 = vadd.f32 %v1092, %v1172
        %v1174 = vpop.f32.mrf.mxu0
        %v1175 = vadd.f32 %v1092, %v1174
        %1176 = vdwg.mxu0
        %v1177 = vmax.f32 %v1167, 0.0
        %v1178 = vmax.f32 %v1169, 0.0
        %v1179 = vmax.f32 %v1173, 0.0
        %v1180 = vmax.f32 %v1175, 0.0
        %1183 = vrot.lane.b32.xlu0 %v1178, 68
        %v1184 = vpop.permute.xlu0 %1183
        %1185 = vrot.lane.b32.xlu0 %v1180, 68
        %v1186 = vpop.permute.xlu0 %1185
        %1191 = vrot.lane.b32.xlu0 %v1177, 68
        %v1192 = vpop.permute.xlu0 %1191
        %1193 = vrot.lane.b32.xlu0 %v1179, 68
        %v1194 = vpop.permute.xlu0 %1193
        %vm1195 = vcmask 556032
        %v1196 = vsel %vm1195, %v1192, %v1184
        %v1197 = vsel %vm1195, %v1194, %v1186
        %v1202 = vsel %vm1195, %v1184, %v1192
        %v1203 = vsel %vm1195, %v1186, %v1194
        %s1204 = scalar_lea.vmem [#allocation3], 34
        %v1205 = vld [vmem:[%s1204] ss:$8 sm:$0x3]
        %v1207 = vlaneseq
        %v1208 = vshrl.u32 %v1207, 7
        %v1209 = vsub.s32 0, %v1208
        %v1210 = vrot.slane %v1205, %v1209
        %v1211 = vlaneseq
        %v1212 = vshrl.u32 %v1211, 7
        %v1213 = vsub.s32 1, %v1212
        %v1214 = vrot.slane %v1205, %v1213
        %v1217 = vmul.f32 %v1202, %v1210
        %v1218 = vmul.f32 %v1196, %v1214
        %v1219 = vmul.f32 %v1203, %v1210
        %v1220 = vmul.f32 %v1197, %v1214
        %1221 = vrot.lane.b32.xlu0 %v1178, 64
        %v1222 = vpop.permute.xlu0 %1221
        %1223 = vrot.lane.b32.xlu0 %v1180, 64
        %v1224 = vpop.permute.xlu0 %1223
        %1227 = vrot.lane.b32.xlu0 %v1177, 64
        %v1228 = vpop.permute.xlu0 %1227
        %1229 = vrot.lane.b32.xlu0 %v1179, 64
        %v1230 = vpop.permute.xlu0 %1229
        %vm1231 = vcmask 523264
        %v1232 = vsel %vm1231, %v1228, %v1222
        %v1233 = vsel %vm1231, %v1230, %v1224
        %v1238 = vsel %vm1231, %v1222, %v1228
        %v1239 = vsel %vm1231, %v1224, %v1230
        %s1240 = scalar_lea.vmem [#allocation3], 35
        %v1241 = vld [vmem:[%s1240] ss:$8 sm:$0x3]
        %v1243 = vlaneseq
        %v1244 = vshrl.u32 %v1243, 7
        %v1245 = vsub.s32 0, %v1244
        %v1246 = vrot.slane %v1241, %v1245
        %v1247 = vlaneseq
        %v1248 = vshrl.u32 %v1247, 7
        %v1249 = vsub.s32 1, %v1248
        %v1250 = vrot.slane %v1241, %v1249
        %v1253 = vmul.f32 %v1238, %v1246
        %v1254 = vmul.f32 %v1232, %v1250
        %v1255 = vmul.f32 %v1239, %v1246
        %v1256 = vmul.f32 %v1233, %v1250
        %1257 = vrot.lane.b32.xlu0 %v1178, 60
        %v1258 = vpop.permute.xlu0 %1257
        %1259 = vrot.lane.b32.xlu0 %v1180, 60
        %v1260 = vpop.permute.xlu0 %1259
        %1263 = vrot.lane.b32.xlu0 %v1177, 60
        %v1264 = vpop.permute.xlu0 %1263
        %1265 = vrot.lane.b32.xlu0 %v1179, 60
        %v1266 = vpop.permute.xlu0 %1265
        %vm1267 = vcmask 490496
        %v1268 = vsel %vm1267, %v1264, %v1258
        %v1269 = vsel %vm1267, %v1266, %v1260
        %v1274 = vsel %vm1267, %v1258, %v1264
        %v1275 = vsel %vm1267, %v1260, %v1266
        %s1276 = scalar_lea.vmem [#allocation3], 36
        %v1277 = vld [vmem:[%s1276] ss:$8 sm:$0x3]
        %v1279 = vlaneseq
        %v1280 = vshrl.u32 %v1279, 7
        %v1281 = vsub.s32 0, %v1280
        %v1282 = vrot.slane %v1277, %v1281
        %v1283 = vlaneseq
        %v1284 = vshrl.u32 %v1283, 7
        %v1285 = vsub.s32 1, %v1284
        %v1286 = vrot.slane %v1277, %v1285
        %v1289 = vmul.f32 %v1274, %v1282
        %v1290 = vmul.f32 %v1268, %v1286
        %v1291 = vmul.f32 %v1275, %v1282
        %v1292 = vmul.f32 %v1269, %v1286
        %1293 = vrot.lane.b32.xlu0 %v1178, 4
        %v1294 = vpop.permute.xlu0 %1293
        %1295 = vrot.lane.b32.xlu0 %v1180, 4
        %v1296 = vpop.permute.xlu0 %1295
        %1299 = vrot.lane.b32.xlu0 %v1177, 4
        %v1300 = vpop.permute.xlu0 %1299
        %1301 = vrot.lane.b32.xlu0 %v1179, 4
        %v1302 = vpop.permute.xlu0 %1301
        %vm1303 = vcmask 31744
        %v1304 = vsel %vm1303, %v1300, %v1294
        %v1305 = vsel %vm1303, %v1302, %v1296
        %v1310 = vsel %vm1303, %v1294, %v1300
        %v1311 = vsel %vm1303, %v1296, %v1302
        %s1312 = scalar_lea.vmem [#allocation3], 37
        %v1313 = vld [vmem:[%s1312] ss:$8 sm:$0x3]
        %v1315 = vlaneseq
        %v1316 = vshrl.u32 %v1315, 7
        %v1317 = vsub.s32 0, %v1316
        %v1318 = vrot.slane %v1313, %v1317
        %v1319 = vlaneseq
        %v1320 = vshrl.u32 %v1319, 7
        %v1321 = vsub.s32 1, %v1320
        %v1322 = vrot.slane %v1313, %v1321
        %v1325 = vmul.f32 %v1310, %v1318
        %v1326 = vmul.f32 %v1304, %v1322
        %v1327 = vmul.f32 %v1311, %v1318
        %v1328 = vmul.f32 %v1305, %v1322
        %1329 = vrot.lane.b32.xlu0 %v1177, 124
        %v1330 = vpop.permute.xlu0 %1329
        %1331 = vrot.lane.b32.xlu0 %v1178, 124
        %v1332 = vpop.permute.xlu0 %1331
        %1333 = vrot.lane.b32.xlu0 %v1179, 124
        %v1334 = vpop.permute.xlu0 %1333
        %1335 = vrot.lane.b32.xlu0 %v1180, 124
        %v1336 = vpop.permute.xlu0 %1335
        %vm1337 = vcmask 1014784
        %v1338 = vsel %vm1337, %v1330, %v1332
        %v1339 = vsel %vm1337, %v1334, %v1336
        %v1346 = vsel %vm1337, %v1332, %v1330
        %v1347 = vsel %vm1337, %v1336, %v1334
        %s1348 = scalar_lea.vmem [#allocation3], 39
        %v1349 = vld [vmem:[%s1348] ss:$8 sm:$0x3]
        %v1351 = vlaneseq
        %v1352 = vshrl.u32 %v1351, 7
        %v1353 = vsub.s32 0, %v1352
        %v1354 = vrot.slane %v1349, %v1353
        %v1355 = vlaneseq
        %v1356 = vshrl.u32 %v1355, 7
        %v1357 = vsub.s32 1, %v1356
        %v1358 = vrot.slane %v1349, %v1357
        %v1361 = vmul.f32 %v1338, %v1354
        %v1362 = vmul.f32 %v1346, %v1358
        %v1363 = vmul.f32 %v1339, %v1354
        %v1364 = vmul.f32 %v1347, %v1358
        %s1365 = scalar_lea.vmem [#allocation3], 48
        %v1366 = vld [vmem:[%s1365] ss:$8 sm:$0x3]
        %v1368 = vlaneseq
        %v1369 = vshrl.u32 %v1368, 7
        %v1370 = vsub.s32 0, %v1369
        %v1371 = vrot.slane %v1366, %v1370
        %v1372 = vlaneseq
        %v1373 = vshrl.u32 %v1372, 7
        %v1374 = vsub.s32 1, %v1373
        %v1375 = vrot.slane %v1366, %v1374
        %v1378 = vmul.f32 %v1196, %v1371
        %v1379 = vmul.f32 %v1202, %v1375
        %v1380 = vmul.f32 %v1197, %v1371
        %v1381 = vmul.f32 %v1203, %v1375
        %s1382 = scalar_lea.vmem [#allocation3], 49
        %v1383 = vld [vmem:[%s1382] ss:$8 sm:$0x3]
        %v1385 = vlaneseq
        %v1386 = vshrl.u32 %v1385, 7
        %v1387 = vsub.s32 0, %v1386
        %v1388 = vrot.slane %v1383, %v1387
        %v1389 = vlaneseq
        %v1390 = vshrl.u32 %v1389, 7
        %v1391 = vsub.s32 1, %v1390
        %v1392 = vrot.slane %v1383, %v1391
        %v1395 = vmul.f32 %v1232, %v1388
        %v1396 = vmul.f32 %v1238, %v1392
        %v1397 = vmul.f32 %v1233, %v1388
        %v1398 = vmul.f32 %v1239, %v1392
        %s1399 = scalar_lea.vmem [#allocation3], 50
        %v1400 = vld [vmem:[%s1399] ss:$8 sm:$0x3]
        %v1402 = vlaneseq
        %v1403 = vshrl.u32 %v1402, 7
        %v1404 = vsub.s32 0, %v1403
        %v1405 = vrot.slane %v1400, %v1404
        %v1406 = vlaneseq
        %v1407 = vshrl.u32 %v1406, 7
        %v1408 = vsub.s32 1, %v1407
        %v1409 = vrot.slane %v1400, %v1408
        %v1412 = vmul.f32 %v1268, %v1405
        %v1413 = vmul.f32 %v1274, %v1409
        %v1414 = vmul.f32 %v1269, %v1405
        %v1415 = vmul.f32 %v1275, %v1409
        %v1416 = vld [vmem:[%s6] sm:$0xff]
        %v1417 = vld [vmem:[%s6 + $0x8] sm:$0xff]
        %v1418 = vld [vmem:[%s6 + $0x10] sm:$0xff]
        %v1419 = vld [vmem:[%s6 + $0x18] sm:$0xff]
        %v1420 = vld [vmem:[%s6 + $0x20] sm:$0xff]
        %v1421 = vld [vmem:[%s6 + $0x28] sm:$0xff]
        %v1422 = vld [vmem:[%s6 + $0x30] sm:$0xff]
        %v1423 = vld [vmem:[%s6 + $0x38] sm:$0xff]
        %v1424 = vld [vmem:[%s7] sm:$0xff]
        %v1425 = vld [vmem:[%s7 + $0x8] sm:$0xff]
        %v1426 = vld [vmem:[%s7 + $0x10] sm:$0xff]
        %v1427 = vld [vmem:[%s7 + $0x18] sm:$0xff]
        %1429 = vset.pattern.permute.xlu0 0
        %1430 = vperm.xlu0 %1429, %v1424
        %v1431 = vpop.permute.xlu0 %1430
        %1434 = vset.pattern.permute.xlu0 0
        %1435 = vperm.xlu0 %1434, %v1425
        %v1436 = vpop.permute.xlu0 %1435
        %1439 = vset.pattern.permute.xlu0 0
        %1440 = vperm.xlu0 %1439, %v1426
        %v1441 = vpop.permute.xlu0 %1440
        %1444 = vset.pattern.permute.xlu0 0
        %1445 = vperm.xlu0 %1444, %v1427
        %v1446 = vpop.permute.xlu0 %1445
        %v1449 = vsel %vm624, %v1417, 0
        %v1452 = vsel %vm624, %v1419, 0
        %v1455 = vsel %vm624, %v1421, 0
        %v1458 = vsel %vm624, %v1423, 0
        %1460 = vmatprep.subr.mxu0 %v1398
        %1461 = vmatpush1.msra.mxu0 %v1397
        %1462 = vmatprep.subr.mxu0 %v1396
        %1463 = vmatpush1.msra.mxu0 %v1395
        %1464 = vmatprep.subr.mxu0 %v1381
        %1465 = vmatpush1.msra.mxu0 %v1380
        %1466 = vmatprep.subr.mxu0 %v1379
        %1467 = vmatpush1.msra.mxu0 %v1378
        %1468 = vmatprep.subr.mxu0 %v1364
        %1469 = vmatpush1.msra.mxu0 %v1363
        %1470 = vmatprep.subr.mxu0 %v1362
        %1471 = vmatpush1.msra.mxu0 %v1361
        %1472 = vmatprep.subr.mxu0 %v1180
        %1473 = vmatpush1.msra.mxu0 %v1179
        %1474 = vmatprep.subr.mxu0 %v1178
        %1475 = vmatpush1.msra.mxu0 %v1177
        %1476 = vmatprep.subr.mxu0 %v1328
        %1477 = vmatpush1.msra.mxu0 %v1327
        %1478 = vmatprep.subr.mxu0 %v1326
        %1479 = vmatpush1.msra.mxu0 %v1325
        %1480 = vmatprep.subr.mxu0 %v1292
        %1481 = vmatpush1.msra.mxu0 %v1291
        %1482 = vmatprep.subr.mxu0 %v1290
        %1483 = vmatpush1.msra.mxu0 %v1289
        %1484 = vmatprep.subr.mxu0 %v1256
        %1485 = vmatpush1.msra.mxu0 %v1255
        %1486 = vmatprep.subr.mxu0 %v1254
        %1487 = vmatpush1.msra.mxu0 %v1253
        %1488 = vmatprep.subr.mxu0 %v1220
        %1489 = vmatpush1.msra.mxu0 %v1219
        %1490 = vmatprep.subr.mxu0 %v1218
        %1491 = vmatpush1.msra.mxu0 %v1217
        %1492 = vmatprep.subr.mxu0 0.0
        %1493 = vmatpush2.msra.mxu0 0.0
        %1494 = vmatprep.subr.mxu0 0.0
        %1495 = vmatpush2.msra.mxu0 0.0
        %1496 = vmatprep.subr.mxu0 0.0
        %1497 = vmatpush2.msra.mxu0 0.0
        %1498 = vmatprep.subr.mxu0 0.0
        %1499 = vmatpush2.msra.mxu0 0.0
        %1500 = vmatprep.subr.mxu0 0.0
        %1501 = vmatpush2.msra.mxu0 0.0
        %1502 = vmatprep.subr.mxu0 0.0
        %1503 = vmatpush2.msra.mxu0 0.0
        %1504 = vmatprep.subr.mxu0 0.0
        %1505 = vmatpush2.msra.mxu0 0.0
        %1506 = vmatprep.subr.mxu0 0.0
        %1507 = vmatpush2.msra.mxu0 0.0
        %1508 = vmatprep.subr.mxu0 0.0
        %1509 = vmatpush2.msra.mxu0 0.0
        %1510 = vmatprep.subr.mxu0 0.0
        %1511 = vmatpush2.msra.mxu0 0.0
        %1512 = vmatprep.subr.mxu0 0.0
        %1513 = vmatpush2.msra.mxu0 0.0
        %1514 = vmatprep.subr.mxu0 0.0
        %1515 = vmatpush2.msra.mxu0 0.0
        %1516 = vmatprep.subr.mxu0 0.0
        %1517 = vmatpush2.msra.mxu0 0.0
        %1518 = vmatprep.subr.mxu0 0.0
        %1519 = vmatpush2.msra.mxu0 0.0
        %1520 = vmatprep.subr.mxu0 %v1415
        %1521 = vmatpush2.msra.mxu0 %v1414
        %1522 = vmatprep.subr.mxu0 %v1413
        %1523 = vmatpush2.msra.mxu0 %v1412
        %1524 = vmatprep.mubr.f32.mxu0 %v1449
        %1525 = vmatmul.mubr.f32.gmra.mxu0 %v1416
        %v1526 = vpop.f32.mrf.mxu0
        %v1527 = vadd.f32 %v1431, %v1526
        %v1528 = vpop.f32.mrf.mxu0
        %v1529 = vadd.f32 %v1431, %v1528
        %1530 = vmatprep.mubr.f32.mxu0 %v1452
        %1531 = vmatmul.mubr.f32.gmra.mxu0 %v1418
        %v1532 = vpop.f32.mrf.mxu0
        %v1533 = vadd.f32 %v1436, %v1532
        %v1534 = vpop.f32.mrf.mxu0
        %v1535 = vadd.f32 %v1436, %v1534
        %1536 = vmatprep.mubr.f32.mxu0 %v1455
        %1537 = vmatmul.mubr.f32.gmra.mxu0 %v1420
        %v1538 = vpop.f32.mrf.mxu0
        %v1539 = vadd.f32 %v1441, %v1538
        %v1540 = vpop.f32.mrf.mxu0
        %v1541 = vadd.f32 %v1441, %v1540
        %1542 = vmatprep.mubr.f32.mxu0 %v1458
        %1543 = vmatmul.mubr.f32.gmra.mxu0 %v1422
        %v1544 = vpop.f32.mrf.mxu0
        %v1545 = vadd.f32 %v1446, %v1544
        %v1546 = vpop.f32.mrf.mxu0
        %v1547 = vadd.f32 %v1446, %v1546
        %1548 = vdwg.mxu0
        %v1549 = vmax.f32 %v1527, 0.0
        %v1550 = vmax.f32 %v1529, 0.0
        %v1551 = vmax.f32 %v1533, 0.0
        %v1552 = vmax.f32 %v1535, 0.0
        %v1553 = vmax.f32 %v1539, 0.0
        %v1554 = vmax.f32 %v1541, 0.0
        %v1555 = vmax.f32 %v1545, 0.0
        %v1556 = vmax.f32 %v1547, 0.0
        %1561 = vrot.lane.b32.xlu0 %v1550, 68
        %v1562 = vpop.permute.xlu0 %1561
        %1563 = vrot.lane.b32.xlu0 %v1552, 68
        %v1564 = vpop.permute.xlu0 %1563
        %1565 = vrot.lane.b32.xlu0 %v1554, 68
        %v1566 = vpop.permute.xlu0 %1565
        %1567 = vrot.lane.b32.xlu0 %v1556, 68
        %v1568 = vpop.permute.xlu0 %1567
        %1577 = vrot.lane.b32.xlu0 %v1549, 68
        %v1578 = vpop.permute.xlu0 %1577
        %1579 = vrot.lane.b32.xlu0 %v1551, 68
        %v1580 = vpop.permute.xlu0 %1579
        %1581 = vrot.lane.b32.xlu0 %v1553, 68
        %v1582 = vpop.permute.xlu0 %1581
        %1583 = vrot.lane.b32.xlu0 %v1555, 68
        %v1584 = vpop.permute.xlu0 %1583
        %v1585 = vsel %vm1195, %v1578, %v1562
        %v1586 = vsel %vm1195, %v1580, %v1564
        %v1587 = vsel %vm1195, %v1582, %v1566
        %v1588 = vsel %vm1195, %v1584, %v1568
        %v1597 = vsel %vm1195, %v1562, %v1578
        %v1598 = vsel %vm1195, %v1564, %v1580
        %v1599 = vsel %vm1195, %v1566, %v1582
        %v1600 = vsel %vm1195, %v1568, %v1584
        %s1601 = scalar_lea.vmem [#allocation3], 51
        %v1602 = vld [vmem:[%s1601] ss:$8 sm:$0x3]
        %v1604 = vlaneseq
        %v1605 = vshrl.u32 %v1604, 7
        %v1606 = vsub.s32 0, %v1605
        %v1607 = vrot.slane %v1602, %v1606
        %v1608 = vlaneseq
        %v1609 = vshrl.u32 %v1608, 7
        %v1610 = vsub.s32 1, %v1609
        %v1611 = vrot.slane %v1602, %v1610
        %v1614 = vmul.f32 %v1597, %v1607
        %v1615 = vmul.f32 %v1585, %v1611
        %v1616 = vmul.f32 %v1598, %v1607
        %v1617 = vmul.f32 %v1586, %v1611
        %v1618 = vmul.f32 %v1599, %v1607
        %v1619 = vmul.f32 %v1587, %v1611
        %v1620 = vmul.f32 %v1600, %v1607
        %v1621 = vmul.f32 %v1588, %v1611
        %1622 = vrot.lane.b32.xlu0 %v1550, 64
        %v1623 = vpop.permute.xlu0 %1622
        %1624 = vrot.lane.b32.xlu0 %v1552, 64
        %v1625 = vpop.permute.xlu0 %1624
        %1626 = vrot.lane.b32.xlu0 %v1554, 64
        %v1627 = vpop.permute.xlu0 %1626
        %1628 = vrot.lane.b32.xlu0 %v1556, 64
        %v1629 = vpop.permute.xlu0 %1628
        %1634 = vrot.lane.b32.xlu0 %v1549, 64
        %v1635 = vpop.permute.xlu0 %1634
        %1636 = vrot.lane.b32.xlu0 %v1551, 64
        %v1637 = vpop.permute.xlu0 %1636
        %1638 = vrot.lane.b32.xlu0 %v1553, 64
        %v1639 = vpop.permute.xlu0 %1638
        %1640 = vrot.lane.b32.xlu0 %v1555, 64
        %v1641 = vpop.permute.xlu0 %1640
        %v1642 = vsel %vm1231, %v1635, %v1623
        %v1643 = vsel %vm1231, %v1637, %v1625
        %v1644 = vsel %vm1231, %v1639, %v1627
        %v1645 = vsel %vm1231, %v1641, %v1629
        %v1654 = vsel %vm1231, %v1623, %v1635
        %v1655 = vsel %vm1231, %v1625, %v1637
        %v1656 = vsel %vm1231, %v1627, %v1639
        %v1657 = vsel %vm1231, %v1629, %v1641
        %s1658 = scalar_lea.vmem [#allocation3], 52
        %v1659 = vld [vmem:[%s1658] ss:$8 sm:$0x3]
        %v1661 = vlaneseq
        %v1662 = vshrl.u32 %v1661, 7
        %v1663 = vsub.s32 0, %v1662
        %v1664 = vrot.slane %v1659, %v1663
        %v1665 = vlaneseq
        %v1666 = vshrl.u32 %v1665, 7
        %v1667 = vsub.s32 1, %v1666
        %v1668 = vrot.slane %v1659, %v1667
        %v1671 = vmul.f32 %v1654, %v1664
        %v1672 = vmul.f32 %v1642, %v1668
        %v1673 = vmul.f32 %v1655, %v1664
        %v1674 = vmul.f32 %v1643, %v1668
        %v1675 = vmul.f32 %v1656, %v1664
        %v1676 = vmul.f32 %v1644, %v1668
        %v1677 = vmul.f32 %v1657, %v1664
        %v1678 = vmul.f32 %v1645, %v1668
        %1679 = vrot.lane.b32.xlu0 %v1550, 60
        %v1680 = vpop.permute.xlu0 %1679
        %1681 = vrot.lane.b32.xlu0 %v1552, 60
        %v1682 = vpop.permute.xlu0 %1681
        %1683 = vrot.lane.b32.xlu0 %v1554, 60
        %v1684 = vpop.permute.xlu0 %1683
        %1685 = vrot.lane.b32.xlu0 %v1556, 60
        %v1686 = vpop.permute.xlu0 %1685
        %1691 = vrot.lane.b32.xlu0 %v1549, 60
        %v1692 = vpop.permute.xlu0 %1691
        %1693 = vrot.lane.b32.xlu0 %v1551, 60
        %v1694 = vpop.permute.xlu0 %1693
        %1695 = vrot.lane.b32.xlu0 %v1553, 60
        %v1696 = vpop.permute.xlu0 %1695
        %1697 = vrot.lane.b32.xlu0 %v1555, 60
        %v1698 = vpop.permute.xlu0 %1697
        %v1699 = vsel %vm1267, %v1692, %v1680
        %v1700 = vsel %vm1267, %v1694, %v1682
        %v1701 = vsel %vm1267, %v1696, %v1684
        %v1702 = vsel %vm1267, %v1698, %v1686
        %v1711 = vsel %vm1267, %v1680, %v1692
        %v1712 = vsel %vm1267, %v1682, %v1694
        %v1713 = vsel %vm1267, %v1684, %v1696
        %v1714 = vsel %vm1267, %v1686, %v1698
        %s1715 = scalar_lea.vmem [#allocation3], 53
        %v1716 = vld [vmem:[%s1715] ss:$8 sm:$0x3]
        %v1718 = vlaneseq
        %v1719 = vshrl.u32 %v1718, 7
        %v1720 = vsub.s32 0, %v1719
        %v1721 = vrot.slane %v1716, %v1720
        %v1722 = vlaneseq
        %v1723 = vshrl.u32 %v1722, 7
        %v1724 = vsub.s32 1, %v1723
        %v1725 = vrot.slane %v1716, %v1724
        %v1728 = vmul.f32 %v1711, %v1721
        %v1729 = vmul.f32 %v1699, %v1725
        %v1730 = vmul.f32 %v1712, %v1721
        %v1731 = vmul.f32 %v1700, %v1725
        %v1732 = vmul.f32 %v1713, %v1721
        %v1733 = vmul.f32 %v1701, %v1725
        %v1734 = vmul.f32 %v1714, %v1721
        %v1735 = vmul.f32 %v1702, %v1725
        %1736 = vrot.lane.b32.xlu0 %v1550, 4
        %v1737 = vpop.permute.xlu0 %1736
        %1738 = vrot.lane.b32.xlu0 %v1552, 4
        %v1739 = vpop.permute.xlu0 %1738
        %1740 = vrot.lane.b32.xlu0 %v1554, 4
        %v1741 = vpop.permute.xlu0 %1740
        %1742 = vrot.lane.b32.xlu0 %v1556, 4
        %v1743 = vpop.permute.xlu0 %1742
        %1748 = vrot.lane.b32.xlu0 %v1549, 4
        %v1749 = vpop.permute.xlu0 %1748
        %1750 = vrot.lane.b32.xlu0 %v1551, 4
        %v1751 = vpop.permute.xlu0 %1750
        %1752 = vrot.lane.b32.xlu0 %v1553, 4
        %v1753 = vpop.permute.xlu0 %1752
        %1754 = vrot.lane.b32.xlu0 %v1555, 4
        %v1755 = vpop.permute.xlu0 %1754
        %v1756 = vsel %vm1303, %v1749, %v1737
        %v1757 = vsel %vm1303, %v1751, %v1739
        %v1758 = vsel %vm1303, %v1753, %v1741
        %v1759 = vsel %vm1303, %v1755, %v1743
        %v1768 = vsel %vm1303, %v1737, %v1749
        %v1769 = vsel %vm1303, %v1739, %v1751
        %v1770 = vsel %vm1303, %v1741, %v1753
        %v1771 = vsel %vm1303, %v1743, %v1755
        %s1772 = scalar_lea.vmem [#allocation3], 54
        %v1773 = vld [vmem:[%s1772] ss:$8 sm:$0x3]
        %v1775 = vlaneseq
        %v1776 = vshrl.u32 %v1775, 7
        %v1777 = vsub.s32 0, %v1776
        %v1778 = vrot.slane %v1773, %v1777
        %v1779 = vlaneseq
        %v1780 = vshrl.u32 %v1779, 7
        %v1781 = vsub.s32 1, %v1780
        %v1782 = vrot.slane %v1773, %v1781
        %v1785 = vmul.f32 %v1768, %v1778
        %v1786 = vmul.f32 %v1756, %v1782
        %v1787 = vmul.f32 %v1769, %v1778
        %v1788 = vmul.f32 %v1757, %v1782
        %v1789 = vmul.f32 %v1770, %v1778
        %v1790 = vmul.f32 %v1758, %v1782
        %v1791 = vmul.f32 %v1771, %v1778
        %v1792 = vmul.f32 %v1759, %v1782
        %1793 = vrot.lane.b32.xlu0 %v1549, 124
        %v1794 = vpop.permute.xlu0 %1793
        %1795 = vrot.lane.b32.xlu0 %v1550, 124
        %v1796 = vpop.permute.xlu0 %1795
        %1797 = vrot.lane.b32.xlu0 %v1551, 124
        %v1798 = vpop.permute.xlu0 %1797
        %1799 = vrot.lane.b32.xlu0 %v1552, 124
        %v1800 = vpop.permute.xlu0 %1799
        %1801 = vrot.lane.b32.xlu0 %v1553, 124
        %v1802 = vpop.permute.xlu0 %1801
        %1803 = vrot.lane.b32.xlu0 %v1554, 124
        %v1804 = vpop.permute.xlu0 %1803
        %1805 = vrot.lane.b32.xlu0 %v1555, 124
        %v1806 = vpop.permute.xlu0 %1805
        %1807 = vrot.lane.b32.xlu0 %v1556, 124
        %v1808 = vpop.permute.xlu0 %1807
        %v1809 = vsel %vm1337, %v1794, %v1796
        %v1810 = vsel %vm1337, %v1798, %v1800
        %v1811 = vsel %vm1337, %v1802, %v1804
        %v1812 = vsel %vm1337, %v1806, %v1808
        %v1825 = vsel %vm1337, %v1796, %v1794
        %v1826 = vsel %vm1337, %v1800, %v1798
        %v1827 = vsel %vm1337, %v1804, %v1802
        %v1828 = vsel %vm1337, %v1808, %v1806
        %s1829 = scalar_lea.vmem [#allocation3], 64
        %v1830 = vld [vmem:[%s1829] ss:$8 sm:$0x3]
        %v1832 = vlaneseq
        %v1833 = vshrl.u32 %v1832, 7
        %v1834 = vsub.s32 0, %v1833
        %v1835 = vrot.slane %v1830, %v1834
        %v1836 = vlaneseq
        %v1837 = vshrl.u32 %v1836, 7
        %v1838 = vsub.s32 1, %v1837
        %v1839 = vrot.slane %v1830, %v1838
        %v1842 = vmul.f32 %v1809, %v1835
        %v1843 = vmul.f32 %v1825, %v1839
        %v1844 = vmul.f32 %v1810, %v1835
        %v1845 = vmul.f32 %v1826, %v1839
        %v1846 = vmul.f32 %v1811, %v1835
        %v1847 = vmul.f32 %v1827, %v1839
        %v1848 = vmul.f32 %v1812, %v1835
        %v1849 = vmul.f32 %v1828, %v1839
        %s1850 = scalar_lea.vmem [#allocation3], 65
        %v1851 = vld [vmem:[%s1850] ss:$8 sm:$0x3]
        %v1853 = vlaneseq
        %v1854 = vshrl.u32 %v1853, 7
        %v1855 = vsub.s32 0, %v1854
        %v1856 = vrot.slane %v1851, %v1855
        %v1857 = vlaneseq
        %v1858 = vshrl.u32 %v1857, 7
        %v1859 = vsub.s32 1, %v1858
        %v1860 = vrot.slane %v1851, %v1859
        %v1863 = vmul.f32 %v1585, %v1856
        %v1864 = vmul.f32 %v1597, %v1860
        %v1865 = vmul.f32 %v1586, %v1856
        %v1866 = vmul.f32 %v1598, %v1860
        %v1867 = vmul.f32 %v1587, %v1856
        %v1868 = vmul.f32 %v1599, %v1860
        %v1869 = vmul.f32 %v1588, %v1856
        %v1870 = vmul.f32 %v1600, %v1860
        %s1871 = scalar_lea.vmem [#allocation3], 66
        %v1872 = vld [vmem:[%s1871] ss:$8 sm:$0x3]
        %v1874 = vlaneseq
        %v1875 = vshrl.u32 %v1874, 7
        %v1876 = vsub.s32 0, %v1875
        %v1877 = vrot.slane %v1872, %v1876
        %v1878 = vlaneseq
        %v1879 = vshrl.u32 %v1878, 7
        %v1880 = vsub.s32 1, %v1879
        %v1881 = vrot.slane %v1872, %v1880
        %v1884 = vmul.f32 %v1642, %v1877
        %v1885 = vmul.f32 %v1654, %v1881
        %v1886 = vmul.f32 %v1643, %v1877
        %v1887 = vmul.f32 %v1655, %v1881
        %v1888 = vmul.f32 %v1644, %v1877
        %v1889 = vmul.f32 %v1656, %v1881
        %v1890 = vmul.f32 %v1645, %v1877
        %v1891 = vmul.f32 %v1657, %v1881
        %s1892 = scalar_lea.vmem [#allocation3], 67
        %v1893 = vld [vmem:[%s1892] ss:$8 sm:$0x3]
        %v1895 = vlaneseq
        %v1896 = vshrl.u32 %v1895, 7
        %v1897 = vsub.s32 0, %v1896
        %v1898 = vrot.slane %v1893, %v1897
        %v1899 = vlaneseq
        %v1900 = vshrl.u32 %v1899, 7
        %v1901 = vsub.s32 1, %v1900
        %v1902 = vrot.slane %v1893, %v1901
        %v1905 = vmul.f32 %v1699, %v1898
        %v1906 = vmul.f32 %v1711, %v1902
        %v1907 = vmul.f32 %v1700, %v1898
        %v1908 = vmul.f32 %v1712, %v1902
        %v1909 = vmul.f32 %v1701, %v1898
        %v1910 = vmul.f32 %v1713, %v1902
        %v1911 = vmul.f32 %v1702, %v1898
        %v1912 = vmul.f32 %v1714, %v1902
        %v1913 = vld [vmem:[#allocation9] sm:$0xff]
        %v1914 = vld [vmem:[#allocation9 + $0x8] sm:$0xff]
        %v1915 = vld [vmem:[#allocation9 + $0x10] sm:$0xff]
        %v1916 = vld [vmem:[#allocation9 + $0x18] sm:$0xff]
        %v1917 = vld [vmem:[#allocation9 + $0x20] sm:$0xff]
        %v1918 = vld [vmem:[#allocation9 + $0x28] sm:$0xff]
        %v1919 = vld [vmem:[%s9] sm:$0xff]
        %v1920 = vld [vmem:[%s9 + $0x8] sm:$0xff]
        %1922 = vset.pattern.permute.xlu0 0
        %1923 = vperm.xlu0 %1922, %v1919
        %v1924 = vpop.permute.xlu0 %1923
        %1927 = vset.pattern.permute.xlu0 0
        %1928 = vperm.xlu0 %1927, %v1920
        %v1929 = vpop.permute.xlu0 %1928
        %v1932 = vsel %vm910, %v1915, 0
        %v1935 = vsel %vm910, %v1918, 0
        %1937 = vmatprep.subr.mxu0 %v1792
        %1938 = vmatpush1.msra.mxu0 %v1791
        %1939 = vmatprep.subr.mxu0 %v1790
        %1940 = vmatpush1.msra.mxu0 %v1789
        %1941 = vmatprep.subr.mxu0 %v1788
        %1942 = vmatpush1.msra.mxu0 %v1787
        %1943 = vmatprep.subr.mxu0 %v1786
        %1944 = vmatpush1.msra.mxu0 %v1785
        %1945 = vmatprep.subr.mxu0 %v1735
        %1946 = vmatpush1.msra.mxu0 %v1734
        %1947 = vmatprep.subr.mxu0 %v1733
        %1948 = vmatpush1.msra.mxu0 %v1732
        %1949 = vmatprep.subr.mxu0 %v1731
        %1950 = vmatpush1.msra.mxu0 %v1730
        %1951 = vmatprep.subr.mxu0 %v1729
        %1952 = vmatpush1.msra.mxu0 %v1728
        %1953 = vmatprep.subr.mxu0 %v1678
        %1954 = vmatpush1.msra.mxu0 %v1677
        %1955 = vmatprep.subr.mxu0 %v1676
        %1956 = vmatpush1.msra.mxu0 %v1675
        %1957 = vmatprep.subr.mxu0 %v1674
        %1958 = vmatpush1.msra.mxu0 %v1673
        %1959 = vmatprep.subr.mxu0 %v1672
        %1960 = vmatpush1.msra.mxu0 %v1671
        %1961 = vmatprep.subr.mxu0 %v1621
        %1962 = vmatpush1.msra.mxu0 %v1620
        %1963 = vmatprep.subr.mxu0 %v1619
        %1964 = vmatpush1.msra.mxu0 %v1618
        %1965 = vmatprep.subr.mxu0 %v1617
        %1966 = vmatpush1.msra.mxu0 %v1616
        %1967 = vmatprep.subr.mxu0 %v1615
        %1968 = vmatpush1.msra.mxu0 %v1614
        %1969 = vmatprep.subr.mxu0 %v1891
        %1970 = vmatpush2.msra.mxu0 %v1890
        %1971 = vmatprep.subr.mxu0 %v1889
        %1972 = vmatpush2.msra.mxu0 %v1888
        %1973 = vmatprep.subr.mxu0 %v1887
        %1974 = vmatpush2.msra.mxu0 %v1886
        %1975 = vmatprep.subr.mxu0 %v1885
        %1976 = vmatpush2.msra.mxu0 %v1884
        %1977 = vmatprep.subr.mxu0 %v1870
        %1978 = vmatpush2.msra.mxu0 %v1869
        %1979 = vmatprep.subr.mxu0 %v1868
        %1980 = vmatpush2.msra.mxu0 %v1867
        %1981 = vmatprep.subr.mxu0 %v1866
        %1982 = vmatpush2.msra.mxu0 %v1865
        %1983 = vmatprep.subr.mxu0 %v1864
        %1984 = vmatpush2.msra.mxu0 %v1863
        %1985 = vmatprep.subr.mxu0 %v1849
        %1986 = vmatpush2.msra.mxu0 %v1848
        %1987 = vmatprep.subr.mxu0 %v1847
        %1988 = vmatpush2.msra.mxu0 %v1846
        %1989 = vmatprep.subr.mxu0 %v1845
        %1990 = vmatpush2.msra.mxu0 %v1844
        %1991 = vmatprep.subr.mxu0 %v1843
        %1992 = vmatpush2.msra.mxu0 %v1842
        %1993 = vmatprep.subr.mxu0 %v1556
        %1994 = vmatpush2.msra.mxu0 %v1555
        %1995 = vmatprep.subr.mxu0 %v1554
        %1996 = vmatpush2.msra.mxu0 %v1553
        %1997 = vmatprep.subr.mxu0 %v1552
        %1998 = vmatpush2.msra.mxu0 %v1551
        %1999 = vmatprep.subr.mxu0 %v1550
        %2000 = vmatpush2.msra.mxu0 %v1549
        %2001 = vmatprep.mubr.f32.mxu0 %v1914
        %2002 = vmatmul.mubr.f32.gmra.mxu0 %v1913
        %v2003 = vpop.f32.mrf.mxu0
        %v2004 = vadd.f32 %v1924, %v2003
        %v2005 = vpop.f32.mrf.mxu0
        %v2006 = vadd.f32 %v1924, %v2005
        %2007 = vmatprep.mubr.f32.mxu0 %v1917
        %2008 = vmatmul.mubr.f32.gmra.mxu0 %v1916
        %v2009 = vpop.f32.mrf.mxu0
        %v2010 = vadd.f32 %v1929, %v2009
        %v2011 = vpop.f32.mrf.mxu0
        %v2012 = vadd.f32 %v1929, %v2011
        %2013 = vdwg.mxu0
        %2014 = vmatprep.subr.mxu0 0.0
        %2015 = vmatpush1.msra.mxu0 0.0
        %2016 = vmatprep.subr.mxu0 0.0
        %2017 = vmatpush1.msra.mxu0 0.0
        %2018 = vmatprep.subr.mxu0 0.0
        %2019 = vmatpush1.msra.mxu0 0.0
        %2020 = vmatprep.subr.mxu0 0.0
        %2021 = vmatpush1.msra.mxu0 0.0
        %2022 = vmatprep.subr.mxu0 0.0
        %2023 = vmatpush1.msra.mxu0 0.0
        %2024 = vmatprep.subr.mxu0 0.0
        %2025 = vmatpush1.msra.mxu0 0.0
        %2026 = vmatprep.subr.mxu0 0.0
        %2027 = vmatpush1.msra.mxu0 0.0
        %2028 = vmatprep.subr.mxu0 0.0
        %2029 = vmatpush1.msra.mxu0 0.0
        %2030 = vmatprep.subr.mxu0 0.0
        %2031 = vmatpush1.msra.mxu0 0.0
        %2032 = vmatprep.subr.mxu0 0.0
        %2033 = vmatpush1.msra.mxu0 0.0
        %2034 = vmatprep.subr.mxu0 0.0
        %2035 = vmatpush1.msra.mxu0 0.0
        %2036 = vmatprep.subr.mxu0 0.0
        %2037 = vmatpush1.msra.mxu0 0.0
        %2038 = vmatprep.subr.mxu0 %v1912
        %2039 = vmatpush1.msra.mxu0 %v1911
        %2040 = vmatprep.subr.mxu0 %v1910
        %2041 = vmatpush1.msra.mxu0 %v1909
        %2042 = vmatprep.subr.mxu0 %v1908
        %2043 = vmatpush1.msra.mxu0 %v1907
        %2044 = vmatprep.subr.mxu0 %v1906
        %2045 = vmatpush1.msra.mxu0 %v1905
        %2046 = vmatprep.subr.mxu0 0.0
        %2047 = vmatpush2.msra.mxu0 0.0
        %2048 = vmatprep.subr.mxu0 0.0
        %2049 = vmatpush2.msra.mxu0 0.0
        %2050 = vmatprep.subr.mxu0 0.0
        %2051 = vmatpush2.msra.mxu0 0.0
        %2052 = vmatprep.subr.mxu0 0.0
        %2053 = vmatpush2.msra.mxu0 0.0
        %2054 = vmatprep.subr.mxu0 0.0
        %2055 = vmatpush2.msra.mxu0 0.0
        %2056 = vmatprep.subr.mxu0 0.0
        %2057 = vmatpush2.msra.mxu0 0.0
        %2058 = vmatprep.subr.mxu0 0.0
        %2059 = vmatpush2.msra.mxu0 0.0
        %2060 = vmatprep.subr.mxu0 0.0
        %2061 = vmatpush2.msra.mxu0 0.0
        %2062 = vmatprep.subr.mxu0 0.0
        %2063 = vmatpush2.msra.mxu0 0.0
        %2064 = vmatprep.subr.mxu0 0.0
        %2065 = vmatpush2.msra.mxu0 0.0
        %2066 = vmatprep.subr.mxu0 0.0
        %2067 = vmatpush2.msra.mxu0 0.0
        %2068 = vmatprep.subr.mxu0 0.0
        %2069 = vmatpush2.msra.mxu0 0.0
        %2070 = vmatprep.subr.mxu0 0.0
        %2071 = vmatpush2.msra.mxu0 0.0
        %2072 = vmatprep.subr.mxu0 0.0
        %2073 = vmatpush2.msra.mxu0 0.0
        %2074 = vmatprep.subr.mxu0 0.0
        %2075 = vmatpush2.msra.mxu0 0.0
        %2076 = vmatprep.subr.mxu0 0.0
        %2077 = vmatpush2.msra.mxu0 0.0
        %2078 = vmatprep.mubr.f32.mxu0 0.0
        %2079 = vmatmul.mubr.f32.gmra.mxu0 %v1932
        %v2080 = vpop.f32.mrf.mxu0
        %v2081 = vadd.f32 %v2004, %v2080
        %v2082 = vpop.f32.mrf.mxu0
        %v2083 = vadd.f32 %v2006, %v2082
        %2084 = vmatprep.mubr.f32.mxu0 0.0
        %2085 = vmatmul.mubr.f32.gmra.mxu0 %v1935
        %v2086 = vpop.f32.mrf.mxu0
        %v2087 = vadd.f32 %v2010, %v2086
        %v2088 = vpop.f32.mrf.mxu0
        %v2089 = vadd.f32 %v2012, %v2088
        %2090 = vdwg.mxu0
        %v2091 = vmax.f32 %v2081, 0.0
        %v2092 = vmax.f32 %v2083, 0.0
        %v2093 = vmax.f32 %v2087, 0.0
        %v2094 = vmax.f32 %v2089, 0.0
        %2097 = vrot.lane.b32.xlu0 %v2092, 34
        %v2098 = vpop.permute.xlu0 %2097
        %2099 = vrot.lane.b32.xlu0 %v2094, 34
        %v2100 = vpop.permute.xlu0 %2099
        %2105 = vrot.lane.b32.xlu0 %v2091, 34
        %v2106 = vpop.permute.xlu0 %2105
        %2107 = vrot.lane.b32.xlu0 %v2093, 34
        %v2108 = vpop.permute.xlu0 %2107
        %v2109 = vsel %vm885, %v2106, %v2098
        %v2110 = vsel %vm885, %v2108, %v2100
        %v2115 = vsel %vm885, %v2098, %v2106
        %v2116 = vsel %vm885, %v2100, %v2108
        %s2117 = scalar_lea.vmem [#allocation3], 68
        %v2118 = vld [vmem:[%s2117] ss:$8 sm:$0x3]
        %v2120 = vlaneseq
        %v2121 = vshrl.u32 %v2120, 7
        %v2122 = vsub.s32 0, %v2121
        %v2123 = vrot.slane %v2118, %v2122
        %v2124 = vlaneseq
        %v2125 = vshrl.u32 %v2124, 7
        %v2126 = vsub.s32 1, %v2125
        %v2127 = vrot.slane %v2118, %v2126
        %v2130 = vmul.f32 %v2115, %v2123
        %v2131 = vmul.f32 %v2109, %v2127
        %v2132 = vmul.f32 %v2116, %v2123
        %v2133 = vmul.f32 %v2110, %v2127
        %2134 = vrot.lane.b32.xlu0 %v2092, 32
        %v2135 = vpop.permute.xlu0 %2134
        %2136 = vrot.lane.b32.xlu0 %v2094, 32
        %v2137 = vpop.permute.xlu0 %2136
        %2140 = vrot.lane.b32.xlu0 %v2091, 32
        %v2141 = vpop.permute.xlu0 %2140
        %2142 = vrot.lane.b32.xlu0 %v2093, 32
        %v2143 = vpop.permute.xlu0 %2142
        %v2144 = vsel %vm910, %v2141, %v2135
        %v2145 = vsel %vm910, %v2143, %v2137
        %v2150 = vsel %vm910, %v2135, %v2141
        %v2151 = vsel %vm910, %v2137, %v2143
        %s2152 = scalar_lea.vmem [#allocation3], 69
        %v2153 = vld [vmem:[%s2152] ss:$8 sm:$0x3]
        %v2155 = vlaneseq
        %v2156 = vshrl.u32 %v2155, 7
        %v2157 = vsub.s32 0, %v2156
        %v2158 = vrot.slane %v2153, %v2157
        %v2159 = vlaneseq
        %v2160 = vshrl.u32 %v2159, 7
        %v2161 = vsub.s32 1, %v2160
        %v2162 = vrot.slane %v2153, %v2161
        %v2165 = vmul.f32 %v2150, %v2158
        %v2166 = vmul.f32 %v2144, %v2162
        %v2167 = vmul.f32 %v2151, %v2158
        %v2168 = vmul.f32 %v2145, %v2162
        %2169 = vrot.lane.b32.xlu0 %v2092, 30
        %v2170 = vpop.permute.xlu0 %2169
        %2171 = vrot.lane.b32.xlu0 %v2094, 30
        %v2172 = vpop.permute.xlu0 %2171
        %2175 = vrot.lane.b32.xlu0 %v2091, 30
        %v2176 = vpop.permute.xlu0 %2175
        %2177 = vrot.lane.b32.xlu0 %v2093, 30
        %v2178 = vpop.permute.xlu0 %2177
        %v2179 = vsel %vm935, %v2176, %v2170
        %v2180 = vsel %vm935, %v2178, %v2172
        %v2185 = vsel %vm935, %v2170, %v2176
        %v2186 = vsel %vm935, %v2172, %v2178
        %s2187 = scalar_lea.vmem [#allocation3], 70
        %v2188 = vld [vmem:[%s2187] ss:$8 sm:$0x3]
        %v2190 = vlaneseq
        %v2191 = vshrl.u32 %v2190, 7
        %v2192 = vsub.s32 0, %v2191
        %v2193 = vrot.slane %v2188, %v2192
        %v2194 = vlaneseq
        %v2195 = vshrl.u32 %v2194, 7
        %v2196 = vsub.s32 1, %v2195
        %v2197 = vrot.slane %v2188, %v2196
        %v2200 = vmul.f32 %v2185, %v2193
        %v2201 = vmul.f32 %v2179, %v2197
        %v2202 = vmul.f32 %v2186, %v2193
        %v2203 = vmul.f32 %v2180, %v2197
        %2204 = vrot.lane.b32.xlu0 %v2092, 2
        %v2205 = vpop.permute.xlu0 %2204
        %2206 = vrot.lane.b32.xlu0 %v2094, 2
        %v2207 = vpop.permute.xlu0 %2206
        %2210 = vrot.lane.b32.xlu0 %v2091, 2
        %v2211 = vpop.permute.xlu0 %2210
        %2212 = vrot.lane.b32.xlu0 %v2093, 2
        %v2213 = vpop.permute.xlu0 %2212
        %v2214 = vsel %vm960, %v2211, %v2205
        %v2215 = vsel %vm960, %v2213, %v2207
        %v2220 = vsel %vm960, %v2205, %v2211
        %v2221 = vsel %vm960, %v2207, %v2213
        %s2222 = scalar_lea.vmem [#allocation3], 71
        %v2223 = vld [vmem:[%s2222] ss:$8 sm:$0x3]
        %v2225 = vlaneseq
        %v2226 = vshrl.u32 %v2225, 7
        %v2227 = vsub.s32 0, %v2226
        %v2228 = vrot.slane %v2223, %v2227
        %v2229 = vlaneseq
        %v2230 = vshrl.u32 %v2229, 7
        %v2231 = vsub.s32 1, %v2230
        %v2232 = vrot.slane %v2223, %v2231
        %v2235 = vmul.f32 %v2220, %v2228
        %v2236 = vmul.f32 %v2214, %v2232
        %v2237 = vmul.f32 %v2221, %v2228
        %v2238 = vmul.f32 %v2215, %v2232
        %2239 = vrot.lane.b32.xlu0 %v2091, 126
        %v2240 = vpop.permute.xlu0 %2239
        %2241 = vrot.lane.b32.xlu0 %v2092, 126
        %v2242 = vpop.permute.xlu0 %2241
        %2243 = vrot.lane.b32.xlu0 %v2093, 126
        %v2244 = vpop.permute.xlu0 %2243
        %2245 = vrot.lane.b32.xlu0 %v2094, 126
        %v2246 = vpop.permute.xlu0 %2245
        %v2247 = vsel %vm984, %v2240, %v2242
        %v2248 = vsel %vm984, %v2244, %v2246
        %v2255 = vsel %vm984, %v2242, %v2240
        %v2256 = vsel %vm984, %v2246, %v2244
        %s2257 = scalar_lea.vmem [#allocation3], 81
        %v2258 = vld [vmem:[%s2257] ss:$8 sm:$0x3]
        %v2260 = vlaneseq
        %v2261 = vshrl.u32 %v2260, 7
        %v2262 = vsub.s32 0, %v2261
        %v2263 = vrot.slane %v2258, %v2262
        %v2264 = vlaneseq
        %v2265 = vshrl.u32 %v2264, 7
        %v2266 = vsub.s32 1, %v2265
        %v2267 = vrot.slane %v2258, %v2266
        %v2270 = vmul.f32 %v2247, %v2263
        %v2271 = vmul.f32 %v2255, %v2267
        %v2272 = vmul.f32 %v2248, %v2263
        %v2273 = vmul.f32 %v2256, %v2267
        %2274 = vrot.lane.b32.xlu0 %v2091, 98
        %v2275 = vpop.permute.xlu0 %2274
        %2276 = vrot.lane.b32.xlu0 %v2092, 98
        %v2277 = vpop.permute.xlu0 %2276
        %2278 = vrot.lane.b32.xlu0 %v2093, 98
        %v2279 = vpop.permute.xlu0 %2278
        %2280 = vrot.lane.b32.xlu0 %v2094, 98
        %v2281 = vpop.permute.xlu0 %2280
        %v2282 = vsel %vm1009, %v2275, %v2277
        %v2283 = vsel %vm1009, %v2279, %v2281
        %v2290 = vsel %vm1009, %v2277, %v2275
        %v2291 = vsel %vm1009, %v2281, %v2279
        %s2292 = scalar_lea.vmem [#allocation3], 82
        %v2293 = vld [vmem:[%s2292] ss:$8 sm:$0x3]
        %v2295 = vlaneseq
        %v2296 = vshrl.u32 %v2295, 7
        %v2297 = vsub.s32 0, %v2296
        %v2298 = vrot.slane %v2293, %v2297
        %v2299 = vlaneseq
        %v2300 = vshrl.u32 %v2299, 7
        %v2301 = vsub.s32 1, %v2300
        %v2302 = vrot.slane %v2293, %v2301
        %v2305 = vmul.f32 %v2282, %v2298
        %v2306 = vmul.f32 %v2290, %v2302
        %v2307 = vmul.f32 %v2283, %v2298
        %v2308 = vmul.f32 %v2291, %v2302
        %2309 = vrot.lane.b32.xlu0 %v2091, 96
        %v2310 = vpop.permute.xlu0 %2309
        %2311 = vrot.lane.b32.xlu0 %v2092, 96
        %v2312 = vpop.permute.xlu0 %2311
        %2313 = vrot.lane.b32.xlu0 %v2093, 96
        %v2314 = vpop.permute.xlu0 %2313
        %2315 = vrot.lane.b32.xlu0 %v2094, 96
        %v2316 = vpop.permute.xlu0 %2315
        %v2317 = vsel %vm1034, %v2310, %v2312
        %v2318 = vsel %vm1034, %v2314, %v2316
        %v2325 = vsel %vm1034, %v2312, %v2310
        %v2326 = vsel %vm1034, %v2316, %v2314
        %s2327 = scalar_lea.vmem [#allocation3], 83
        %v2328 = vld [vmem:[%s2327] ss:$8 sm:$0x3]
        %v2330 = vlaneseq
        %v2331 = vshrl.u32 %v2330, 7
        %v2332 = vsub.s32 0, %v2331
        %v2333 = vrot.slane %v2328, %v2332
        %v2334 = vlaneseq
        %v2335 = vshrl.u32 %v2334, 7
        %v2336 = vsub.s32 1, %v2335
        %v2337 = vrot.slane %v2328, %v2336
        %v2340 = vmul.f32 %v2317, %v2333
        %v2341 = vmul.f32 %v2325, %v2337
        %v2342 = vmul.f32 %v2318, %v2333
        %v2343 = vmul.f32 %v2326, %v2337
        %2344 = vrot.lane.b32.xlu0 %v2091, 94
        %v2345 = vpop.permute.xlu0 %2344
        %2346 = vrot.lane.b32.xlu0 %v2092, 94
        %v2347 = vpop.permute.xlu0 %2346
        %2348 = vrot.lane.b32.xlu0 %v2093, 94
        %v2349 = vpop.permute.xlu0 %2348
        %2350 = vrot.lane.b32.xlu0 %v2094, 94
        %v2351 = vpop.permute.xlu0 %2350
        %v2352 = vsel %vm1059, %v2345, %v2347
        %v2353 = vsel %vm1059, %v2349, %v2351
        %v2360 = vsel %vm1059, %v2347, %v2345
        %v2361 = vsel %vm1059, %v2351, %v2349
        %s2362 = scalar_lea.vmem [#allocation3], 84
        %v2363 = vld [vmem:[%s2362] ss:$8 sm:$0x3]
        %v2365 = vlaneseq
        %v2366 = vshrl.u32 %v2365, 7
        %v2367 = vsub.s32 0, %v2366
        %v2368 = vrot.slane %v2363, %v2367
        %v2369 = vlaneseq
        %v2370 = vshrl.u32 %v2369, 7
        %v2371 = vsub.s32 1, %v2370
        %v2372 = vrot.slane %v2363, %v2371
        %v2375 = vmul.f32 %v2352, %v2368
        %v2376 = vmul.f32 %v2360, %v2372
        %v2377 = vmul.f32 %v2353, %v2368
        %v2378 = vmul.f32 %v2361, %v2372
        %v2379 = vld [vmem:[#allocation11] sm:$0xff]
        %v2380 = vld [vmem:[#allocation11 + $0x8] sm:$0xff]
        %v2381 = vld [vmem:[%s11] sm:$0xff]
        %2383 = vset.pattern.permute.xlu0 0
        %2384 = vperm.xlu0 %2383, %v2381
        %v2385 = vpop.permute.xlu0 %2384
        %v2388 = vsel %vm624, %v2380, 0
        %2390 = vmatprep.subr.mxu0 %v2343
        %2391 = vmatpush1.msra.mxu0 %v2342
        %2392 = vmatprep.subr.mxu0 %v2341
        %2393 = vmatpush1.msra.mxu0 %v2340
        %2394 = vmatprep.subr.mxu0 %v2308
        %2395 = vmatpush1.msra.mxu0 %v2307
        %2396 = vmatprep.subr.mxu0 %v2306
        %2397 = vmatpush1.msra.mxu0 %v2305
        %2398 = vmatprep.subr.mxu0 %v2273
        %2399 = vmatpush1.msra.mxu0 %v2272
        %2400 = vmatprep.subr.mxu0 %v2271
        %2401 = vmatpush1.msra.mxu0 %v2270
        %2402 = vmatprep.subr.mxu0 %v2094
        %2403 = vmatpush1.msra.mxu0 %v2093
        %2404 = vmatprep.subr.mxu0 %v2092
        %2405 = vmatpush1.msra.mxu0 %v2091
        %2406 = vmatprep.subr.mxu0 %v2238
        %2407 = vmatpush1.msra.mxu0 %v2237
        %2408 = vmatprep.subr.mxu0 %v2236
        %2409 = vmatpush1.msra.mxu0 %v2235
        %2410 = vmatprep.subr.mxu0 %v2203
        %2411 = vmatpush1.msra.mxu0 %v2202
        %2412 = vmatprep.subr.mxu0 %v2201
        %2413 = vmatpush1.msra.mxu0 %v2200
        %2414 = vmatprep.subr.mxu0 %v2168
        %2415 = vmatpush1.msra.mxu0 %v2167
        %2416 = vmatprep.subr.mxu0 %v2166
        %2417 = vmatpush1.msra.mxu0 %v2165
        %2418 = vmatprep.subr.mxu0 %v2133
        %2419 = vmatpush1.msra.mxu0 %v2132
        %2420 = vmatprep.subr.mxu0 %v2131
        %2421 = vmatpush1.msra.mxu0 %v2130
        %2422 = vmatprep.subr.mxu0 0.0
        %2423 = vmatpush2.msra.mxu0 0.0
        %2424 = vmatprep.subr.mxu0 0.0
        %2425 = vmatpush2.msra.mxu0 0.0
        %2426 = vmatprep.subr.mxu0 0.0
        %2427 = vmatpush2.msra.mxu0 0.0
        %2428 = vmatprep.subr.mxu0 0.0
        %2429 = vmatpush2.msra.mxu0 0.0
        %2430 = vmatprep.subr.mxu0 0.0
        %2431 = vmatpush2.msra.mxu0 0.0
        %2432 = vmatprep.subr.mxu0 0.0
        %2433 = vmatpush2.msra.mxu0 0.0
        %2434 = vmatprep.subr.mxu0 0.0
        %2435 = vmatpush2.msra.mxu0 0.0
        %2436 = vmatprep.subr.mxu0 0.0
        %2437 = vmatpush2.msra.mxu0 0.0
        %2438 = vmatprep.subr.mxu0 0.0
        %2439 = vmatpush2.msra.mxu0 0.0
        %2440 = vmatprep.subr.mxu0 0.0
        %2441 = vmatpush2.msra.mxu0 0.0
        %2442 = vmatprep.subr.mxu0 0.0
        %2443 = vmatpush2.msra.mxu0 0.0
        %2444 = vmatprep.subr.mxu0 0.0
        %2445 = vmatpush2.msra.mxu0 0.0
        %2446 = vmatprep.subr.mxu0 0.0
        %2447 = vmatpush2.msra.mxu0 0.0
        %2448 = vmatprep.subr.mxu0 0.0
        %2449 = vmatpush2.msra.mxu0 0.0
        %2450 = vmatprep.subr.mxu0 %v2378
        %2451 = vmatpush2.msra.mxu0 %v2377
        %2452 = vmatprep.subr.mxu0 %v2376
        %2453 = vmatpush2.msra.mxu0 %v2375
        %2454 = vmatprep.mubr.f32.mxu0 %v2388
        %2455 = vmatmul.mubr.f32.gmra.mxu0 %v2379
        %v2456 = vpop.f32.mrf.mxu0
        %v2457 = vadd.f32 %v2385, %v2456
        %v2458 = vpop.f32.mrf.mxu0
        %v2459 = vadd.f32 %v2385, %v2458
        %2460 = vdwg.mxu0
        %v2461 = vmax.f32 %v2457, 0.0
        %v2462 = vmax.f32 %v2459, 0.0
        %2464 = vrot.lane.b32.xlu0 %v2462, 17
        %v2465 = vpop.permute.xlu0 %2464
        %2468 = vrot.lane.b32.xlu0 %v2461, 17
        %v2469 = vpop.permute.xlu0 %2468
        %v2470 = vsel %vm600, %v2469, %v2465
        %v2473 = vsel %vm600, %v2465, %v2469
        %s2474 = scalar_lea.vmem [#allocation3], 85
        %v2475 = vld [vmem:[%s2474] ss:$8 sm:$0x3]
        %v2477 = vlaneseq
        %v2478 = vshrl.u32 %v2477, 7
        %v2479 = vsub.s32 0, %v2478
        %v2480 = vrot.slane %v2475, %v2479
        %v2481 = vlaneseq
        %v2482 = vshrl.u32 %v2481, 7
        %v2483 = vsub.s32 1, %v2482
        %v2484 = vrot.slane %v2475, %v2483
        %v2487 = vmul.f32 %v2473, %v2480
        %v2488 = vmul.f32 %v2470, %v2484
        %2489 = vrot.lane.b32.xlu0 %v2462, 16
        %v2490 = vpop.permute.xlu0 %2489
        %2492 = vrot.lane.b32.xlu0 %v2461, 16
        %v2493 = vpop.permute.xlu0 %2492
        %v2494 = vsel %vm624, %v2493, %v2490
        %v2497 = vsel %vm624, %v2490, %v2493
        %s2498 = scalar_lea.vmem [#allocation3], 86
        %v2499 = vld [vmem:[%s2498] ss:$8 sm:$0x3]
        %v2501 = vlaneseq
        %v2502 = vshrl.u32 %v2501, 7
        %v2503 = vsub.s32 0, %v2502
        %v2504 = vrot.slane %v2499, %v2503
        %v2505 = vlaneseq
        %v2506 = vshrl.u32 %v2505, 7
        %v2507 = vsub.s32 1, %v2506
        %v2508 = vrot.slane %v2499, %v2507
        %v2511 = vmul.f32 %v2497, %v2504
        %v2512 = vmul.f32 %v2494, %v2508
        %2513 = vrot.lane.b32.xlu0 %v2462, 15
        %v2514 = vpop.permute.xlu0 %2513
        %2516 = vrot.lane.b32.xlu0 %v2461, 15
        %v2517 = vpop.permute.xlu0 %2516
        %v2518 = vsel %vm649, %v2517, %v2514
        %v2521 = vsel %vm649, %v2514, %v2517
        %s2522 = scalar_lea.vmem [#allocation3], 87
        %v2523 = vld [vmem:[%s2522] ss:$8 sm:$0x3]
        %v2525 = vlaneseq
        %v2526 = vshrl.u32 %v2525, 7
        %v2527 = vsub.s32 0, %v2526
        %v2528 = vrot.slane %v2523, %v2527
        %v2529 = vlaneseq
        %v2530 = vshrl.u32 %v2529, 7
        %v2531 = vsub.s32 1, %v2530
        %v2532 = vrot.slane %v2523, %v2531
        %v2535 = vmul.f32 %v2521, %v2528
        %v2536 = vmul.f32 %v2518, %v2532
        %2537 = vrot.lane.b32.xlu0 %v2462, 1
        %v2538 = vpop.permute.xlu0 %2537
        %2540 = vrot.lane.b32.xlu0 %v2461, 1
        %v2541 = vpop.permute.xlu0 %2540
        %v2542 = vsel %vm674, %v2541, %v2538
        %v2545 = vsel %vm674, %v2538, %v2541
        %s2546 = scalar_lea.vmem [#allocation3], 96
        %v2547 = vld [vmem:[%s2546] ss:$8 sm:$0x3]
        %v2549 = vlaneseq
        %v2550 = vshrl.u32 %v2549, 7
        %v2551 = vsub.s32 0, %v2550
        %v2552 = vrot.slane %v2547, %v2551
        %v2553 = vlaneseq
        %v2554 = vshrl.u32 %v2553, 7
        %v2555 = vsub.s32 1, %v2554
        %v2556 = vrot.slane %v2547, %v2555
        %v2559 = vmul.f32 %v2545, %v2552
        %v2560 = vmul.f32 %v2542, %v2556
        %2561 = vrot.lane.b32.xlu0 %v2461, 127
        %v2562 = vpop.permute.xlu0 %2561
        %2563 = vrot.lane.b32.xlu0 %v2462, 127
        %v2564 = vpop.permute.xlu0 %2563
        %v2565 = vsel %vm698, %v2562, %v2564
        %v2569 = vsel %vm698, %v2564, %v2562
        %s2570 = scalar_lea.vmem [#allocation3], 98
        %v2571 = vld [vmem:[%s2570] ss:$8 sm:$0x3]
        %v2573 = vlaneseq
        %v2574 = vshrl.u32 %v2573, 7
        %v2575 = vsub.s32 0, %v2574
        %v2576 = vrot.slane %v2571, %v2575
        %v2577 = vlaneseq
        %v2578 = vshrl.u32 %v2577, 7
        %v2579 = vsub.s32 1, %v2578
        %v2580 = vrot.slane %v2571, %v2579
        %v2583 = vmul.f32 %v2565, %v2576
        %v2584 = vmul.f32 %v2569, %v2580
        %2585 = vrot.lane.b32.xlu0 %v2461, 113
        %v2586 = vpop.permute.xlu0 %2585
        %2587 = vrot.lane.b32.xlu0 %v2462, 113
        %v2588 = vpop.permute.xlu0 %2587
        %v2589 = vsel %vm723, %v2586, %v2588
        %v2593 = vsel %vm723, %v2588, %v2586
        %s2594 = scalar_lea.vmem [#allocation3], 99
        %v2595 = vld [vmem:[%s2594] ss:$8 sm:$0x3]
        %v2597 = vlaneseq
        %v2598 = vshrl.u32 %v2597, 7
        %v2599 = vsub.s32 0, %v2598
        %v2600 = vrot.slane %v2595, %v2599
        %v2601 = vlaneseq
        %v2602 = vshrl.u32 %v2601, 7
        %v2603 = vsub.s32 1, %v2602
        %v2604 = vrot.slane %v2595, %v2603
        %v2607 = vmul.f32 %v2589, %v2600
        %v2608 = vmul.f32 %v2593, %v2604
        %2609 = vrot.lane.b32.xlu0 %v2461, 112
        %v2610 = vpop.permute.xlu0 %2609
        %2611 = vrot.lane.b32.xlu0 %v2462, 112
        %v2612 = vpop.permute.xlu0 %2611
        %v2613 = vsel %vm748, %v2610, %v2612
        %v2617 = vsel %vm748, %v2612, %v2610
        %s2618 = scalar_lea.vmem [#allocation3], 100
        %v2619 = vld [vmem:[%s2618] ss:$8 sm:$0x3]
        %v2621 = vlaneseq
        %v2622 = vshrl.u32 %v2621, 7
        %v2623 = vsub.s32 0, %v2622
        %v2624 = vrot.slane %v2619, %v2623
        %v2625 = vlaneseq
        %v2626 = vshrl.u32 %v2625, 7
        %v2627 = vsub.s32 1, %v2626
        %v2628 = vrot.slane %v2619, %v2627
        %v2631 = vmul.f32 %v2613, %v2624
        %v2632 = vmul.f32 %v2617, %v2628
        %2633 = vrot.lane.b32.xlu0 %v2461, 111
        %v2634 = vpop.permute.xlu0 %2633
        %2635 = vrot.lane.b32.xlu0 %v2462, 111
        %v2636 = vpop.permute.xlu0 %2635
        %v2637 = vsel %vm773, %v2634, %v2636
        %v2641 = vsel %vm773, %v2636, %v2634
        %s2642 = scalar_lea.vmem [#allocation3], 101
        %v2643 = vld [vmem:[%s2642] ss:$8 sm:$0x3]
        %v2645 = vlaneseq
        %v2646 = vshrl.u32 %v2645, 7
        %v2647 = vsub.s32 0, %v2646
        %v2648 = vrot.slane %v2643, %v2647
        %v2649 = vlaneseq
        %v2650 = vshrl.u32 %v2649, 7
        %v2651 = vsub.s32 1, %v2650
        %v2652 = vrot.slane %v2643, %v2651
        %v2655 = vmul.f32 %v2637, %v2648
        %v2656 = vmul.f32 %v2641, %v2652
        %v2657 = vld [vmem:[%s12] sm:$0xf]
        %v2658 = vld [vmem:[%s13] sm:$0xf]
        %2660 = vset.pattern.permute.xlu0 0
        %2661 = vperm.xlu0 %2660, %v2658
        %v2662 = vpop.permute.xlu0 %2661
        %v2665 = vsel %vm801, %v2657, 0
        %2667 = vmatprep.subr.mxu0 0.0
        %2668 = vmatpush1.msra.mxu0 0.0
        %2669 = vmatprep.subr.mxu0 0.0
        %2670 = vmatpush1.msra.mxu0 0.0
        %2671 = vmatprep.subr.mxu0 0.0
        %2672 = vmatpush1.msra.mxu0 0.0
        %2673 = vmatprep.subr.mxu0 0.0
        %2674 = vmatpush1.msra.mxu0 0.0
        %2675 = vmatprep.subr.mxu0 0.0
        %2676 = vmatpush1.msra.mxu0 0.0
        %2677 = vmatprep.subr.mxu0 0.0
        %2678 = vmatpush1.msra.mxu0 0.0
        %2679 = vmatprep.subr.mxu0 0.0
        %2680 = vmatpush1.msra.mxu0 0.0
        %2681 = vmatprep.subr.mxu0 %v2656
        %2682 = vmatpush1.msra.mxu0 %v2655
        %2683 = vmatprep.subr.mxu0 %v2632
        %2684 = vmatpush1.msra.mxu0 %v2631
        %2685 = vmatprep.subr.mxu0 %v2608
        %2686 = vmatpush1.msra.mxu0 %v2607
        %2687 = vmatprep.subr.mxu0 %v2584
        %2688 = vmatpush1.msra.mxu0 %v2583
        %2689 = vmatprep.subr.mxu0 %v2462
        %2690 = vmatpush1.msra.mxu0 %v2461
        %2691 = vmatprep.subr.mxu0 %v2560
        %2692 = vmatpush1.msra.mxu0 %v2559
        %2693 = vmatprep.subr.mxu0 %v2536
        %2694 = vmatpush1.msra.mxu0 %v2535
        %2695 = vmatprep.subr.mxu0 %v2512
        %2696 = vmatpush1.msra.mxu0 %v2511
        %2697 = vmatprep.subr.mxu0 %v2488
        %2698 = vmatpush1.msra.mxu0 %v2487
        %2699 = vmatprep.subr.mxu0 0.0
        %2700 = vmatpush2.msra.mxu0 0.0
        %2701 = vmatprep.subr.mxu0 0.0
        %2702 = vmatpush2.msra.mxu0 0.0
        %2703 = vmatprep.subr.mxu0 0.0
        %2704 = vmatpush2.msra.mxu0 0.0
        %2705 = vmatprep.subr.mxu0 0.0
        %2706 = vmatpush2.msra.mxu0 0.0
        %2707 = vmatprep.subr.mxu0 0.0
        %2708 = vmatpush2.msra.mxu0 0.0
        %2709 = vmatprep.subr.mxu0 0.0
        %2710 = vmatpush2.msra.mxu0 0.0
        %2711 = vmatprep.subr.mxu0 0.0
        %2712 = vmatpush2.msra.mxu0 0.0
        %2713 = vmatprep.subr.mxu0 0.0
        %2714 = vmatpush2.msra.mxu0 0.0
        %2715 = vmatprep.subr.mxu0 0.0
        %2716 = vmatpush2.msra.mxu0 0.0
        %2717 = vmatprep.subr.mxu0 0.0
        %2718 = vmatpush2.msra.mxu0 0.0
        %2719 = vmatprep.subr.mxu0 0.0
        %2720 = vmatpush2.msra.mxu0 0.0
        %2721 = vmatprep.subr.mxu0 0.0
        %2722 = vmatpush2.msra.mxu0 0.0
        %2723 = vmatprep.subr.mxu0 0.0
        %2724 = vmatpush2.msra.mxu0 0.0
        %2725 = vmatprep.subr.mxu0 0.0
        %2726 = vmatpush2.msra.mxu0 0.0
        %2727 = vmatprep.subr.mxu0 0.0
        %2728 = vmatpush2.msra.mxu0 0.0
        %2729 = vmatprep.subr.mxu0 0.0
        %2730 = vmatpush2.msra.mxu0 0.0
        %2731 = vmatprep.mubr.f32.mxu0 0.0
        %2732 = vmatmul.mubr.f32.gmra.mxu0 %v2665
        %v2733 = vpop.f32.mrf.mxu0
        %v2734 = vadd.f32 %v2662, %v2733
        %v2735 = vpop.f32.mrf.mxu0
        %v2736 = vadd.f32 %v2662, %v2735
        %2737 = vdwg.mxu0
        %v2738 = vmax.f32 %v2734, 0.0
        %v2739 = vmax.f32 %v2736, 0.0
        %v2740 = vld [vmem:[%s14] sm:$0x1]
        %v2741 = vld [vmem:[#allocation2] sm:$0x1]
        %2743 = vset.pattern.permute.xlu0 0
        %2744 = vperm.xlu0 %2743, %v2741
        %v2745 = vpop.permute.xlu0 %2744
        %v2747 = vlaneseq
        %v2748 = vshrl.u32 %v2747, 7
        %v2749 = vsub.s32 0, %v2748
        %v2750 = vrot.slane %v2745, %v2749
        %v2752 = vsel %vm1303, %v2740, 0
        %vm2754 = vcmask 1043456
        %v2756 = vsel %vm2754, %v2738, 0
        %v2759 = vsel %vm2754, %v2739, 0
        %2761 = vmatprep.subr.mxu0 0.0
        %2762 = vmatpush1.msra.mxu0 0.0
        %2763 = vmatprep.subr.mxu0 0.0
        %2764 = vmatpush1.msra.mxu0 0.0
        %2765 = vmatprep.subr.mxu0 0.0
        %2766 = vmatpush1.msra.mxu0 0.0
        %2767 = vmatprep.subr.mxu0 0.0
        %2768 = vmatpush1.msra.mxu0 0.0
        %2769 = vmatprep.subr.mxu0 0.0
        %2770 = vmatpush1.msra.mxu0 0.0
        %2771 = vmatprep.subr.mxu0 0.0
        %2772 = vmatpush1.msra.mxu0 0.0
        %2773 = vmatprep.subr.mxu0 0.0
        %2774 = vmatpush1.msra.mxu0 0.0
        %2775 = vmatprep.subr.mxu0 0.0
        %2776 = vmatpush1.msra.mxu0 0.0
        %2777 = vmatprep.subr.mxu0 0.0
        %2778 = vmatpush1.msra.mxu0 0.0
        %2779 = vmatprep.subr.mxu0 0.0
        %2780 = vmatpush1.msra.mxu0 0.0
        %2781 = vmatprep.subr.mxu0 0.0
        %2782 = vmatpush1.msra.mxu0 0.0
        %2783 = vmatprep.subr.mxu0 0.0
        %2784 = vmatpush1.msra.mxu0 0.0
        %2785 = vmatprep.subr.mxu0 0.0
        %2786 = vmatpush1.msra.mxu0 0.0
        %2787 = vmatprep.subr.mxu0 0.0
        %2788 = vmatpush1.msra.mxu0 0.0
        %2789 = vmatprep.subr.mxu0 0.0
        %2790 = vmatpush1.msra.mxu0 0.0
        %2791 = vmatprep.subr.mxu0 %v2759
        %2792 = vmatpush1.msra.mxu0 %v2756
        %2793 = vmatprep.subr.mxu0 0.0
        %2794 = vmatpush2.msra.mxu0 0.0
        %2795 = vmatprep.subr.mxu0 0.0
        %2796 = vmatpush2.msra.mxu0 0.0
        %2797 = vmatprep.subr.mxu0 0.0
        %2798 = vmatpush2.msra.mxu0 0.0
        %2799 = vmatprep.subr.mxu0 0.0
        %2800 = vmatpush2.msra.mxu0 0.0
        %2801 = vmatprep.subr.mxu0 0.0
        %2802 = vmatpush2.msra.mxu0 0.0
        %2803 = vmatprep.subr.mxu0 0.0
        %2804 = vmatpush2.msra.mxu0 0.0
        %2805 = vmatprep.subr.mxu0 0.0
        %2806 = vmatpush2.msra.mxu0 0.0
        %2807 = vmatprep.subr.mxu0 0.0
        %2808 = vmatpush2.msra.mxu0 0.0
        %2809 = vmatprep.subr.mxu0 0.0
        %2810 = vmatpush2.msra.mxu0 0.0
        %2811 = vmatprep.subr.mxu0 0.0
        %2812 = vmatpush2.msra.mxu0 0.0
        %2813 = vmatprep.subr.mxu0 0.0
        %2814 = vmatpush2.msra.mxu0 0.0
        %2815 = vmatprep.subr.mxu0 0.0
        %2816 = vmatpush2.msra.mxu0 0.0
        %2817 = vmatprep.subr.mxu0 0.0
        %2818 = vmatpush2.msra.mxu0 0.0
        %2819 = vmatprep.subr.mxu0 0.0
        %2820 = vmatpush2.msra.mxu0 0.0
        %2821 = vmatprep.subr.mxu0 0.0
        %2822 = vmatpush2.msra.mxu0 0.0
        %2823 = vmatprep.subr.mxu0 0.0
        %2824 = vmatpush2.msra.mxu0 0.0
        %2825 = vmatprep.mubr.f32.mxu0 0.0
        %2826 = vmatmul.mubr.f32.gmra.mxu0 %v2752
        %v2827 = vpop.f32.mrf.mxu0
        %v2828 = vadd.f32 %v2750, %v2827
        %v2829 = vpop.f32.mrf.mxu0
        %v2830 = vadd.f32 %v2750, %v2829
        %2831 = vdwg.mxu0
        %v2834 = vcombine.low %v2828, %v2830
        %v2836 = vunpack.c.l.s4 1966171168
        %v2837 = vunpack.c.0.s8 %v2836
        %v2838 = vlaneseq
        %v2839 = vshrl.u32 %v2838, 7
        %v2840 = vsub.s32 %v2837, %v2839
        %v2841 = vrot.slane %v2834, %v2840
        %v2843 = vunpack.c.l.s4 1966171168
        %v2844 = vunpack.c.0.s8 %v2843
        %v2845 = vlaneseq
        %v2846 = vshrl.u32 %v2845, 7
        %v2847 = vsub.s32 %v2844, %v2846
        %v2848 = vrot.slane %v2841, %v2847
        %v2850 = vlaneseq
        %vm2851 = vcmp.ge.s32.totalorder %v2850, 0
        %vm2852 = vcmp.lt.s32.totalorder %v2850, 256
        %vm2853 = vmand %vm2851, %vm2852
        %2854 = vst.msk [vmem:[%s585] sm:$0x3] %vm2853, %v2848
        %s2855 = sand.u32 %s384, 1
        %s2856 = scalar_lea.sflag [#allocation5], %s2855
        %s2857 = sand.u32 %s384, 1
        %s2858 = smul.addr %s2857, 2
        %s2859 = scalar_lea.vmem [#allocation12], %s2858
        // Predicated region
        $region105: #{tpu_custom_call.1} parent=83 // pred_check
          %p2860 = pneg %p394
        $region106: #{tpu_custom_call.1} parent=83 // pred_check_branch
          %2862 = sbr.rel (%p2860) target = $region108
        $region107: #{tpu_custom_call.1} parent=83 // pred_region
          %s2864 = ssub.s32 32, 32
          %2865 = vsyncadd %s2856, %s2864
          %s2866 = smul.addr %s35, 2
          %s2867 = smul.addr %s2866, 16
          %s2868 = scalar_lea.hbm %s16, %s2867
          %s2870 = sshll.u32 %s2859, 4
          %s2871 = int_to_ptr.vmem [resolvable:$true] %s2870
          %2873 = dma.vmem_to_hbm [thread:$0]  %s2871, 32, %s2868, %s2856
        $region108: #{tpu_custom_call.1} parent=83 // pred_fallthru
          _
      $region84: #{tpu_custom_call.1} parent=5 // pred_fallthru
        _
      %p2874 = scmp.le.s32.totalorder 2, %s30
      // Predicated region
      $region109: #{tpu_custom_call.1} parent=5 // pred_check
        %p2875 = pneg %p2874
      $region110: #{tpu_custom_call.1} parent=5 // pred_check_branch
        %2877 = sbr.rel (%p2875) target = $region112
      $region111: #{tpu_custom_call.1} parent=5 // pred_region
        %s2878 = ssub.s32 %s30, 2
        // Predicated region
        $region113: #{tpu_custom_call.1} parent=111 // pred_check
          %p2879 = pneg %p400
        $region114: #{tpu_custom_call.1} parent=111 // pred_check_branch
          %2881 = sbr.rel (%p2879) target = $region116
        $region115: #{tpu_custom_call.1} parent=111 // pred_region
          %s2882 = sand.u32 %s385, 1
          %s2883 = scalar_lea.sflag [#allocation5], %s2882
          %s2884 = sand.u32 %s385, 1
          %s2885 = smul.addr %s2884, 2
          %s2886 = scalar_lea.vmem [#allocation12], %s2885
          %2887 = dma.done %s2883, 32
        $region116: #{tpu_custom_call.1} parent=111 // pred_fallthru
          _
      $region112: #{tpu_custom_call.1} parent=5 // pred_fallthru
        _
    $region6: #{tpu_custom_call.1} parent=1 // loop_footer
      %s34 = sadd.s32 1, %s30
    $region7: #{tpu_custom_call.1} parent=1 // loop_footer_branch
      %29 = sbr.rel target = $region3
    $region8: #{tpu_custom_call.1} parent=1 // loop_exit
      _
    %2888 = vsyncpa [#allocation4], 1
    %s2889 = scalar_lea.sflag [#allocation4], 1
    %2890 = vsyncpa %s2889, 1
    %2891 = vsyncpa [#allocation7], 1
    %2892 = vsyncpa [#allocation10], 1
    %2893 = vsyncpa [#allocation5], 1
    %s2894 = scalar_lea.sflag [#allocation5], 1
    %2895 = vsyncpa %s2894, 1

</llo_original>
